<compile_context>
chip_gen: v7x
topology: tpu7x:2x2x1
jax: 0.10.0
libtpu: 0.0.40
codegen_flags: <defaults>
</compile_context>

<pallas_src>
import jax
import jax.numpy as jnp
from jax import lax
from jax.experimental import pallas as pl
from jax.experimental.pallas import tpu as pltpu

NEG_SLOPE = 0.2     # GATv2Conv negative_slope
BN_EPS = 1e-5       # torch.nn.BatchNorm1d default eps
NEG_INF = -1e30

EDGE_TYPES = (("author", "publishes", "article"),
              ("author", "co_authors", "author"),
              ("article", "rev_publishes", "author"))
ET_PUB, ET_CO, ET_REV = EDGE_TYPES
NODE_TYPES = ("article", "author")


# --------------------------------------------------------------------------- #
# GATv2Conv (heads=1) — tiled grid + online softmax over source tiles
# --------------------------------------------------------------------------- #
def _make_gatv2_kernel(h, td, ts):
    def kernel(xsT_ref, xd_ref, adj_ref, wlT_ref, blT_ref, wr_ref, br_ref,
               att_ref, bias_ref, out_ref, xr_sc, m_sc, l_sc, acc_sc):
        k = pl.program_id(1)

        # once per destination tile: lin_r(x_dst) + online-softmax state
        @pl.when(k == 0)
        def _init():
            xr0 = jnp.dot(xd_ref[...].astype(jnp.bfloat16),
                          wr_ref[...].astype(jnp.bfloat16),
                          preferred_element_type=jnp.float32) + br_ref[...]
            xr_sc[...] = xr0
            m_sc[...] = jnp.full((td, 1), NEG_INF, dtype=jnp.float32)
            l_sc[...] = jnp.zeros((td, 1), dtype=jnp.float32)
            acc_sc[...] = jnp.zeros((td, h), dtype=jnp.float32)

        # lin_l(x_src) in transposed layout [h, ts] — no in-kernel transpose needed
        xlT = jnp.dot(wlT_ref[...].astype(jnp.bfloat16),
                      xsT_ref[...].astype(jnp.bfloat16),
                      preferred_element_type=jnp.float32) + blT_ref[...]

        xr = xr_sc[...]           # [td, h]
        att = att_ref[...]        # [1, h]

        # e[i, j] = sum_h att[h] * leaky_relu(xr[i, h] + xl[j, h])
        # per-channel accumulation on full-lane-width [td, ts] tiles (no 3-D tensor)
        e = jnp.zeros((td, ts), dtype=jnp.float32)
        for hh in range(h):
            s = xr[:, hh:hh + 1] + xlT[hh:hh + 1, :]                  # [td, ts]
            e = e + att[:, hh:hh + 1] * jnp.maximum(s, NEG_SLOPE * s)  # leaky_relu

        mask = adj_ref[...].astype(jnp.float32) > 0.0                  # int8 mask
        e = jnp.where(mask, e, NEG_INF)

        # online (flash-style) softmax over incoming edges (source nodes)
        m_prev = m_sc[...]
        m_new = jnp.maximum(m_prev, jnp.max(e, axis=1, keepdims=True))
        p = jnp.where(mask, jnp.exp(e - m_new), 0.0)
        scale = jnp.exp(m_prev - m_new)

        l_sc[...] = scale * l_sc[...] + jnp.sum(p, axis=1, keepdims=True)
        acc_sc[...] = scale * acc_sc[...] + lax.dot_general(
            p.astype(jnp.bfloat16), xlT.astype(jnp.bfloat16),
            dimension_numbers=(((1,), (1,)), ((), ())),                # NT matmul
            preferred_element_type=jnp.float32)
        m_sc[...] = m_new

        @pl.when(k == pl.num_programs(1) - 1)
        def _finalize():
            l = l_sc[...]
            denom = jnp.where(l > 0.0, l, 1.0)    # isolated dst -> zero message
            out_ref[...] = acc_sc[...] / denom + bias_ref[...]

    return kernel


def gatv2_conv(x_src, x_dst, adj, p, td=128, ts=256):
    ns_pad, f_src = x_src.shape
    nd_pad, f_dst = x_dst.shape
    h = p["wl"].shape[1]
    assert ts % 128 == 0 and td % 32 == 0, "need td % 32 == 0 (int8 tile), ts % 128 == 0"
    assert nd_pad % td == 0 and ns_pad % ts == 0, "node counts must be padded to tile multiples"
    assert adj.shape == (nd_pad, ns_pad) and adj.dtype == jnp.int8

    xsT = x_src.T            # [f_src, ns_pad]   (layout plumbing in the wrapper)
    wlT = p["wl"].T          # [h, f_src]
    blT = p["bl"].T          # [h, 1]
    grid = (nd_pad // td, ns_pad // ts)

    return pl.pallas_call(
        _make_gatv2_kernel(h, td, ts),
        out_shape=jax.ShapeDtypeStruct((nd_pad, h), jnp.float32),
        grid=grid,
        in_specs=[
            pl.BlockSpec((f_src, ts), lambda d, k: (0, k)),    # x_src^T tile
            pl.BlockSpec((td, f_dst), lambda d, k: (d, 0)),    # x_dst tile
            pl.BlockSpec((td, ts), lambda d, k: (d, k)),       # adjacency (int8) tile
            pl.BlockSpec((h, f_src), lambda d, k: (0, 0)),     # wl^T
            pl.BlockSpec((h, 1), lambda d, k: (0, 0)),         # bl^T
            pl.BlockSpec((f_dst, h), lambda d, k: (0, 0)),     # wr
            pl.BlockSpec((1, h), lambda d, k: (0, 0)),         # br
            pl.BlockSpec((1, h), lambda d, k: (0, 0)),         # att
            pl.BlockSpec((1, h), lambda d, k: (0, 0)),         # bias
        ],
        out_specs=pl.BlockSpec((td, h), lambda d, k: (d, 0)),
        scratch_shapes=[
            pltpu.VMEM((td, h), jnp.float32),   # xr = lin_r(x_dst)
            pltpu.VMEM((td, 1), jnp.float32),   # running max
            pltpu.VMEM((td, 1), jnp.float32),   # running denominator
            pltpu.VMEM((td, h), jnp.float32),   # weighted-message accumulator
        ],
        compiler_params=pltpu.CompilerParams(
            dimension_semantics=("parallel", "arbitrary")),
    )(xsT, x_dst, adj, wlT, blT, p["wr"], p["br"], p["att"], p["bias"])


# --------------------------------------------------------------------------- #
# Fused epilogue per node type: sum(edge-type messages) (+Linear) -> BN -> ReLU
# BatchNorm uses training-mode (biased) batch stats over the REAL nodes only.
# --------------------------------------------------------------------------- #
def _make_post_kernel(num_inputs, include_linear, apply_relu, n_real):
    def kernel(*refs):
        x_refs = refs[:num_inputs]
        wlin_ref, blin_ref, gamma_ref, beta_ref, out_ref = refs[num_inputs:]

        x = x_refs[0][...]
        for r in x_refs[1:]:
            x = x + r[...]                       # hetero 'sum' aggregation

        if include_linear:
            x = x + (jnp.dot(x.astype(jnp.bfloat16),
                             wlin_ref[...].astype(jnp.bfloat16),
                             preferred_element_type=jnp.float32) + blin_ref[...])

        n_pad = x.shape[0]
        row = lax.broadcasted_iota(jnp.int32, (n_pad, 1), 0)
        valid = (row < n_real).astype(jnp.float32)
        inv_n = jnp.float32(1.0 / n_real)
        mean = jnp.sum(x * valid, axis=0, keepdims=True) * inv_n
        diff = (x - mean) * valid
        var = jnp.sum(diff * diff, axis=0, keepdims=True) * inv_n   # biased var
        y = (x - mean) * lax.rsqrt(var + BN_EPS) * gamma_ref[...] + beta_ref[...]
        if apply_relu:
            y = jnp.maximum(y, 0.0)
        out_ref[...] = y * valid                 # keep padded rows at zero
    return kernel


def post_layer(xs, lin_p, bn_p, n_real, include_linear, apply_relu):
    n_pad, h = xs[0].shape
    vmem = pl.BlockSpec(memory_space=pltpu.MemorySpace.VMEM)
    return pl.pallas_call(
        _make_post_kernel(len(xs), include_linear, apply_relu, n_real),
        out_shape=jax.ShapeDtypeStruct((n_pad, h), jnp.float32),
        in_specs=[vmem] * (len(xs) + 4),
        out_specs=vmem,
    )(*xs, lin_p["w"], lin_p["b"], bn_p["gamma"], bn_p["beta"])


# --------------------------------------------------------------------------- #
# Decoder: (z[src] * z[dst]).sum(-1) via scalar-prefetch row gather
# --------------------------------------------------------------------------- #
def _make_decoder_kernel(te, e_pad):
    def kernel(eli_ref, z_ref, out_ref, zs_sc, zd_sc):
        base = pl.program_id(0) * te

        def gather(j, carry):
            s = eli_ref[base + j]
            d = eli_ref[e_pad + base + j]
            zs_sc[pl.ds(j, 1), :] = z_ref[pl.ds(s, 1), :]
            zd_sc[pl.ds(j, 1), :] = z_ref[pl.ds(d, 1), :]
            return carry

        lax.fori_loop(0, te, gather, 0)
        out_ref[...] = jnp.sum(zs_sc[...] * zd_sc[...], axis=-1, keepdims=True)
    return kernel


def decoder(z, edge_label_index, te=128):
    n_pad, h = z.shape
    e = edge_label_index.shape[1]
    e_pad = ((e + te - 1) // te) * te
    eli = jnp.zeros((2, e_pad), jnp.int32).at[:, :e].set(edge_label_index)
    eli_flat = eli.reshape(-1)               # [src row | dst row], indices into z

    out = pl.pallas_call(
        _make_decoder_kernel(te, e_pad),
        out_shape=jax.ShapeDtypeStruct((e_pad, 1), jnp.float32),
        grid_spec=pltpu.PrefetchScalarGridSpec(
            num_scalar_prefetch=1,
            grid=(e_pad // te,),
            in_specs=[pl.BlockSpec((n_pad, h), lambda t, idx_ref: (0, 0))],
            out_specs=pl.BlockSpec((te, 1), lambda t, idx_ref: (t, 0)),
            scratch_shapes=[pltpu.VMEM((te, h), jnp.float32),
                            pltpu.VMEM((te, h), jnp.float32)]),
        compiler_params=pltpu.CompilerParams(
            dimension_semantics=("arbitrary",)),
    )(eli_flat, z)
    return out[:e, 0]


# --------------------------------------------------------------------------- #
# Parameters (deterministic, glorot-like)
# --------------------------------------------------------------------------- #
def _glorot(key, shape):
    scale = jnp.sqrt(6.0 / (shape[0] + shape[1]))
    return jax.random.uniform(key, shape, jnp.float32, -scale, scale)


def init_params(key, hidden, num_layers, f_article, f_author):
    node_dims = {"article": f_article, "author": f_author}
    params = {"conv": [], "lin": [], "bn": []}
    for layer in range(num_layers):
        conv_l = {}
        for et in EDGE_TYPES:
            src, _, dst = et
            fs = node_dims[src] if layer == 0 else hidden
            fd = node_dims[dst] if layer == 0 else hidden
            key, k1, k2, k3 = jax.random.split(key, 4)
            conv_l[et] = {
                "wl": _glorot(k1, (fs, hidden)),
                "bl": jnp.zeros((1, hidden), jnp.float32),
                "wr": _glorot(k2, (fd, hidden)),
                "br": jnp.zeros((1, hidden), jnp.float32),
                "att": _glorot(k3, (1, hidden)),
                "bias": jnp.zeros((1, hidden), jnp.float32),
            }
        params["conv"].append(conv_l)
        lin_l, bn_l = {}, {}
        for nt in NODE_TYPES:
            key, k1 = jax.random.split(key)
            lin_l[nt] = {"w": _glorot(k1, (hidden, hidden)),
                         "b": jnp.zeros((1, hidden), jnp.float32)}
            bn_l[nt] = {"gamma": jnp.ones((1, hidden), jnp.float32),
                        "beta": jnp.zeros((1, hidden), jnp.float32)}
        params["lin"].append(lin_l)
        params["bn"].append(bn_l)
    return params


# --------------------------------------------------------------------------- #
# Full forward (glue)
# --------------------------------------------------------------------------- #
def encoder_forward(params, x_dict, adj_dict, n_real, num_layers,
                    include_linear, include_activation, td, ts):
    x = dict(x_dict)
    for i in range(num_layers):
        cp = params["conv"][i]
        msg_article = gatv2_conv(x["author"], x["article"], adj_dict[ET_PUB],
                                 cp[ET_PUB], td, ts)
        msg_author_a = gatv2_conv(x["author"], x["author"], adj_dict[ET_CO],
                                  cp[ET_CO], td, ts)
        msg_author_b = gatv2_conv(x["article"], x["author"], adj_dict[ET_REV],
                                  cp[ET_REV], td, ts)
        apply_relu = include_activation and (i < num_layers - 1)
        x = {
            "article": post_layer([msg_article],
                                  params["lin"][i]["article"],
                                  params["bn"][i]["article"],
                                  n_real["article"], include_linear, apply_relu),
            "author": post_layer([msg_author_a, msg_author_b],
                                 params["lin"][i]["author"],
                                 params["bn"][i]["author"],
                                 n_real["author"], include_linear, apply_relu),
        }
    return x


def model_forward(params, x_dict, adj_dict, edge_label_index, n_real,
                  num_layers, include_linear, include_activation,
                  td=128, ts=256, te=128):
    z_dict = encoder_forward(params, x_dict, adj_dict, n_real, num_layers,
                             include_linear, include_activation, td, ts)
    return decoder(z_dict["author"], edge_label_index, te)

# TODO(synk): ModelEuCoHT.recommend / recommendation_loss (top-k ranking, BPR loss,
# python dict id maps) are not part of forward() and are not implemented here.


# --------------------------------------------------------------------------- #
# Pure-JAX reference (same bf16 MXU casts) for a correctness check
# --------------------------------------------------------------------------- #
def _ref_gatv2(x_src, x_dst, adj, p):
    xl = jnp.dot(x_src.astype(jnp.bfloat16), p["wl"].astype(jnp.bfloat16),
                 preferred_element_type=jnp.float32) + p["bl"]
    xr = jnp.dot(x_dst.astype(jnp.bfloat16), p["wr"].astype(jnp.bfloat16),
                 preferred_element_type=jnp.float32) + p["br"]
    s = xr[:, None, :] + xl[None, :, :]
    s = jnp.where(s >= 0, s, NEG_SLOPE * s)
    e = jnp.sum(s * p["att"][0][None, None, :], axis=-1)
    mask = adj > 0
    e = jnp.where(mask, e, NEG_INF)
    m = jnp.max(e, axis=1, keepdims=True)
    pexp = jnp.where(mask, jnp.exp(e - m), 0.0)
    denom = jnp.sum(pexp, axis=1, keepdims=True)
    denom = jnp.where(denom > 0, denom, 1.0)
    agg = jnp.dot(pexp.astype(jnp.bfloat16), xl.astype(jnp.bfloat16),
                  preferred_element_type=jnp.float32)
    return agg / denom + p["bias"]


def _ref_post(x, lin_p, bn_p, n_real, include_linear, apply_relu):
    if include_linear:
        x = x + (jnp.dot(x.astype(jnp.bfloat16), lin_p["w"].astype(jnp.bfloat16),
                         preferred_element_type=jnp.float32) + lin_p["b"])
    n_pad = x.shape[0]
    valid = (jnp.arange(n_pad)[:, None] < n_real).astype(jnp.float32)
    mean = jnp.sum(x * valid, axis=0, keepdims=True) / n_real
    diff = (x - mean) * valid
    var = jnp.sum(diff * diff, axis=0, keepdims=True) / n_real
    y = (x - mean) * lax.rsqrt(var + BN_EPS) * bn_p["gamma"] + bn_p["beta"]
    if apply_relu:
        y = jnp.maximum(y, 0.0)
    return y * valid


def _ref_model_forward(params, x_dict, adj_dict, eli, n_real, num_layers,
                       include_linear, include_activation):
    x = dict(x_dict)
    for i in range(num_layers):
        cp = params["conv"][i]
        m_article = _ref_gatv2(x["author"], x["article"], adj_dict[ET_PUB], cp[ET_PUB])
        m_author = (_ref_gatv2(x["author"], x["author"], adj_dict[ET_CO], cp[ET_CO])
                    + _ref_gatv2(x["article"], x["author"], adj_dict[ET_REV], cp[ET_REV]))
        apply_relu = include_activation and (i < num_layers - 1)
        x = {"article": _ref_post(m_article, params["lin"][i]["article"],
                                  params["bn"][i]["article"], n_real["article"],
                                  include_linear, apply_relu),
             "author": _ref_post(m_author, params["lin"][i]["author"],
                                 params["bn"][i]["author"], n_real["author"],
                                 include_linear, apply_relu)}
    z = x["author"]
    return jnp.sum(z[eli[0]] * z[eli[1]], axis=-1)


# --------------------------------------------------------------------------- #
if __name__ == "__main__":
    hidden = 32
    num_layers = 2
    include_linear = True
    include_activation = True
    td, ts, te = 64, 128, 128          # small tiles so the toy graph exercises the grid

    n_article, n_author = 150, 200
    f_article, f_author = 16, 8

    key = jax.random.PRNGKey(0)
    key, kx1, kx2, ke1, ke2, ke3, kel, kp = jax.random.split(key, 8)

    pad_to = ts                        # ts % td == 0, so this covers both roles
    na_pad = ((n_article + pad_to - 1) // pad_to) * pad_to   # 256
    nu_pad = ((n_author + pad_to - 1) // pad_to) * pad_to    # 256

    def pad_rows(x, n_pad):
        return jnp.zeros((n_pad, x.shape[1]), x.dtype).at[:x.shape[0], :].set(x)

    x_article = jax.random.normal(kx1, (n_article, f_article), jnp.float32)
    x_author = jax.random.normal(kx2, (n_author, f_author), jnp.float32)
    x_dict = {"article": pad_rows(x_article, na_pad),
              "author": pad_rows(x_author, nu_pad)}

    def make_adj(k, n_src, n_dst, n_src_pad, n_dst_pad, n_edges):
        # unique (src, dst) pairs -> dense int8 adjacency adj[dst, src] at padded size
        perm = jax.random.permutation(k, n_src * n_dst)[:n_edges]
        src = (perm // n_dst).astype(jnp.int32)
        dst = (perm % n_dst).astype(jnp.int32)
        return jnp.zeros((n_dst_pad, n_src_pad), jnp.int8).at[dst, src].set(1)

    adj_dict = {
        ET_PUB: make_adj(ke1, n_author, n_article, nu_pad, na_pad, 600),
        ET_CO:  make_adj(ke2, n_author, n_author, nu_pad, nu_pad, 500),
        ET_REV: make_adj(ke3, n_article, n_author, na_pad, nu_pad, 600),
    }

    n_label_edges = 300
    edge_label_index = jax.random.randint(kel, (2, n_label_edges), 0, n_author,
                                          dtype=jnp.int32)

    params = init_params(kp, hidden, num_layers, f_article, f_author)
    n_real = {"article": n_article, "author": n_author}

    out = model_forward(params, x_dict, adj_dict, edge_label_index, n_real,
                        num_layers, include_linear, include_activation,
                        td=td, ts=ts, te=te)
    out = jax.block_until_ready(out)

    ref = _ref_model_forward(params, x_dict, adj_dict, edge_label_index, n_real,
                             num_layers, include_linear, include_activation)
    ref = jax.block_until_ready(ref)

    assert out.shape == (n_label_edges,)
    assert bool(jnp.all(jnp.isfinite(out)))
    max_err = float(jnp.max(jnp.abs(out - ref)))
    ref_scale = max(1.0, float(jnp.max(jnp.abs(ref))))
    assert max_err <= 5e-2 * ref_scale, f"mismatch vs reference: {max_err} (scale {ref_scale})"
    print("KERNEL_OK")
</pallas_src>

<mosaic_0001>
module attributes {stable_mosaic.version = 11 : i64} {
  func.func @kernel(%arg0: i32, %arg1: i32, %arg2: memref<8x128xf32, #tpu.memory_space<vmem>>, %arg3: memref<64x16xf32, #tpu.memory_space<vmem>>, %arg4: memref<64x128xi8, #tpu.memory_space<vmem>>, %arg5: memref<32x8xf32, #tpu.memory_space<vmem>>, %arg6: memref<32x1xf32, #tpu.memory_space<vmem>>, %arg7: memref<16x32xf32, #tpu.memory_space<vmem>>, %arg8: memref<1x32xf32, #tpu.memory_space<vmem>>, %arg9: memref<1x32xf32, #tpu.memory_space<vmem>>, %arg10: memref<1x32xf32, #tpu.memory_space<vmem>>, %arg11: memref<64x32xf32, #tpu.memory_space<vmem>>, %arg12: memref<64x32xf32, #tpu.memory_space<vmem>>, %arg13: memref<64x1xf32, #tpu.memory_space<vmem>>, %arg14: memref<64x1xf32, #tpu.memory_space<vmem>>, %arg15: memref<64x32xf32, #tpu.memory_space<vmem>>) attributes {dimension_semantics = [#tpu.dimension_semantics<parallel>, #tpu.dimension_semantics<arbitrary>], iteration_bounds = array<i64: 4, 2>, scalar_prefetch = 0 : i64, scratch_operands = 4 : i64, tpu.core_type = #tpu.core_type<tc>, window_params = [{transform_indices = @transform_0, window_bounds = array<i64: 8, 128>}, {transform_indices = @transform_1, window_bounds = array<i64: 64, 16>}, {transform_indices = @transform_2, window_bounds = array<i64: 64, 128>}, {pipeline_mode = #tpu.pipeline_mode<synchronous>, transform_indices = @transform_3, window_bounds = array<i64: 32, 8>}, {pipeline_mode = #tpu.pipeline_mode<synchronous>, transform_indices = @transform_4, window_bounds = array<i64: 32, 1>}, {pipeline_mode = #tpu.pipeline_mode<synchronous>, transform_indices = @transform_5, window_bounds = array<i64: 16, 32>}, {pipeline_mode = #tpu.pipeline_mode<synchronous>, transform_indices = @transform_6, window_bounds = array<i64: 1, 32>}, {pipeline_mode = #tpu.pipeline_mode<synchronous>, transform_indices = @transform_7, window_bounds = array<i64: 1, 32>}, {pipeline_mode = #tpu.pipeline_mode<synchronous>, transform_indices = @transform_8, window_bounds = array<i64: 1, 32>}, {transform_indices = @transform_9, window_bounds = array<i64: 64, 32>}]} {
    %c0_i32 = arith.constant 0 : i32
    %0 = arith.cmpi eq, %arg1, %c0_i32 : i32
    %1 = arith.extui %0 : i1 to i32
    %c0_i32_0 = arith.constant 0 : i32
    %2 = arith.cmpi ne, %1, %c0_i32_0 : i32
    scf.if %2 {
      %c0_64 = arith.constant 0 : index
      %c0_65 = arith.constant 0 : index
      %433 = vector.load %arg3[%c0_64, %c0_65] : memref<64x16xf32, #tpu.memory_space<vmem>>, vector<64x16xf32>
      %434 = arith.truncf %433 : vector<64x16xf32> to vector<64x16xbf16>
      %c0_66 = arith.constant 0 : index
      %c0_67 = arith.constant 0 : index
      %435 = vector.load %arg7[%c0_66, %c0_67] : memref<16x32xf32, #tpu.memory_space<vmem>>, vector<16x32xf32>
      %436 = arith.truncf %435 : vector<16x32xf32> to vector<16x32xbf16>
      %cst_68 = arith.constant dense<0.000000e+00> : vector<64x32xf32>
      %437 = tpu.matmul %434, %436, %cst_68 {dimension_numbers = #tpu.dot_dimension_numbers<[1], [0], [0], [1], [0, 0, 1, 1], [], []>} : vector<64x16xbf16>, vector<16x32xbf16>, vector<64x32xf32> -> vector<64x32xf32>
      %c0_69 = arith.constant 0 : index
      %c0_70 = arith.constant 0 : index
      %438 = vector.load %arg8[%c0_69, %c0_70] : memref<1x32xf32, #tpu.memory_space<vmem>>, vector<1x32xf32>
      %439 = vector.broadcast %438 : vector<1x32xf32> to vector<64x32xf32>
      %440 = arith.addf %437, %439 : vector<64x32xf32>
      %c0_71 = arith.constant 0 : index
      %c0_72 = arith.constant 0 : index
      %441 = vector.load %arg12[%c0_71, %c0_72] : memref<64x32xf32, #tpu.memory_space<vmem>>, vector<64x32xf32>
      tpu.vector_store %arg12[%c0_71, %c0_72], %440 {strides = array<i32>} : memref<64x32xf32, #tpu.memory_space<vmem>>, vector<64x32xf32>,
      %cst_73 = arith.constant -1.000000e+30 : f32
      %442 = vector.broadcast %cst_73 : f32 to vector<64x1xf32>
      %c0_74 = arith.constant 0 : index
      %c0_75 = arith.constant 0 : index
      %443 = vector.load %arg13[%c0_74, %c0_75] : memref<64x1xf32, #tpu.memory_space<vmem>>, vector<64x1xf32>
      tpu.vector_store %arg13[%c0_74, %c0_75], %442 {strides = array<i32>} : memref<64x1xf32, #tpu.memory_space<vmem>>, vector<64x1xf32>,
      %cst_76 = arith.constant 0.000000e+00 : f32
      %444 = vector.broadcast %cst_76 : f32 to vector<64x1xf32>
      %c0_77 = arith.constant 0 : index
      %c0_78 = arith.constant 0 : index
      %445 = vector.load %arg14[%c0_77, %c0_78] : memref<64x1xf32, #tpu.memory_space<vmem>>, vector<64x1xf32>
      tpu.vector_store %arg14[%c0_77, %c0_78], %444 {strides = array<i32>} : memref<64x1xf32, #tpu.memory_space<vmem>>, vector<64x1xf32>,
      %cst_79 = arith.constant 0.000000e+00 : f32
      %446 = vector.broadcast %cst_79 : f32 to vector<64x32xf32>
      %c0_80 = arith.constant 0 : index
      %c0_81 = arith.constant 0 : index
      %447 = vector.load %arg15[%c0_80, %c0_81] : memref<64x32xf32, #tpu.memory_space<vmem>>, vector<64x32xf32>
      tpu.vector_store %arg15[%c0_80, %c0_81], %446 {strides = array<i32>} : memref<64x32xf32, #tpu.memory_space<vmem>>, vector<64x32xf32>,
    } else {
    }
    %c0 = arith.constant 0 : index
    %c0_1 = arith.constant 0 : index
    %3 = vector.load %arg5[%c0, %c0_1] : memref<32x8xf32, #tpu.memory_space<vmem>>, vector<32x8xf32>
    %4 = arith.truncf %3 : vector<32x8xf32> to vector<32x8xbf16>
    %c0_2 = arith.constant 0 : index
    %c0_3 = arith.constant 0 : index
    %5 = vector.load %arg2[%c0_2, %c0_3] : memref<8x128xf32, #tpu.memory_space<vmem>>, vector<8x128xf32>
    %6 = arith.truncf %5 : vector<8x128xf32> to vector<8x128xbf16>
    %cst = arith.constant dense<0.000000e+00> : vector<32x128xf32>
    %7 = tpu.matmul %4, %6, %cst {dimension_numbers = #tpu.dot_dimension_numbers<[1], [0], [0], [1], [0, 0, 1, 1], [], []>} : vector<32x8xbf16>, vector<8x128xbf16>, vector<32x128xf32> -> vector<32x128xf32>
    %c0_4 = arith.constant 0 : index
    %c0_5 = arith.constant 0 : index
    %8 = vector.load %arg6[%c0_4, %c0_5] : memref<32x1xf32, #tpu.memory_space<vmem>>, vector<32x1xf32>
    %9 = vector.broadcast %8 : vector<32x1xf32> to vector<32x128xf32>
    %10 = arith.addf %7, %9 : vector<32x128xf32>
    %c0_6 = arith.constant 0 : index
    %c0_7 = arith.constant 0 : index
    %11 = vector.load %arg12[%c0_6, %c0_7] : memref<64x32xf32, #tpu.memory_space<vmem>>, vector<64x32xf32>
    %c0_8 = arith.constant 0 : index
    %c0_9 = arith.constant 0 : index
    %12 = vector.load %arg9[%c0_8, %c0_9] : memref<1x32xf32, #tpu.memory_space<vmem>>, vector<1x32xf32>
    %cst_10 = arith.constant 0.000000e+00 : f32
    %13 = vector.broadcast %cst_10 : f32 to vector<64x128xf32>
    %14 = vector.extract_strided_slice %11 {offsets = [0, 0], sizes = [64, 1], strides = [1, 1]} : vector<64x32xf32> to vector<64x1xf32>
    %15 = vector.extract_strided_slice %10 {offsets = [0, 0], sizes = [1, 128], strides = [1, 1]} : vector<32x128xf32> to vector<1x128xf32>
    %16 = vector.broadcast %14 : vector<64x1xf32> to vector<64x128xf32>
    %17 = vector.broadcast %15 : vector<1x128xf32> to vector<64x128xf32>
    %18 = arith.addf %16, %17 : vector<64x128xf32>
    %19 = vector.extract_strided_slice %12 {offsets = [0, 0], sizes = [1, 1], strides = [1, 1]} : vector<1x32xf32> to vector<1x1xf32>
    %cst_11 = arith.constant 2.000000e-01 : f32
    %20 = vector.broadcast %cst_11 : f32 to vector<64x128xf32>
    %21 = arith.mulf %20, %18 : vector<64x128xf32>
    %22 = arith.maximumf %18, %21 : vector<64x128xf32>
    %23 = vector.broadcast %19 : vector<1x1xf32> to vector<64x128xf32>
    %24 = arith.mulf %23, %22 : vector<64x128xf32>
    %25 = arith.addf %13, %24 : vector<64x128xf32>
    %26 = vector.extract_strided_slice %11 {offsets = [0, 1], sizes = [64, 1], strides = [1, 1]} : vector<64x32xf32> to vector<64x1xf32>
    %27 = vector.extract_strided_slice %10 {offsets = [1, 0], sizes = [1, 128], strides = [1, 1]} : vector<32x128xf32> to vector<1x128xf32>
    %28 = vector.broadcast %26 : vector<64x1xf32> to vector<64x128xf32>
    %29 = vector.broadcast %27 : vector<1x128xf32> to vector<64x128xf32>
    %30 = arith.addf %28, %29 : vector<64x128xf32>
    %31 = vector.extract_strided_slice %12 {offsets = [0, 1], sizes = [1, 1], strides = [1, 1]} : vector<1x32xf32> to vector<1x1xf32>
    %cst_12 = arith.constant 2.000000e-01 : f32
    %32 = vector.broadcast %cst_12 : f32 to vector<64x128xf32>
    %33 = arith.mulf %32, %30 : vector<64x128xf32>
    %34 = arith.maximumf %30, %33 : vector<64x128xf32>
    %35 = vector.broadcast %31 : vector<1x1xf32> to vector<64x128xf32>
    %36 = arith.mulf %35, %34 : vector<64x128xf32>
    %37 = arith.addf %25, %36 : vector<64x128xf32>
    %38 = vector.extract_strided_slice %11 {offsets = [0, 2], sizes = [64, 1], strides = [1, 1]} : vector<64x32xf32> to vector<64x1xf32>
    %39 = vector.extract_strided_slice %10 {offsets = [2, 0], sizes = [1, 128], strides = [1, 1]} : vector<32x128xf32> to vector<1x128xf32>
    %40 = vector.broadcast %38 : vector<64x1xf32> to vector<64x128xf32>
    %41 = vector.broadcast %39 : vector<1x128xf32> to vector<64x128xf32>
    %42 = arith.addf %40, %41 : vector<64x128xf32>
    %43 = vector.extract_strided_slice %12 {offsets = [0, 2], sizes = [1, 1], strides = [1, 1]} : vector<1x32xf32> to vector<1x1xf32>
    %cst_13 = arith.constant 2.000000e-01 : f32
    %44 = vector.broadcast %cst_13 : f32 to vector<64x128xf32>
    %45 = arith.mulf %44, %42 : vector<64x128xf32>
    %46 = arith.maximumf %42, %45 : vector<64x128xf32>
    %47 = vector.broadcast %43 : vector<1x1xf32> to vector<64x128xf32>
    %48 = arith.mulf %47, %46 : vector<64x128xf32>
    %49 = arith.addf %37, %48 : vector<64x128xf32>
    %50 = vector.extract_strided_slice %11 {offsets = [0, 3], sizes = [64, 1], strides = [1, 1]} : vector<64x32xf32> to vector<64x1xf32>
    %51 = vector.extract_strided_slice %10 {offsets = [3, 0], sizes = [1, 128], strides = [1, 1]} : vector<32x128xf32> to vector<1x128xf32>
    %52 = vector.broadcast %50 : vector<64x1xf32> to vector<64x128xf32>
    %53 = vector.broadcast %51 : vector<1x128xf32> to vector<64x128xf32>
    %54 = arith.addf %52, %53 : vector<64x128xf32>
    %55 = vector.extract_strided_slice %12 {offsets = [0, 3], sizes = [1, 1], strides = [1, 1]} : vector<1x32xf32> to vector<1x1xf32>
    %cst_14 = arith.constant 2.000000e-01 : f32
    %56 = vector.broadcast %cst_14 : f32 to vector<64x128xf32>
    %57 = arith.mulf %56, %54 : vector<64x128xf32>
    %58 = arith.maximumf %54, %57 : vector<64x128xf32>
    %59 = vector.broadcast %55 : vector<1x1xf32> to vector<64x128xf32>
    %60 = arith.mulf %59, %58 : vector<64x128xf32>
    %61 = arith.addf %49, %60 : vector<64x128xf32>
    %62 = vector.extract_strided_slice %11 {offsets = [0, 4], sizes = [64, 1], strides = [1, 1]} : vector<64x32xf32> to vector<64x1xf32>
    %63 = vector.extract_strided_slice %10 {offsets = [4, 0], sizes = [1, 128], strides = [1, 1]} : vector<32x128xf32> to vector<1x128xf32>
    %64 = vector.broadcast %62 : vector<64x1xf32> to vector<64x128xf32>
    %65 = vector.broadcast %63 : vector<1x128xf32> to vector<64x128xf32>
    %66 = arith.addf %64, %65 : vector<64x128xf32>
    %67 = vector.extract_strided_slice %12 {offsets = [0, 4], sizes = [1, 1], strides = [1, 1]} : vector<1x32xf32> to vector<1x1xf32>
    %cst_15 = arith.constant 2.000000e-01 : f32
    %68 = vector.broadcast %cst_15 : f32 to vector<64x128xf32>
    %69 = arith.mulf %68, %66 : vector<64x128xf32>
    %70 = arith.maximumf %66, %69 : vector<64x128xf32>
    %71 = vector.broadcast %67 : vector<1x1xf32> to vector<64x128xf32>
    %72 = arith.mulf %71, %70 : vector<64x128xf32>
    %73 = arith.addf %61, %72 : vector<64x128xf32>
    %74 = vector.extract_strided_slice %11 {offsets = [0, 5], sizes = [64, 1], strides = [1, 1]} : vector<64x32xf32> to vector<64x1xf32>
    %75 = vector.extract_strided_slice %10 {offsets = [5, 0], sizes = [1, 128], strides = [1, 1]} : vector<32x128xf32> to vector<1x128xf32>
    %76 = vector.broadcast %74 : vector<64x1xf32> to vector<64x128xf32>
    %77 = vector.broadcast %75 : vector<1x128xf32> to vector<64x128xf32>
    %78 = arith.addf %76, %77 : vector<64x128xf32>
    %79 = vector.extract_strided_slice %12 {offsets = [0, 5], sizes = [1, 1], strides = [1, 1]} : vector<1x32xf32> to vector<1x1xf32>
    %cst_16 = arith.constant 2.000000e-01 : f32
    %80 = vector.broadcast %cst_16 : f32 to vector<64x128xf32>
    %81 = arith.mulf %80, %78 : vector<64x128xf32>
    %82 = arith.maximumf %78, %81 : vector<64x128xf32>
    %83 = vector.broadcast %79 : vector<1x1xf32> to vector<64x128xf32>
    %84 = arith.mulf %83, %82 : vector<64x128xf32>
    %85 = arith.addf %73, %84 : vector<64x128xf32>
    %86 = vector.extract_strided_slice %11 {offsets = [0, 6], sizes = [64, 1], strides = [1, 1]} : vector<64x32xf32> to vector<64x1xf32>
    %87 = vector.extract_strided_slice %10 {offsets = [6, 0], sizes = [1, 128], strides = [1, 1]} : vector<32x128xf32> to vector<1x128xf32>
    %88 = vector.broadcast %86 : vector<64x1xf32> to vector<64x128xf32>
    %89 = vector.broadcast %87 : vector<1x128xf32> to vector<64x128xf32>
    %90 = arith.addf %88, %89 : vector<64x128xf32>
    %91 = vector.extract_strided_slice %12 {offsets = [0, 6], sizes = [1, 1], strides = [1, 1]} : vector<1x32xf32> to vector<1x1xf32>
    %cst_17 = arith.constant 2.000000e-01 : f32
    %92 = vector.broadcast %cst_17 : f32 to vector<64x128xf32>
    %93 = arith.mulf %92, %90 : vector<64x128xf32>
    %94 = arith.maximumf %90, %93 : vector<64x128xf32>
    %95 = vector.broadcast %91 : vector<1x1xf32> to vector<64x128xf32>
    %96 = arith.mulf %95, %94 : vector<64x128xf32>
    %97 = arith.addf %85, %96 : vector<64x128xf32>
    %98 = vector.extract_strided_slice %11 {offsets = [0, 7], sizes = [64, 1], strides = [1, 1]} : vector<64x32xf32> to vector<64x1xf32>
    %99 = vector.extract_strided_slice %10 {offsets = [7, 0], sizes = [1, 128], strides = [1, 1]} : vector<32x128xf32> to vector<1x128xf32>
    %100 = vector.broadcast %98 : vector<64x1xf32> to vector<64x128xf32>
    %101 = vector.broadcast %99 : vector<1x128xf32> to vector<64x128xf32>
    %102 = arith.addf %100, %101 : vector<64x128xf32>
    %103 = vector.extract_strided_slice %12 {offsets = [0, 7], sizes = [1, 1], strides = [1, 1]} : vector<1x32xf32> to vector<1x1xf32>
    %cst_18 = arith.constant 2.000000e-01 : f32
    %104 = vector.broadcast %cst_18 : f32 to vector<64x128xf32>
    %105 = arith.mulf %104, %102 : vector<64x128xf32>
    %106 = arith.maximumf %102, %105 : vector<64x128xf32>
    %107 = vector.broadcast %103 : vector<1x1xf32> to vector<64x128xf32>
    %108 = arith.mulf %107, %106 : vector<64x128xf32>
    %109 = arith.addf %97, %108 : vector<64x128xf32>
    %110 = vector.extract_strided_slice %11 {offsets = [0, 8], sizes = [64, 1], strides = [1, 1]} : vector<64x32xf32> to vector<64x1xf32>
    %111 = vector.extract_strided_slice %10 {offsets = [8, 0], sizes = [1, 128], strides = [1, 1]} : vector<32x128xf32> to vector<1x128xf32>
    %112 = vector.broadcast %110 : vector<64x1xf32> to vector<64x128xf32>
    %113 = vector.broadcast %111 : vector<1x128xf32> to vector<64x128xf32>
    %114 = arith.addf %112, %113 : vector<64x128xf32>
    %115 = vector.extract_strided_slice %12 {offsets = [0, 8], sizes = [1, 1], strides = [1, 1]} : vector<1x32xf32> to vector<1x1xf32>
    %cst_19 = arith.constant 2.000000e-01 : f32
    %116 = vector.broadcast %cst_19 : f32 to vector<64x128xf32>
    %117 = arith.mulf %116, %114 : vector<64x128xf32>
    %118 = arith.maximumf %114, %117 : vector<64x128xf32>
    %119 = vector.broadcast %115 : vector<1x1xf32> to vector<64x128xf32>
    %120 = arith.mulf %119, %118 : vector<64x128xf32>
    %121 = arith.addf %109, %120 : vector<64x128xf32>
    %122 = vector.extract_strided_slice %11 {offsets = [0, 9], sizes = [64, 1], strides = [1, 1]} : vector<64x32xf32> to vector<64x1xf32>
    %123 = vector.extract_strided_slice %10 {offsets = [9, 0], sizes = [1, 128], strides = [1, 1]} : vector<32x128xf32> to vector<1x128xf32>
    %124 = vector.broadcast %122 : vector<64x1xf32> to vector<64x128xf32>
    %125 = vector.broadcast %123 : vector<1x128xf32> to vector<64x128xf32>
    %126 = arith.addf %124, %125 : vector<64x128xf32>
    %127 = vector.extract_strided_slice %12 {offsets = [0, 9], sizes = [1, 1], strides = [1, 1]} : vector<1x32xf32> to vector<1x1xf32>
    %cst_20 = arith.constant 2.000000e-01 : f32
    %128 = vector.broadcast %cst_20 : f32 to vector<64x128xf32>
    %129 = arith.mulf %128, %126 : vector<64x128xf32>
    %130 = arith.maximumf %126, %129 : vector<64x128xf32>
    %131 = vector.broadcast %127 : vector<1x1xf32> to vector<64x128xf32>
    %132 = arith.mulf %131, %130 : vector<64x128xf32>
    %133 = arith.addf %121, %132 : vector<64x128xf32>
    %134 = vector.extract_strided_slice %11 {offsets = [0, 10], sizes = [64, 1], strides = [1, 1]} : vector<64x32xf32> to vector<64x1xf32>
    %135 = vector.extract_strided_slice %10 {offsets = [10, 0], sizes = [1, 128], strides = [1, 1]} : vector<32x128xf32> to vector<1x128xf32>
    %136 = vector.broadcast %134 : vector<64x1xf32> to vector<64x128xf32>
    %137 = vector.broadcast %135 : vector<1x128xf32> to vector<64x128xf32>
    %138 = arith.addf %136, %137 : vector<64x128xf32>
    %139 = vector.extract_strided_slice %12 {offsets = [0, 10], sizes = [1, 1], strides = [1, 1]} : vector<1x32xf32> to vector<1x1xf32>
    %cst_21 = arith.constant 2.000000e-01 : f32
    %140 = vector.broadcast %cst_21 : f32 to vector<64x128xf32>
    %141 = arith.mulf %140, %138 : vector<64x128xf32>
    %142 = arith.maximumf %138, %141 : vector<64x128xf32>
    %143 = vector.broadcast %139 : vector<1x1xf32> to vector<64x128xf32>
    %144 = arith.mulf %143, %142 : vector<64x128xf32>
    %145 = arith.addf %133, %144 : vector<64x128xf32>
    %146 = vector.extract_strided_slice %11 {offsets = [0, 11], sizes = [64, 1], strides = [1, 1]} : vector<64x32xf32> to vector<64x1xf32>
    %147 = vector.extract_strided_slice %10 {offsets = [11, 0], sizes = [1, 128], strides = [1, 1]} : vector<32x128xf32> to vector<1x128xf32>
    %148 = vector.broadcast %146 : vector<64x1xf32> to vector<64x128xf32>
    %149 = vector.broadcast %147 : vector<1x128xf32> to vector<64x128xf32>
    %150 = arith.addf %148, %149 : vector<64x128xf32>
    %151 = vector.extract_strided_slice %12 {offsets = [0, 11], sizes = [1, 1], strides = [1, 1]} : vector<1x32xf32> to vector<1x1xf32>
    %cst_22 = arith.constant 2.000000e-01 : f32
    %152 = vector.broadcast %cst_22 : f32 to vector<64x128xf32>
    %153 = arith.mulf %152, %150 : vector<64x128xf32>
    %154 = arith.maximumf %150, %153 : vector<64x128xf32>
    %155 = vector.broadcast %151 : vector<1x1xf32> to vector<64x128xf32>
    %156 = arith.mulf %155, %154 : vector<64x128xf32>
    %157 = arith.addf %145, %156 : vector<64x128xf32>
    %158 = vector.extract_strided_slice %11 {offsets = [0, 12], sizes = [64, 1], strides = [1, 1]} : vector<64x32xf32> to vector<64x1xf32>
    %159 = vector.extract_strided_slice %10 {offsets = [12, 0], sizes = [1, 128], strides = [1, 1]} : vector<32x128xf32> to vector<1x128xf32>
    %160 = vector.broadcast %158 : vector<64x1xf32> to vector<64x128xf32>
    %161 = vector.broadcast %159 : vector<1x128xf32> to vector<64x128xf32>
    %162 = arith.addf %160, %161 : vector<64x128xf32>
    %163 = vector.extract_strided_slice %12 {offsets = [0, 12], sizes = [1, 1], strides = [1, 1]} : vector<1x32xf32> to vector<1x1xf32>
    %cst_23 = arith.constant 2.000000e-01 : f32
    %164 = vector.broadcast %cst_23 : f32 to vector<64x128xf32>
    %165 = arith.mulf %164, %162 : vector<64x128xf32>
    %166 = arith.maximumf %162, %165 : vector<64x128xf32>
    %167 = vector.broadcast %163 : vector<1x1xf32> to vector<64x128xf32>
    %168 = arith.mulf %167, %166 : vector<64x128xf32>
    %169 = arith.addf %157, %168 : vector<64x128xf32>
    %170 = vector.extract_strided_slice %11 {offsets = [0, 13], sizes = [64, 1], strides = [1, 1]} : vector<64x32xf32> to vector<64x1xf32>
    %171 = vector.extract_strided_slice %10 {offsets = [13, 0], sizes = [1, 128], strides = [1, 1]} : vector<32x128xf32> to vector<1x128xf32>
    %172 = vector.broadcast %170 : vector<64x1xf32> to vector<64x128xf32>
    %173 = vector.broadcast %171 : vector<1x128xf32> to vector<64x128xf32>
    %174 = arith.addf %172, %173 : vector<64x128xf32>
    %175 = vector.extract_strided_slice %12 {offsets = [0, 13], sizes = [1, 1], strides = [1, 1]} : vector<1x32xf32> to vector<1x1xf32>
    %cst_24 = arith.constant 2.000000e-01 : f32
    %176 = vector.broadcast %cst_24 : f32 to vector<64x128xf32>
    %177 = arith.mulf %176, %174 : vector<64x128xf32>
    %178 = arith.maximumf %174, %177 : vector<64x128xf32>
    %179 = vector.broadcast %175 : vector<1x1xf32> to vector<64x128xf32>
    %180 = arith.mulf %179, %178 : vector<64x128xf32>
    %181 = arith.addf %169, %180 : vector<64x128xf32>
    %182 = vector.extract_strided_slice %11 {offsets = [0, 14], sizes = [64, 1], strides = [1, 1]} : vector<64x32xf32> to vector<64x1xf32>
    %183 = vector.extract_strided_slice %10 {offsets = [14, 0], sizes = [1, 128], strides = [1, 1]} : vector<32x128xf32> to vector<1x128xf32>
    %184 = vector.broadcast %182 : vector<64x1xf32> to vector<64x128xf32>
    %185 = vector.broadcast %183 : vector<1x128xf32> to vector<64x128xf32>
    %186 = arith.addf %184, %185 : vector<64x128xf32>
    %187 = vector.extract_strided_slice %12 {offsets = [0, 14], sizes = [1, 1], strides = [1, 1]} : vector<1x32xf32> to vector<1x1xf32>
    %cst_25 = arith.constant 2.000000e-01 : f32
    %188 = vector.broadcast %cst_25 : f32 to vector<64x128xf32>
    %189 = arith.mulf %188, %186 : vector<64x128xf32>
    %190 = arith.maximumf %186, %189 : vector<64x128xf32>
    %191 = vector.broadcast %187 : vector<1x1xf32> to vector<64x128xf32>
    %192 = arith.mulf %191, %190 : vector<64x128xf32>
    %193 = arith.addf %181, %192 : vector<64x128xf32>
    %194 = vector.extract_strided_slice %11 {offsets = [0, 15], sizes = [64, 1], strides = [1, 1]} : vector<64x32xf32> to vector<64x1xf32>
    %195 = vector.extract_strided_slice %10 {offsets = [15, 0], sizes = [1, 128], strides = [1, 1]} : vector<32x128xf32> to vector<1x128xf32>
    %196 = vector.broadcast %194 : vector<64x1xf32> to vector<64x128xf32>
    %197 = vector.broadcast %195 : vector<1x128xf32> to vector<64x128xf32>
    %198 = arith.addf %196, %197 : vector<64x128xf32>
    %199 = vector.extract_strided_slice %12 {offsets = [0, 15], sizes = [1, 1], strides = [1, 1]} : vector<1x32xf32> to vector<1x1xf32>
    %cst_26 = arith.constant 2.000000e-01 : f32
    %200 = vector.broadcast %cst_26 : f32 to vector<64x128xf32>
    %201 = arith.mulf %200, %198 : vector<64x128xf32>
    %202 = arith.maximumf %198, %201 : vector<64x128xf32>
    %203 = vector.broadcast %199 : vector<1x1xf32> to vector<64x128xf32>
    %204 = arith.mulf %203, %202 : vector<64x128xf32>
    %205 = arith.addf %193, %204 : vector<64x128xf32>
    %206 = vector.extract_strided_slice %11 {offsets = [0, 16], sizes = [64, 1], strides = [1, 1]} : vector<64x32xf32> to vector<64x1xf32>
    %207 = vector.extract_strided_slice %10 {offsets = [16, 0], sizes = [1, 128], strides = [1, 1]} : vector<32x128xf32> to vector<1x128xf32>
    %208 = vector.broadcast %206 : vector<64x1xf32> to vector<64x128xf32>
    %209 = vector.broadcast %207 : vector<1x128xf32> to vector<64x128xf32>
    %210 = arith.addf %208, %209 : vector<64x128xf32>
    %211 = vector.extract_strided_slice %12 {offsets = [0, 16], sizes = [1, 1], strides = [1, 1]} : vector<1x32xf32> to vector<1x1xf32>
    %cst_27 = arith.constant 2.000000e-01 : f32
    %212 = vector.broadcast %cst_27 : f32 to vector<64x128xf32>
    %213 = arith.mulf %212, %210 : vector<64x128xf32>
    %214 = arith.maximumf %210, %213 : vector<64x128xf32>
    %215 = vector.broadcast %211 : vector<1x1xf32> to vector<64x128xf32>
    %216 = arith.mulf %215, %214 : vector<64x128xf32>
    %217 = arith.addf %205, %216 : vector<64x128xf32>
    %218 = vector.extract_strided_slice %11 {offsets = [0, 17], sizes = [64, 1], strides = [1, 1]} : vector<64x32xf32> to vector<64x1xf32>
    %219 = vector.extract_strided_slice %10 {offsets = [17, 0], sizes = [1, 128], strides = [1, 1]} : vector<32x128xf32> to vector<1x128xf32>
    %220 = vector.broadcast %218 : vector<64x1xf32> to vector<64x128xf32>
    %221 = vector.broadcast %219 : vector<1x128xf32> to vector<64x128xf32>
    %222 = arith.addf %220, %221 : vector<64x128xf32>
    %223 = vector.extract_strided_slice %12 {offsets = [0, 17], sizes = [1, 1], strides = [1, 1]} : vector<1x32xf32> to vector<1x1xf32>
    %cst_28 = arith.constant 2.000000e-01 : f32
    %224 = vector.broadcast %cst_28 : f32 to vector<64x128xf32>
    %225 = arith.mulf %224, %222 : vector<64x128xf32>
    %226 = arith.maximumf %222, %225 : vector<64x128xf32>
    %227 = vector.broadcast %223 : vector<1x1xf32> to vector<64x128xf32>
    %228 = arith.mulf %227, %226 : vector<64x128xf32>
    %229 = arith.addf %217, %228 : vector<64x128xf32>
    %230 = vector.extract_strided_slice %11 {offsets = [0, 18], sizes = [64, 1], strides = [1, 1]} : vector<64x32xf32> to vector<64x1xf32>
    %231 = vector.extract_strided_slice %10 {offsets = [18, 0], sizes = [1, 128], strides = [1, 1]} : vector<32x128xf32> to vector<1x128xf32>
    %232 = vector.broadcast %230 : vector<64x1xf32> to vector<64x128xf32>
    %233 = vector.broadcast %231 : vector<1x128xf32> to vector<64x128xf32>
    %234 = arith.addf %232, %233 : vector<64x128xf32>
    %235 = vector.extract_strided_slice %12 {offsets = [0, 18], sizes = [1, 1], strides = [1, 1]} : vector<1x32xf32> to vector<1x1xf32>
    %cst_29 = arith.constant 2.000000e-01 : f32
    %236 = vector.broadcast %cst_29 : f32 to vector<64x128xf32>
    %237 = arith.mulf %236, %234 : vector<64x128xf32>
    %238 = arith.maximumf %234, %237 : vector<64x128xf32>
    %239 = vector.broadcast %235 : vector<1x1xf32> to vector<64x128xf32>
    %240 = arith.mulf %239, %238 : vector<64x128xf32>
    %241 = arith.addf %229, %240 : vector<64x128xf32>
    %242 = vector.extract_strided_slice %11 {offsets = [0, 19], sizes = [64, 1], strides = [1, 1]} : vector<64x32xf32> to vector<64x1xf32>
    %243 = vector.extract_strided_slice %10 {offsets = [19, 0], sizes = [1, 128], strides = [1, 1]} : vector<32x128xf32> to vector<1x128xf32>
    %244 = vector.broadcast %242 : vector<64x1xf32> to vector<64x128xf32>
    %245 = vector.broadcast %243 : vector<1x128xf32> to vector<64x128xf32>
    %246 = arith.addf %244, %245 : vector<64x128xf32>
    %247 = vector.extract_strided_slice %12 {offsets = [0, 19], sizes = [1, 1], strides = [1, 1]} : vector<1x32xf32> to vector<1x1xf32>
    %cst_30 = arith.constant 2.000000e-01 : f32
    %248 = vector.broadcast %cst_30 : f32 to vector<64x128xf32>
    %249 = arith.mulf %248, %246 : vector<64x128xf32>
    %250 = arith.maximumf %246, %249 : vector<64x128xf32>
    %251 = vector.broadcast %247 : vector<1x1xf32> to vector<64x128xf32>
    %252 = arith.mulf %251, %250 : vector<64x128xf32>
    %253 = arith.addf %241, %252 : vector<64x128xf32>
    %254 = vector.extract_strided_slice %11 {offsets = [0, 20], sizes = [64, 1], strides = [1, 1]} : vector<64x32xf32> to vector<64x1xf32>
    %255 = vector.extract_strided_slice %10 {offsets = [20, 0], sizes = [1, 128], strides = [1, 1]} : vector<32x128xf32> to vector<1x128xf32>
    %256 = vector.broadcast %254 : vector<64x1xf32> to vector<64x128xf32>
    %257 = vector.broadcast %255 : vector<1x128xf32> to vector<64x128xf32>
    %258 = arith.addf %256, %257 : vector<64x128xf32>
    %259 = vector.extract_strided_slice %12 {offsets = [0, 20], sizes = [1, 1], strides = [1, 1]} : vector<1x32xf32> to vector<1x1xf32>
    %cst_31 = arith.constant 2.000000e-01 : f32
    %260 = vector.broadcast %cst_31 : f32 to vector<64x128xf32>
    %261 = arith.mulf %260, %258 : vector<64x128xf32>
    %262 = arith.maximumf %258, %261 : vector<64x128xf32>
    %263 = vector.broadcast %259 : vector<1x1xf32> to vector<64x128xf32>
    %264 = arith.mulf %263, %262 : vector<64x128xf32>
    %265 = arith.addf %253, %264 : vector<64x128xf32>
    %266 = vector.extract_strided_slice %11 {offsets = [0, 21], sizes = [64, 1], strides = [1, 1]} : vector<64x32xf32> to vector<64x1xf32>
    %267 = vector.extract_strided_slice %10 {offsets = [21, 0], sizes = [1, 128], strides = [1, 1]} : vector<32x128xf32> to vector<1x128xf32>
    %268 = vector.broadcast %266 : vector<64x1xf32> to vector<64x128xf32>
    %269 = vector.broadcast %267 : vector<1x128xf32> to vector<64x128xf32>
    %270 = arith.addf %268, %269 : vector<64x128xf32>
    %271 = vector.extract_strided_slice %12 {offsets = [0, 21], sizes = [1, 1], strides = [1, 1]} : vector<1x32xf32> to vector<1x1xf32>
    %cst_32 = arith.constant 2.000000e-01 : f32
    %272 = vector.broadcast %cst_32 : f32 to vector<64x128xf32>
    %273 = arith.mulf %272, %270 : vector<64x128xf32>
    %274 = arith.maximumf %270, %273 : vector<64x128xf32>
    %275 = vector.broadcast %271 : vector<1x1xf32> to vector<64x128xf32>
    %276 = arith.mulf %275, %274 : vector<64x128xf32>
    %277 = arith.addf %265, %276 : vector<64x128xf32>
    %278 = vector.extract_strided_slice %11 {offsets = [0, 22], sizes = [64, 1], strides = [1, 1]} : vector<64x32xf32> to vector<64x1xf32>
    %279 = vector.extract_strided_slice %10 {offsets = [22, 0], sizes = [1, 128], strides = [1, 1]} : vector<32x128xf32> to vector<1x128xf32>
    %280 = vector.broadcast %278 : vector<64x1xf32> to vector<64x128xf32>
    %281 = vector.broadcast %279 : vector<1x128xf32> to vector<64x128xf32>
    %282 = arith.addf %280, %281 : vector<64x128xf32>
    %283 = vector.extract_strided_slice %12 {offsets = [0, 22], sizes = [1, 1], strides = [1, 1]} : vector<1x32xf32> to vector<1x1xf32>
    %cst_33 = arith.constant 2.000000e-01 : f32
    %284 = vector.broadcast %cst_33 : f32 to vector<64x128xf32>
    %285 = arith.mulf %284, %282 : vector<64x128xf32>
    %286 = arith.maximumf %282, %285 : vector<64x128xf32>
    %287 = vector.broadcast %283 : vector<1x1xf32> to vector<64x128xf32>
    %288 = arith.mulf %287, %286 : vector<64x128xf32>
    %289 = arith.addf %277, %288 : vector<64x128xf32>
    %290 = vector.extract_strided_slice %11 {offsets = [0, 23], sizes = [64, 1], strides = [1, 1]} : vector<64x32xf32> to vector<64x1xf32>
    %291 = vector.extract_strided_slice %10 {offsets = [23, 0], sizes = [1, 128], strides = [1, 1]} : vector<32x128xf32> to vector<1x128xf32>
    %292 = vector.broadcast %290 : vector<64x1xf32> to vector<64x128xf32>
    %293 = vector.broadcast %291 : vector<1x128xf32> to vector<64x128xf32>
    %294 = arith.addf %292, %293 : vector<64x128xf32>
    %295 = vector.extract_strided_slice %12 {offsets = [0, 23], sizes = [1, 1], strides = [1, 1]} : vector<1x32xf32> to vector<1x1xf32>
    %cst_34 = arith.constant 2.000000e-01 : f32
    %296 = vector.broadcast %cst_34 : f32 to vector<64x128xf32>
    %297 = arith.mulf %296, %294 : vector<64x128xf32>
    %298 = arith.maximumf %294, %297 : vector<64x128xf32>
    %299 = vector.broadcast %295 : vector<1x1xf32> to vector<64x128xf32>
    %300 = arith.mulf %299, %298 : vector<64x128xf32>
    %301 = arith.addf %289, %300 : vector<64x128xf32>
    %302 = vector.extract_strided_slice %11 {offsets = [0, 24], sizes = [64, 1], strides = [1, 1]} : vector<64x32xf32> to vector<64x1xf32>
    %303 = vector.extract_strided_slice %10 {offsets = [24, 0], sizes = [1, 128], strides = [1, 1]} : vector<32x128xf32> to vector<1x128xf32>
    %304 = vector.broadcast %302 : vector<64x1xf32> to vector<64x128xf32>
    %305 = vector.broadcast %303 : vector<1x128xf32> to vector<64x128xf32>
    %306 = arith.addf %304, %305 : vector<64x128xf32>
    %307 = vector.extract_strided_slice %12 {offsets = [0, 24], sizes = [1, 1], strides = [1, 1]} : vector<1x32xf32> to vector<1x1xf32>
    %cst_35 = arith.constant 2.000000e-01 : f32
    %308 = vector.broadcast %cst_35 : f32 to vector<64x128xf32>
    %309 = arith.mulf %308, %306 : vector<64x128xf32>
    %310 = arith.maximumf %306, %309 : vector<64x128xf32>
    %311 = vector.broadcast %307 : vector<1x1xf32> to vector<64x128xf32>
    %312 = arith.mulf %311, %310 : vector<64x128xf32>
    %313 = arith.addf %301, %312 : vector<64x128xf32>
    %314 = vector.extract_strided_slice %11 {offsets = [0, 25], sizes = [64, 1], strides = [1, 1]} : vector<64x32xf32> to vector<64x1xf32>
    %315 = vector.extract_strided_slice %10 {offsets = [25, 0], sizes = [1, 128], strides = [1, 1]} : vector<32x128xf32> to vector<1x128xf32>
    %316 = vector.broadcast %314 : vector<64x1xf32> to vector<64x128xf32>
    %317 = vector.broadcast %315 : vector<1x128xf32> to vector<64x128xf32>
    %318 = arith.addf %316, %317 : vector<64x128xf32>
    %319 = vector.extract_strided_slice %12 {offsets = [0, 25], sizes = [1, 1], strides = [1, 1]} : vector<1x32xf32> to vector<1x1xf32>
    %cst_36 = arith.constant 2.000000e-01 : f32
    %320 = vector.broadcast %cst_36 : f32 to vector<64x128xf32>
    %321 = arith.mulf %320, %318 : vector<64x128xf32>
    %322 = arith.maximumf %318, %321 : vector<64x128xf32>
    %323 = vector.broadcast %319 : vector<1x1xf32> to vector<64x128xf32>
    %324 = arith.mulf %323, %322 : vector<64x128xf32>
    %325 = arith.addf %313, %324 : vector<64x128xf32>
    %326 = vector.extract_strided_slice %11 {offsets = [0, 26], sizes = [64, 1], strides = [1, 1]} : vector<64x32xf32> to vector<64x1xf32>
    %327 = vector.extract_strided_slice %10 {offsets = [26, 0], sizes = [1, 128], strides = [1, 1]} : vector<32x128xf32> to vector<1x128xf32>
    %328 = vector.broadcast %326 : vector<64x1xf32> to vector<64x128xf32>
    %329 = vector.broadcast %327 : vector<1x128xf32> to vector<64x128xf32>
    %330 = arith.addf %328, %329 : vector<64x128xf32>
    %331 = vector.extract_strided_slice %12 {offsets = [0, 26], sizes = [1, 1], strides = [1, 1]} : vector<1x32xf32> to vector<1x1xf32>
    %cst_37 = arith.constant 2.000000e-01 : f32
    %332 = vector.broadcast %cst_37 : f32 to vector<64x128xf32>
    %333 = arith.mulf %332, %330 : vector<64x128xf32>
    %334 = arith.maximumf %330, %333 : vector<64x128xf32>
    %335 = vector.broadcast %331 : vector<1x1xf32> to vector<64x128xf32>
    %336 = arith.mulf %335, %334 : vector<64x128xf32>
    %337 = arith.addf %325, %336 : vector<64x128xf32>
    %338 = vector.extract_strided_slice %11 {offsets = [0, 27], sizes = [64, 1], strides = [1, 1]} : vector<64x32xf32> to vector<64x1xf32>
    %339 = vector.extract_strided_slice %10 {offsets = [27, 0], sizes = [1, 128], strides = [1, 1]} : vector<32x128xf32> to vector<1x128xf32>
    %340 = vector.broadcast %338 : vector<64x1xf32> to vector<64x128xf32>
    %341 = vector.broadcast %339 : vector<1x128xf32> to vector<64x128xf32>
    %342 = arith.addf %340, %341 : vector<64x128xf32>
    %343 = vector.extract_strided_slice %12 {offsets = [0, 27], sizes = [1, 1], strides = [1, 1]} : vector<1x32xf32> to vector<1x1xf32>
    %cst_38 = arith.constant 2.000000e-01 : f32
    %344 = vector.broadcast %cst_38 : f32 to vector<64x128xf32>
    %345 = arith.mulf %344, %342 : vector<64x128xf32>
    %346 = arith.maximumf %342, %345 : vector<64x128xf32>
    %347 = vector.broadcast %343 : vector<1x1xf32> to vector<64x128xf32>
    %348 = arith.mulf %347, %346 : vector<64x128xf32>
    %349 = arith.addf %337, %348 : vector<64x128xf32>
    %350 = vector.extract_strided_slice %11 {offsets = [0, 28], sizes = [64, 1], strides = [1, 1]} : vector<64x32xf32> to vector<64x1xf32>
    %351 = vector.extract_strided_slice %10 {offsets = [28, 0], sizes = [1, 128], strides = [1, 1]} : vector<32x128xf32> to vector<1x128xf32>
    %352 = vector.broadcast %350 : vector<64x1xf32> to vector<64x128xf32>
    %353 = vector.broadcast %351 : vector<1x128xf32> to vector<64x128xf32>
    %354 = arith.addf %352, %353 : vector<64x128xf32>
    %355 = vector.extract_strided_slice %12 {offsets = [0, 28], sizes = [1, 1], strides = [1, 1]} : vector<1x32xf32> to vector<1x1xf32>
    %cst_39 = arith.constant 2.000000e-01 : f32
    %356 = vector.broadcast %cst_39 : f32 to vector<64x128xf32>
    %357 = arith.mulf %356, %354 : vector<64x128xf32>
    %358 = arith.maximumf %354, %357 : vector<64x128xf32>
    %359 = vector.broadcast %355 : vector<1x1xf32> to vector<64x128xf32>
    %360 = arith.mulf %359, %358 : vector<64x128xf32>
    %361 = arith.addf %349, %360 : vector<64x128xf32>
    %362 = vector.extract_strided_slice %11 {offsets = [0, 29], sizes = [64, 1], strides = [1, 1]} : vector<64x32xf32> to vector<64x1xf32>
    %363 = vector.extract_strided_slice %10 {offsets = [29, 0], sizes = [1, 128], strides = [1, 1]} : vector<32x128xf32> to vector<1x128xf32>
    %364 = vector.broadcast %362 : vector<64x1xf32> to vector<64x128xf32>
    %365 = vector.broadcast %363 : vector<1x128xf32> to vector<64x128xf32>
    %366 = arith.addf %364, %365 : vector<64x128xf32>
    %367 = vector.extract_strided_slice %12 {offsets = [0, 29], sizes = [1, 1], strides = [1, 1]} : vector<1x32xf32> to vector<1x1xf32>
    %cst_40 = arith.constant 2.000000e-01 : f32
    %368 = vector.broadcast %cst_40 : f32 to vector<64x128xf32>
    %369 = arith.mulf %368, %366 : vector<64x128xf32>
    %370 = arith.maximumf %366, %369 : vector<64x128xf32>
    %371 = vector.broadcast %367 : vector<1x1xf32> to vector<64x128xf32>
    %372 = arith.mulf %371, %370 : vector<64x128xf32>
    %373 = arith.addf %361, %372 : vector<64x128xf32>
    %374 = vector.extract_strided_slice %11 {offsets = [0, 30], sizes = [64, 1], strides = [1, 1]} : vector<64x32xf32> to vector<64x1xf32>
    %375 = vector.extract_strided_slice %10 {offsets = [30, 0], sizes = [1, 128], strides = [1, 1]} : vector<32x128xf32> to vector<1x128xf32>
    %376 = vector.broadcast %374 : vector<64x1xf32> to vector<64x128xf32>
    %377 = vector.broadcast %375 : vector<1x128xf32> to vector<64x128xf32>
    %378 = arith.addf %376, %377 : vector<64x128xf32>
    %379 = vector.extract_strided_slice %12 {offsets = [0, 30], sizes = [1, 1], strides = [1, 1]} : vector<1x32xf32> to vector<1x1xf32>
    %cst_41 = arith.constant 2.000000e-01 : f32
    %380 = vector.broadcast %cst_41 : f32 to vector<64x128xf32>
    %381 = arith.mulf %380, %378 : vector<64x128xf32>
    %382 = arith.maximumf %378, %381 : vector<64x128xf32>
    %383 = vector.broadcast %379 : vector<1x1xf32> to vector<64x128xf32>
    %384 = arith.mulf %383, %382 : vector<64x128xf32>
    %385 = arith.addf %373, %384 : vector<64x128xf32>
    %386 = vector.extract_strided_slice %11 {offsets = [0, 31], sizes = [64, 1], strides = [1, 1]} : vector<64x32xf32> to vector<64x1xf32>
    %387 = vector.extract_strided_slice %10 {offsets = [31, 0], sizes = [1, 128], strides = [1, 1]} : vector<32x128xf32> to vector<1x128xf32>
    %388 = vector.broadcast %386 : vector<64x1xf32> to vector<64x128xf32>
    %389 = vector.broadcast %387 : vector<1x128xf32> to vector<64x128xf32>
    %390 = arith.addf %388, %389 : vector<64x128xf32>
    %391 = vector.extract_strided_slice %12 {offsets = [0, 31], sizes = [1, 1], strides = [1, 1]} : vector<1x32xf32> to vector<1x1xf32>
    %cst_42 = arith.constant 2.000000e-01 : f32
    %392 = vector.broadcast %cst_42 : f32 to vector<64x128xf32>
    %393 = arith.mulf %392, %390 : vector<64x128xf32>
    %394 = arith.maximumf %390, %393 : vector<64x128xf32>
    %395 = vector.broadcast %391 : vector<1x1xf32> to vector<64x128xf32>
    %396 = arith.mulf %395, %394 : vector<64x128xf32>
    %397 = arith.addf %385, %396 : vector<64x128xf32>
    %c0_43 = arith.constant 0 : index
    %c0_44 = arith.constant 0 : index
    %398 = vector.load %arg4[%c0_43, %c0_44] : memref<64x128xi8, #tpu.memory_space<vmem>>, vector<64x128xi8>
    %399 = arith.sitofp %398 : vector<64x128xi8> to vector<64x128xf32>
    %cst_45 = arith.constant 0.000000e+00 : f32
    %400 = vector.broadcast %cst_45 : f32 to vector<64x128xf32>
    %401 = arith.cmpf ogt, %399, %400 : vector<64x128xf32>
    %cst_46 = arith.constant -1.000000e+30 : f32
    %402 = vector.broadcast %cst_46 : f32 to vector<64x128xf32>
    %403 = arith.select %401, %397, %402 : vector<64x128xi1>, vector<64x128xf32>
    %c0_47 = arith.constant 0 : index
    %c0_48 = arith.constant 0 : index
    %404 = vector.load %arg13[%c0_47, %c0_48] : memref<64x1xf32, #tpu.memory_space<vmem>>, vector<64x1xf32>
    %cst_49 = arith.constant dense<0xFF800000> : vector<64xf32>
    %405 = vector.multi_reduction <maximumf>, %403, %cst_49 [1] : vector<64x128xf32> to vector<64xf32>
    %406 = vector.shape_cast %405 : vector<64xf32> to vector<64x1xf32>
    %407 = arith.maximumf %404, %406 : vector<64x1xf32>
    %408 = vector.broadcast %407 : vector<64x1xf32> to vector<64x128xf32>
    %409 = arith.subf %403, %408 : vector<64x128xf32>
    %410 = math.exp %409 : vector<64x128xf32>
    %cst_50 = arith.constant 0.000000e+00 : f32
    %411 = vector.broadcast %cst_50 : f32 to vector<64x128xf32>
    %412 = arith.select %401, %410, %411 : vector<64x128xi1>, vector<64x128xf32>
    %413 = arith.subf %404, %407 : vector<64x1xf32>
    %414 = math.exp %413 : vector<64x1xf32>
    %c0_51 = arith.constant 0 : index
    %c0_52 = arith.constant 0 : index
    %415 = vector.load %arg14[%c0_51, %c0_52] : memref<64x1xf32, #tpu.memory_space<vmem>>, vector<64x1xf32>
    %416 = arith.mulf %414, %415 : vector<64x1xf32>
    %cst_53 = arith.constant dense<0.000000e+00> : vector<64xf32>
    %417 = vector.multi_reduction <add>, %412, %cst_53 [1] : vector<64x128xf32> to vector<64xf32>
    %418 = vector.shape_cast %417 : vector<64xf32> to vector<64x1xf32>
    %419 = arith.addf %416, %418 : vector<64x1xf32>
    %c0_54 = arith.constant 0 : index
    %c0_55 = arith.constant 0 : index
    %420 = vector.load %arg14[%c0_54, %c0_55] : memref<64x1xf32, #tpu.memory_space<vmem>>, vector<64x1xf32>
    tpu.vector_store %arg14[%c0_54, %c0_55], %419 {strides = array<i32>} : memref<64x1xf32, #tpu.memory_space<vmem>>, vector<64x1xf32>,
    %c0_56 = arith.constant 0 : index
    %c0_57 = arith.constant 0 : index
    %421 = vector.load %arg15[%c0_56, %c0_57] : memref<64x32xf32, #tpu.memory_space<vmem>>, vector<64x32xf32>
    %422 = vector.broadcast %414 : vector<64x1xf32> to vector<64x32xf32>
    %423 = arith.mulf %422, %421 : vector<64x32xf32>
    %424 = arith.truncf %412 : vector<64x128xf32> to vector<64x128xbf16>
    %425 = arith.truncf %10 : vector<32x128xf32> to vector<32x128xbf16>
    %cst_58 = arith.constant dense<0.000000e+00> : vector<64x32xf32>
    %426 = tpu.matmul %424, %425, %cst_58 {dimension_numbers = #tpu.dot_dimension_numbers<[1], [1], [0], [0], [0, 0, 1, 0], [], []>} : vector<64x128xbf16>, vector<32x128xbf16>, vector<64x32xf32> -> vector<64x32xf32>
    %427 = arith.addf %423, %426 : vector<64x32xf32>
    %c0_59 = arith.constant 0 : index
    %c0_60 = arith.constant 0 : index
    %428 = vector.load %arg15[%c0_59, %c0_60] : memref<64x32xf32, #tpu.memory_space<vmem>>, vector<64x32xf32>
    tpu.vector_store %arg15[%c0_59, %c0_60], %427 {strides = array<i32>} : memref<64x32xf32, #tpu.memory_space<vmem>>, vector<64x32xf32>,
    %c0_61 = arith.constant 0 : index
    %c0_62 = arith.constant 0 : index
    %429 = vector.load %arg13[%c0_61, %c0_62] : memref<64x1xf32, #tpu.memory_space<vmem>>, vector<64x1xf32>
    tpu.vector_store %arg13[%c0_61, %c0_62], %407 {strides = array<i32>} : memref<64x1xf32, #tpu.memory_space<vmem>>, vector<64x1xf32>,
    %c1_i32 = arith.constant 1 : i32
    %430 = arith.cmpi eq, %arg1, %c1_i32 : i32
    %431 = arith.extui %430 : i1 to i32
    %c0_i32_63 = arith.constant 0 : i32
    %432 = arith.cmpi ne, %431, %c0_i32_63 : i32
    scf.if %432 {
      %c0_64 = arith.constant 0 : index
      %c0_65 = arith.constant 0 : index
      %433 = vector.load %arg14[%c0_64, %c0_65] : memref<64x1xf32, #tpu.memory_space<vmem>>, vector<64x1xf32>
      %cst_66 = arith.constant 0.000000e+00 : f32
      %434 = vector.broadcast %cst_66 : f32 to vector<64x1xf32>
      %435 = arith.cmpf ogt, %433, %434 : vector<64x1xf32>
      %cst_67 = arith.constant 1.000000e+00 : f32
      %436 = vector.broadcast %cst_67 : f32 to vector<64x1xf32>
      %437 = arith.select %435, %433, %436 : vector<64x1xi1>, vector<64x1xf32>
      %c0_68 = arith.constant 0 : index
      %c0_69 = arith.constant 0 : index
      %438 = vector.load %arg15[%c0_68, %c0_69] : memref<64x32xf32, #tpu.memory_space<vmem>>, vector<64x32xf32>
      %439 = vector.broadcast %437 : vector<64x1xf32> to vector<64x32xf32>
      %440 = arith.divf %438, %439 : vector<64x32xf32>
      %c0_70 = arith.constant 0 : index
      %c0_71 = arith.constant 0 : index
      %441 = vector.load %arg10[%c0_70, %c0_71] : memref<1x32xf32, #tpu.memory_space<vmem>>, vector<1x32xf32>
      %442 = vector.broadcast %441 : vector<1x32xf32> to vector<64x32xf32>
      %443 = arith.addf %440, %442 : vector<64x32xf32>
      %c0_72 = arith.constant 0 : index
      %c0_73 = arith.constant 0 : index
      %444 = vector.load %arg11[%c0_72, %c0_73] : memref<64x32xf32, #tpu.memory_space<vmem>>, vector<64x32xf32>
      tpu.vector_store %arg11[%c0_72, %c0_73], %443 {strides = array<i32>} : memref<64x32xf32, #tpu.memory_space<vmem>>, vector<64x32xf32>,
    } else {
    }
    return
  }
  func.func @transform_0(%arg0: i32, %arg1: i32) -> (i32, i32) {
    %c0_i32 = arith.constant 0 : i32
    %c0_i32_0 = arith.constant 0 : i32
    return %c0_i32, %arg1 : i32, i32
  }
  func.func @transform_1(%arg0: i32, %arg1: i32) -> (i32, i32) {
    %c0_i32 = arith.constant 0 : i32
    %c0_i32_0 = arith.constant 0 : i32
    return %arg0, %c0_i32 : i32, i32
  }
  func.func @transform_2(%arg0: i32, %arg1: i32) -> (i32, i32) {
    %c0_i32 = arith.constant 0 : i32
    return %arg0, %arg1 : i32, i32
  }
  func.func @transform_3(%arg0: i32, %arg1: i32) -> (i32, i32) {
    %c0_i32 = arith.constant 0 : i32
    %c0_i32_0 = arith.constant 0 : i32
    %c0_i32_1 = arith.constant 0 : i32
    return %c0_i32, %c0_i32_0 : i32, i32
  }
  func.func @transform_4(%arg0: i32, %arg1: i32) -> (i32, i32) {
    %c0_i32 = arith.constant 0 : i32
    %c0_i32_0 = arith.constant 0 : i32
    %c0_i32_1 = arith.constant 0 : i32
    return %c0_i32, %c0_i32_0 : i32, i32
  }
  func.func @transform_5(%arg0: i32, %arg1: i32) -> (i32, i32) {
    %c0_i32 = arith.constant 0 : i32
    %c0_i32_0 = arith.constant 0 : i32
    %c0_i32_1 = arith.constant 0 : i32
    return %c0_i32, %c0_i32_0 : i32, i32
  }
  func.func @transform_6(%arg0: i32, %arg1: i32) -> (i32, i32) {
    %c0_i32 = arith.constant 0 : i32
    %c0_i32_0 = arith.constant 0 : i32
    %c0_i32_1 = arith.constant 0 : i32
    return %c0_i32, %c0_i32_0 : i32, i32
  }
  func.func @transform_7(%arg0: i32, %arg1: i32) -> (i32, i32) {
    %c0_i32 = arith.constant 0 : i32
    %c0_i32_0 = arith.constant 0 : i32
    %c0_i32_1 = arith.constant 0 : i32
    return %c0_i32, %c0_i32_0 : i32, i32
  }
  func.func @transform_8(%arg0: i32, %arg1: i32) -> (i32, i32) {
    %c0_i32 = arith.constant 0 : i32
    %c0_i32_0 = arith.constant 0 : i32
    %c0_i32_1 = arith.constant 0 : i32
    return %c0_i32, %c0_i32_0 : i32, i32
  }
  func.func @transform_9(%arg0: i32, %arg1: i32) -> (i32, i32) {
    %c0_i32 = arith.constant 0 : i32
    %c0_i32_0 = arith.constant 0 : i32
    return %arg0, %c0_i32 : i32, i32
  }
}

</mosaic_0001>

<llo_original>
// kernel: tpu_custom_call.1
$region0: #{tpu_custom_call.1}
  #allocation0 [shape = 'u32[]', space=smem, size = 0x4, offset = 0x4, fixed_abs, tag = 'smem constant byte address 0x4 - core index']
  #allocation1 [shape = 'u32[144,128]{1,0:T(1,128)}', space=vmem, size = 0x12000, scoped, tag = 'internal scratch']
  #allocation2 [shape = 'f32[64,32]{1,0:T(8,128)}', space=vmem, size = 0x8000, scoped, tag = 'scratch operand']
  #allocation3 [shape = 'f32[64,1]{1,0:T(8,128)}', space=vmem, size = 0x8000, scoped, tag = 'scratch operand']
  #allocation4 [shape = 'f32[64,1]{1,0:T(8,128)}', space=vmem, size = 0x8000, scoped, tag = 'scratch operand']
  #allocation5 [shape = 'f32[64,32]{1,0:T(8,128)}', space=vmem, size = 0x8000, scoped, tag = 'scratch operand']
  %s0 = inlined_call_operand.vmem [shape: f32[8,256], index: 0, kind: input, shape index: {}]
  %s1 = inlined_call_operand.vmem [shape: f32[256,16], index: 1, kind: input, shape index: {}]
  %s2 = inlined_call_operand.vmem [shape: s8[256,256], index: 2, kind: input, shape index: {}]
  %s3 = inlined_call_operand.vmem [shape: f32[32,8], index: 3, kind: input, shape index: {}]
  %s4 = inlined_call_operand.vmem [shape: f32[32,1], index: 4, kind: input, shape index: {}]
  %s5 = inlined_call_operand.vmem [shape: f32[16,32], index: 5, kind: input, shape index: {}]
  %s6 = inlined_call_operand.vmem [shape: f32[1,32], index: 6, kind: input, shape index: {}]
  %s7 = inlined_call_operand.vmem [shape: f32[1,32], index: 7, kind: input, shape index: {}]
  %s8 = inlined_call_operand.vmem [shape: f32[1,32], index: 8, kind: input, shape index: {}]
  %s9 = inlined_call_operand.vmem [shape: f32[256,32], index: 9, kind: output, shape index: {}]
  %s10 = sld [smem:[#allocation0]]
  $region115: #{tpu_custom_call.1} parent=0
    _
  %s12 = ssub.s32 1, %s10
  %s13 = scalar_select 0, %s12, %s10
  $region1: #{tpu_custom_call.1} parent=0
    #allocation6 [shape = 'u8[16384]{0}', space=vmem, size = 0x4000, scoped, tag = 'input window, operand 2']
    loop: start=0, step=1, limit=10
    $region2: #{tpu_custom_call.1} parent=1 // loop_pre_header
      _
    $region3: #{tpu_custom_call.1} parent=1 // loop_header
      %s15 = sphi 0, %s19
      %p16 = scmp.ge.s32.totalorder %s15, 10
      %s22 = sphi 0, %s34
      %s23 = sphi 0, %s30
      %s24 = sphi 0, %s22
      %s25 = sphi 0, %s23
      %s26 = sphi 0, %s24
      %s27 = sphi 0, %s25
      %s37 = sphi 0, %s39
      %s40 = sphi 0, %s37
      %s41 = sphi 0, %s40
      %s57 = sphi 0, %s41
      %s63 = sphi 0, %s65
      %s66 = sphi 0, %s63
      %s67 = sphi 0, %s66
      %s83 = sphi 0, %s67
      %s91 = sphi 0, %s93
      %s94 = sphi 0, %s91
      %s95 = sphi 0, %s94
      %s111 = sphi 0, %s95
      %s115 = sphi 0, %s115
      %s117 = sphi 0, %s115
      %s118 = sphi 0, %s117
      %s132 = sphi 0, %s118
      %s136 = sphi 0, %s136
      %s138 = sphi 0, %s136
      %s139 = sphi 0, %s138
      %s153 = sphi 0, %s139
      %s157 = sphi 0, %s157
      %s159 = sphi 0, %s157
      %s160 = sphi 0, %s159
      %s174 = sphi 0, %s160
      %s178 = sphi 0, %s178
      %s180 = sphi 0, %s178
      %s181 = sphi 0, %s180
      %s195 = sphi 0, %s181
      %s199 = sphi 0, %s199
      %s201 = sphi 0, %s199
      %s202 = sphi 0, %s201
      %s216 = sphi 0, %s202
      %s220 = sphi 0, %s220
      %s222 = sphi 0, %s220
      %s223 = sphi 0, %s222
      %s237 = sphi 0, %s223
      %s243 = sphi 0, %s245
      %s246 = sphi 0, %s243
      %s247 = sphi 0, %s246
      %s263 = sphi 0, %s247
    $region4: #{tpu_custom_call.1} parent=1 // loop_header_branch
      %18 = sbr.rel (%p16) target = $region8
    $region5: #{tpu_custom_call.1} parent=1 // loop_body
      %s20 = ssub.s32 %s15, 1
      %s21 = ssub.s32 %s15, 2
      %s28 = sadd.s32 1, %s23
      %p29 = scmp.ge.s32.totalorder %s28, 2
      %s30 = scalar_select %p29, 0, %s28
      %s31 = sadd.s32 1, %s22
      %s32 = scalar_select %p29, %s31, %s22
      %p33 = scmp.ge.s32.totalorder %s32, 4
      %s34 = scalar_select %p33, 0, %s32
      %s35 = ssub.s32 %s23, %s30
      %p36 = scmp.eq.s32.totalorder %s35, 0
      %s38 = sadd.s32 %s37, 1
      %s39 = scalar_select %p36, %s37, %s38
      %p42 = pneg %p36
      %p43 = scmp.eq.s32.totalorder %s15, 7
      %p44 = por %p42, %p43
      %p45 = scmp.ne.s32.totalorder %s37, %s40
      %p46 = scmp.eq.s32.totalorder %s15, 0
      %p47 = por %p45, %p46
      %p48 = scmp.ne.s32.totalorder %s37, %s40
      %p49 = scmp.eq.s32.totalorder %s20, 7
      %p50 = por %p48, %p49
      %p51 = scmp.ne.s32.totalorder %s40, %s41
      %p52 = scmp.eq.s32.totalorder %s20, 0
      %p53 = por %p51, %p52
      %p54 = scmp.ne.s32.totalorder %s40, %s41
      %p55 = scmp.eq.s32.totalorder %s21, 7
      %p56 = por %p54, %p55
      %p58 = scmp.ne.s32.totalorder %s41, %s57
      %p59 = scmp.eq.s32.totalorder %s21, 0
      %p60 = por %p58, %p59
      %s61 = ssub.s32 %s22, %s34
      %p62 = scmp.eq.s32.totalorder %s61, 0
      %s64 = sadd.s32 %s63, 1
      %s65 = scalar_select %p62, %s63, %s64
      %p68 = pneg %p62
      %p69 = scmp.eq.s32.totalorder %s15, 7
      %p70 = por %p68, %p69
      %p71 = scmp.ne.s32.totalorder %s63, %s66
      %p72 = scmp.eq.s32.totalorder %s15, 0
      %p73 = por %p71, %p72
      %p74 = scmp.ne.s32.totalorder %s63, %s66
      %p75 = scmp.eq.s32.totalorder %s20, 7
      %p76 = por %p74, %p75
      %p77 = scmp.ne.s32.totalorder %s66, %s67
      %p78 = scmp.eq.s32.totalorder %s20, 0
      %p79 = por %p77, %p78
      %p80 = scmp.ne.s32.totalorder %s66, %s67
      %p81 = scmp.eq.s32.totalorder %s21, 7
      %p82 = por %p80, %p81
      %p84 = scmp.ne.s32.totalorder %s67, %s83
      %p85 = scmp.eq.s32.totalorder %s21, 0
      %p86 = por %p84, %p85
      %s87 = ssub.s32 %s22, %s34
      %s88 = ssub.s32 %s23, %s30
      %s89 = sor.u32 %s87, %s88
      %p90 = scmp.eq.s32.totalorder %s89, 0
      %s92 = sadd.s32 %s91, 1
      %s93 = scalar_select %p90, %s91, %s92
      %p96 = pneg %p90
      %p97 = scmp.eq.s32.totalorder %s15, 7
      %p98 = por %p96, %p97
      %p99 = scmp.ne.s32.totalorder %s91, %s94
      %p100 = scmp.eq.s32.totalorder %s15, 0
      %p101 = por %p99, %p100
      %p102 = scmp.ne.s32.totalorder %s91, %s94
      %p103 = scmp.eq.s32.totalorder %s20, 7
      %p104 = por %p102, %p103
      %p105 = scmp.ne.s32.totalorder %s94, %s95
      %p106 = scmp.eq.s32.totalorder %s20, 0
      %p107 = por %p105, %p106
      %p108 = scmp.ne.s32.totalorder %s94, %s95
      %p109 = scmp.eq.s32.totalorder %s21, 7
      %p110 = por %p108, %p109
      %p112 = scmp.ne.s32.totalorder %s95, %s111
      %p113 = scmp.eq.s32.totalorder %s21, 0
      %p114 = por %p112, %p113
      %s116 = sadd.s32 %s115, 1
      %p119 = scmp.eq.s32.totalorder %s15, 7
      %p120 = scmp.ne.s32.totalorder %s115, %s117
      %p121 = scmp.eq.s32.totalorder %s15, 0
      %p122 = por %p120, %p121
      %p123 = scmp.ne.s32.totalorder %s115, %s117
      %p124 = scmp.eq.s32.totalorder %s20, 7
      %p125 = por %p123, %p124
      %p126 = scmp.ne.s32.totalorder %s117, %s118
      %p127 = scmp.eq.s32.totalorder %s20, 0
      %p128 = por %p126, %p127
      %p129 = scmp.ne.s32.totalorder %s117, %s118
      %p130 = scmp.eq.s32.totalorder %s21, 7
      %p131 = por %p129, %p130
      %p133 = scmp.ne.s32.totalorder %s118, %s132
      %p134 = scmp.eq.s32.totalorder %s21, 0
      %p135 = por %p133, %p134
      %s137 = sadd.s32 %s136, 1
      %p140 = scmp.eq.s32.totalorder %s15, 7
      %p141 = scmp.ne.s32.totalorder %s136, %s138
      %p142 = scmp.eq.s32.totalorder %s15, 0
      %p143 = por %p141, %p142
      %p144 = scmp.ne.s32.totalorder %s136, %s138
      %p145 = scmp.eq.s32.totalorder %s20, 7
      %p146 = por %p144, %p145
      %p147 = scmp.ne.s32.totalorder %s138, %s139
      %p148 = scmp.eq.s32.totalorder %s20, 0
      %p149 = por %p147, %p148
      %p150 = scmp.ne.s32.totalorder %s138, %s139
      %p151 = scmp.eq.s32.totalorder %s21, 7
      %p152 = por %p150, %p151
      %p154 = scmp.ne.s32.totalorder %s139, %s153
      %p155 = scmp.eq.s32.totalorder %s21, 0
      %p156 = por %p154, %p155
      %s158 = sadd.s32 %s157, 1
      %p161 = scmp.eq.s32.totalorder %s15, 7
      %p162 = scmp.ne.s32.totalorder %s157, %s159
      %p163 = scmp.eq.s32.totalorder %s15, 0
      %p164 = por %p162, %p163
      %p165 = scmp.ne.s32.totalorder %s157, %s159
      %p166 = scmp.eq.s32.totalorder %s20, 7
      %p167 = por %p165, %p166
      %p168 = scmp.ne.s32.totalorder %s159, %s160
      %p169 = scmp.eq.s32.totalorder %s20, 0
      %p170 = por %p168, %p169
      %p171 = scmp.ne.s32.totalorder %s159, %s160
      %p172 = scmp.eq.s32.totalorder %s21, 7
      %p173 = por %p171, %p172
      %p175 = scmp.ne.s32.totalorder %s160, %s174
      %p176 = scmp.eq.s32.totalorder %s21, 0
      %p177 = por %p175, %p176
      %s179 = sadd.s32 %s178, 1
      %p182 = scmp.eq.s32.totalorder %s15, 7
      %p183 = scmp.ne.s32.totalorder %s178, %s180
      %p184 = scmp.eq.s32.totalorder %s15, 0
      %p185 = por %p183, %p184
      %p186 = scmp.ne.s32.totalorder %s178, %s180
      %p187 = scmp.eq.s32.totalorder %s20, 7
      %p188 = por %p186, %p187
      %p189 = scmp.ne.s32.totalorder %s180, %s181
      %p190 = scmp.eq.s32.totalorder %s20, 0
      %p191 = por %p189, %p190
      %p192 = scmp.ne.s32.totalorder %s180, %s181
      %p193 = scmp.eq.s32.totalorder %s21, 7
      %p194 = por %p192, %p193
      %p196 = scmp.ne.s32.totalorder %s181, %s195
      %p197 = scmp.eq.s32.totalorder %s21, 0
      %p198 = por %p196, %p197
      %s200 = sadd.s32 %s199, 1
      %p203 = scmp.eq.s32.totalorder %s15, 7
      %p204 = scmp.ne.s32.totalorder %s199, %s201
      %p205 = scmp.eq.s32.totalorder %s15, 0
      %p206 = por %p204, %p205
      %p207 = scmp.ne.s32.totalorder %s199, %s201
      %p208 = scmp.eq.s32.totalorder %s20, 7
      %p209 = por %p207, %p208
      %p210 = scmp.ne.s32.totalorder %s201, %s202
      %p211 = scmp.eq.s32.totalorder %s20, 0
      %p212 = por %p210, %p211
      %p213 = scmp.ne.s32.totalorder %s201, %s202
      %p214 = scmp.eq.s32.totalorder %s21, 7
      %p215 = por %p213, %p214
      %p217 = scmp.ne.s32.totalorder %s202, %s216
      %p218 = scmp.eq.s32.totalorder %s21, 0
      %p219 = por %p217, %p218
      %s221 = sadd.s32 %s220, 1
      %p224 = scmp.eq.s32.totalorder %s15, 7
      %p225 = scmp.ne.s32.totalorder %s220, %s222
      %p226 = scmp.eq.s32.totalorder %s15, 0
      %p227 = por %p225, %p226
      %p228 = scmp.ne.s32.totalorder %s220, %s222
      %p229 = scmp.eq.s32.totalorder %s20, 7
      %p230 = por %p228, %p229
      %p231 = scmp.ne.s32.totalorder %s222, %s223
      %p232 = scmp.eq.s32.totalorder %s20, 0
      %p233 = por %p231, %p232
      %p234 = scmp.ne.s32.totalorder %s222, %s223
      %p235 = scmp.eq.s32.totalorder %s21, 7
      %p236 = por %p234, %p235
      %p238 = scmp.ne.s32.totalorder %s223, %s237
      %p239 = scmp.eq.s32.totalorder %s21, 0
      %p240 = por %p238, %p239
      %s241 = ssub.s32 %s22, %s34
      %p242 = scmp.eq.s32.totalorder %s241, 0
      %s244 = sadd.s32 %s243, 1
      %s245 = scalar_select %p242, %s243, %s244
      %p248 = pneg %p242
      %p249 = scmp.eq.s32.totalorder %s15, 7
      %p250 = por %p248, %p249
      %p251 = scmp.ne.s32.totalorder %s243, %s246
      %p252 = scmp.eq.s32.totalorder %s15, 0
      %p253 = por %p251, %p252
      %p254 = scmp.ne.s32.totalorder %s243, %s246
      %p255 = scmp.eq.s32.totalorder %s20, 7
      %p256 = por %p254, %p255
      %p257 = scmp.ne.s32.totalorder %s246, %s247
      %p258 = scmp.eq.s32.totalorder %s20, 0
      %p259 = por %p257, %p258
      %p260 = scmp.ne.s32.totalorder %s246, %s247
      %p261 = scmp.eq.s32.totalorder %s21, 7
      %p262 = por %p260, %p261
      %p264 = scmp.ne.s32.totalorder %s247, %s263
      %p265 = scmp.eq.s32.totalorder %s21, 0
      %p266 = por %p264, %p265
      %p267 = scmp.le.s32.totalorder 1, %s15
      %p268 = scmp.lt.s32.totalorder %s15, 9
      %p269 = pnand %p267, %p268
      %p270 = pneg %p269
      // Predicated region
      $region9: #{tpu_custom_call.1} parent=5 // pred_check
        _
      $region10: #{tpu_custom_call.1} parent=5 // pred_check_branch
        %272 = sbr.rel (%p269) target = $region12
      $region11: #{tpu_custom_call.1} parent=5 // pred_region
        %s273 = ssub.s32 %s15, 1
        // Predicated region
        $region13: #{tpu_custom_call.1} parent=11 // pred_check
          %p274 = pneg %p128
        $region14: #{tpu_custom_call.1} parent=11 // pred_check_branch
          %276 = sbr.rel (%p274) target = $region16
        $region15: #{tpu_custom_call.1} parent=11 // pred_region
          _
        $region16: #{tpu_custom_call.1} parent=11 // pred_fallthru
          _
        // Predicated region
        $region17: #{tpu_custom_call.1} parent=11 // pred_check
          %p277 = pneg %p149
        $region18: #{tpu_custom_call.1} parent=11 // pred_check_branch
          %279 = sbr.rel (%p277) target = $region20
        $region19: #{tpu_custom_call.1} parent=11 // pred_region
          _
        $region20: #{tpu_custom_call.1} parent=11 // pred_fallthru
          _
        // Predicated region
        $region21: #{tpu_custom_call.1} parent=11 // pred_check
          %p280 = pneg %p170
        $region22: #{tpu_custom_call.1} parent=11 // pred_check_branch
          %282 = sbr.rel (%p280) target = $region24
        $region23: #{tpu_custom_call.1} parent=11 // pred_region
          _
        $region24: #{tpu_custom_call.1} parent=11 // pred_fallthru
          _
        // Predicated region
        $region25: #{tpu_custom_call.1} parent=11 // pred_check
          %p283 = pneg %p191
        $region26: #{tpu_custom_call.1} parent=11 // pred_check_branch
          %285 = sbr.rel (%p283) target = $region28
        $region27: #{tpu_custom_call.1} parent=11 // pred_region
          _
        $region28: #{tpu_custom_call.1} parent=11 // pred_fallthru
          _
        // Predicated region
        $region29: #{tpu_custom_call.1} parent=11 // pred_check
          %p286 = pneg %p212
        $region30: #{tpu_custom_call.1} parent=11 // pred_check_branch
          %288 = sbr.rel (%p286) target = $region32
        $region31: #{tpu_custom_call.1} parent=11 // pred_region
          _
        $region32: #{tpu_custom_call.1} parent=11 // pred_fallthru
          _
        // Predicated region
        $region33: #{tpu_custom_call.1} parent=11 // pred_check
          %p289 = pneg %p233
        $region34: #{tpu_custom_call.1} parent=11 // pred_check_branch
          %291 = sbr.rel (%p289) target = $region36
        $region35: #{tpu_custom_call.1} parent=11 // pred_region
          _
        $region36: #{tpu_custom_call.1} parent=11 // pred_fallthru
          _
      $region12: #{tpu_custom_call.1} parent=5 // pred_fallthru
        _
      %p292 = scmp.lt.s32.totalorder %s15, 8
      // Predicated region
      $region37: #{tpu_custom_call.1} parent=5 // pred_check
        %p293 = pneg %p292
      $region38: #{tpu_custom_call.1} parent=5 // pred_check_branch
        %295 = sbr.rel (%p293) target = $region40
      $region39: #{tpu_custom_call.1} parent=5 // pred_region
        // Predicated region
        $region41: #{tpu_custom_call.1} parent=39 // pred_check
          %p296 = pneg %p47
        $region42: #{tpu_custom_call.1} parent=39 // pred_check_branch
          %298 = sbr.rel (%p296) target = $region44
        $region43: #{tpu_custom_call.1} parent=39 // pred_region
          %p299 = scmp.lt.s32.totalorder %s23, 1
          %s300 = scalar_select %p299, %s23, 1
          %s301 = smul.addr %s300, 8
          %s302 = scalar_lea.vmem %s0, %s301
        $region44: #{tpu_custom_call.1} parent=39 // pred_fallthru
          _
        // Predicated region
        $region45: #{tpu_custom_call.1} parent=39 // pred_check
          %p303 = pneg %p73
        $region46: #{tpu_custom_call.1} parent=39 // pred_check_branch
          %305 = sbr.rel (%p303) target = $region48
        $region47: #{tpu_custom_call.1} parent=39 // pred_region
          %s306 = smul.u32 8, %s22
          %p307 = scmp.lt.s32.totalorder %s306, 31
          %s308 = scalar_select %p307, %s306, 31
          %s309 = smul.addr %s308, 8
          %s310 = scalar_lea.vmem %s1, %s309
          %s311 = smul.u32 8, %s22
        $region48: #{tpu_custom_call.1} parent=39 // pred_fallthru
          _
        // Predicated region
        $region49: #{tpu_custom_call.1} parent=39 // pred_check
          %p312 = pneg %p101
        $region50: #{tpu_custom_call.1} parent=39 // pred_check_branch
          %314 = sbr.rel (%p312) target = $region52
        $region51: #{tpu_custom_call.1} parent=39 // pred_region
          %s315 = sand.u32 %s91, 1
          %s316 = sand.u32 %s91, 1
          %s317 = smul.addr %s316, 16
          %s318 = scalar_lea.vmem [#allocation6], %s317
          %s319 = smul.u32 2, %s22
          %s320 = smul.addr %s319, 2
          %s321 = sadd.s32 %s23, %s320
          %s322 = smul.addr %s321, 8
          %s323 = scalar_lea.vmem %s2, %s322
          // Predicated region
          $region53: #{tpu_custom_call.1} parent=51 // pred_check
            _
          $region54: #{tpu_custom_call.1} parent=51 // pred_check_branch
            %325 = sbr.rel (0) target = $region56
          $region55: #{tpu_custom_call.1} parent=51 // pred_region
            // Predicated region
            $region57: #{tpu_custom_call.1} parent=55 // pred_check
              _
            $region58: #{tpu_custom_call.1} parent=55 // pred_check_branch
              %327 = sbr.rel (0) target = $region60
            $region59: #{tpu_custom_call.1} parent=55 // pred_region
              // Predicated region
              $region72: #{tpu_custom_call.1} parent=59 // pred_check
                _
              $region73: #{tpu_custom_call.1} parent=59 // pred_check_branch
                %344 = sbr.rel (0) target = $region75
              $region74: #{tpu_custom_call.1} parent=59 // pred_region
                loop: start=0, step=1, limit=1
                $region76: #{tpu_custom_call.1} parent=74 // loop_pre_header
                  _
                $region77: #{tpu_custom_call.1} parent=74 // loop_header
                  %s346 = sphi 0, %s350
                  %p347 = scmp.ge.s32.totalorder %s346, 1
                  %s351 = sphi %s323, %s323
                  %s352 = sphi %s318, %s318
                $region78: #{tpu_custom_call.1} parent=74 // loop_header_branch
                  %349 = sbr.rel (%p347) target = $region82
                $region79: #{tpu_custom_call.1} parent=74 // loop_body
                  %v353 = vld [vmem:[%s351] sm:$0xff]
                  %354 = vst [vmem:[%s352] sm:$0xff] %v353
                  %v355 = vld [vmem:[%s351 + $0x10] sm:$0xff]
                  %356 = vst [vmem:[%s352 + $0x8] sm:$0xff] %v355
                $region80: #{tpu_custom_call.1} parent=74 // loop_footer
                  %s350 = sadd.s32 1, %s346
                $region81: #{tpu_custom_call.1} parent=74 // loop_footer_branch
                  %345 = sbr.rel target = $region77
                $region82: #{tpu_custom_call.1} parent=74 // loop_exit
                  _
              $region75: #{tpu_custom_call.1} parent=59 // pred_fallthru
                _
              // Predicated region
              $region83: #{tpu_custom_call.1} parent=59 // pred_check
                _
              $region84: #{tpu_custom_call.1} parent=59 // pred_check_branch
                %358 = sbr.rel target = $region86
              $region85: #{tpu_custom_call.1} parent=59 // pred_region
                _
              $region86: #{tpu_custom_call.1} parent=59 // pred_fallthru
                _
            $region60: #{tpu_custom_call.1} parent=55 // pred_fallthru
              _
            // Predicated region
            $region61: #{tpu_custom_call.1} parent=55 // pred_check
              _
            $region62: #{tpu_custom_call.1} parent=55 // pred_check_branch
              %329 = sbr.rel target = $region64
            $region63: #{tpu_custom_call.1} parent=55 // pred_region
              loop: start=0, step=1, limit=1
              $region65: #{tpu_custom_call.1} parent=63 // loop_pre_header
                _
              $region66: #{tpu_custom_call.1} parent=63 // loop_header
                %s332 = sphi 0, %s336
                %p333 = scmp.ge.s32.totalorder %s332, 1
                %s337 = sphi %s323, %s323
                %s338 = sphi %s318, %s318
              $region67: #{tpu_custom_call.1} parent=63 // loop_header_branch
                %335 = sbr.rel (%p333) target = $region71
              $region68: #{tpu_custom_call.1} parent=63 // loop_body
                %v339 = vld [vmem:[%s337] sm:$0xff]
                %340 = vst [vmem:[%s338] sm:$0xff] %v339
                %v341 = vld [vmem:[%s337 + $0x10] sm:$0xff]
                %342 = vst [vmem:[%s338 + $0x8] sm:$0xff] %v341
              $region69: #{tpu_custom_call.1} parent=63 // loop_footer
                %s336 = sadd.s32 1, %s332
              $region70: #{tpu_custom_call.1} parent=63 // loop_footer_branch
                %331 = sbr.rel target = $region66
              $region71: #{tpu_custom_call.1} parent=63 // loop_exit
                _
            $region64: #{tpu_custom_call.1} parent=55 // pred_fallthru
              _
          $region56: #{tpu_custom_call.1} parent=51 // pred_fallthru
            _
          %359 = vnop
        $region52: #{tpu_custom_call.1} parent=39 // pred_fallthru
          _
      $region40: #{tpu_custom_call.1} parent=5 // pred_fallthru
        _
      %p360 = scmp.le.s32.totalorder 1, %s15
      %p361 = scmp.lt.s32.totalorder %s15, 9
      %p362 = pnand %p360, %p361
      %p363 = pneg %p362
      // Predicated region
      $region87: #{tpu_custom_call.1} parent=5 // pred_check
        _
      $region88: #{tpu_custom_call.1} parent=5 // pred_check_branch
        %365 = sbr.rel (%p362) target = $region90
      $region89: #{tpu_custom_call.1} parent=5 // pred_region
        %s366 = ssub.s32 %s15, 1
        %s367 = sand.u32 %s94, 1
        %s368 = sand.u32 %s94, 1
        %s369 = smul.addr %s368, 16
        %s370 = scalar_lea.vmem [#allocation6], %s369
        // Predicated region
        $region91: #{tpu_custom_call.1} parent=89 // pred_check
          %p371 = pneg %p107
        $region92: #{tpu_custom_call.1} parent=89 // pred_check_branch
          %373 = sbr.rel (%p371) target = $region94
        $region93: #{tpu_custom_call.1} parent=89 // pred_region
          _
        $region94: #{tpu_custom_call.1} parent=89 // pred_fallthru
          _
        %p374 = scmp.lt.s32.totalorder %s25, 1
        %s375 = scalar_select %p374, %s25, 1
        %s376 = smul.addr %s375, 8
        %s377 = scalar_lea.vmem %s0, %s376
        %p378 = pneg %p53
        %p379 = pneg %p50
        %s380 = smul.u32 8, %s24
        %p381 = scmp.lt.s32.totalorder %s380, 31
        %s382 = scalar_select %p381, %s380, 31
        %s383 = smul.addr %s382, 8
        %s384 = scalar_lea.vmem %s1, %s383
        %p385 = pneg %p79
        %p386 = pneg %p76
        %s387 = sand.u32 %s94, 1
        %s388 = sand.u32 %s94, 1
        %s389 = smul.addr %s388, 16
        %s390 = scalar_lea.vmem [#allocation6], %s389
        %p391 = pneg %p107
        %p392 = pneg %p104
        %p393 = pneg %p128
        %p394 = pneg %p125
        %p395 = pneg %p149
        %p396 = pneg %p146
        %p397 = pneg %p170
        %p398 = pneg %p167
        %p399 = pneg %p191
        %p400 = pneg %p188
        %p401 = pneg %p212
        %p402 = pneg %p209
        %p403 = pneg %p233
        %p404 = pneg %p230
        %p405 = pneg %p259
        %p406 = pneg %p256
        %s407 = smul.u32 8, %s24
        %p408 = scmp.lt.s32.totalorder %s407, 31
        %s409 = scalar_select %p408, %s407, 31
        %s410 = smul.addr %s409, 8
        %s411 = scalar_lea.vmem %s9, %s410
        %p412 = scmp.lt.s32.totalorder %s25, 1
        %s413 = scalar_select %p412, %s25, 1
        %s414 = smul.addr %s413, 8
        %s415 = scalar_lea.vmem %s0, %s414
        %s416 = smul.u32 8, %s24
        %p417 = scmp.lt.s32.totalorder %s416, 31
        %s418 = scalar_select %p417, %s416, 31
        %s419 = smul.addr %s418, 8
        %s420 = scalar_lea.vmem %s1, %s419
        %s421 = smul.u32 8, %s24
        %s422 = smul.u32 2, %s24
        %s423 = smul.u32 8, %s24
        %p424 = scmp.lt.s32.totalorder %s423, 31
        %s425 = scalar_select %p424, %s423, 31
        %s426 = smul.addr %s425, 8
        %s427 = scalar_lea.vmem %s9, %s426
        %s428 = smul.u32 8, %s24
        %p430 = scmp.eq.s32.totalorder %s25, 0
        // Predicated region
        $region95: #{tpu_custom_call.1} parent=89 // pred_check
          %p431 = pneg %p430
        $region96: #{tpu_custom_call.1} parent=89 // pred_check_branch
          %433 = sbr.rel (%p431) target = $region98
        $region97: #{tpu_custom_call.1} parent=89 // pred_region
          %v434 = vld [vmem:[%s420] sm:$0xff]
          %v435 = vld [vmem:[%s420 + $0x8] sm:$0xff]
          %v436 = vld [vmem:[%s420 + $0x10] sm:$0xff]
          %v437 = vld [vmem:[%s420 + $0x18] sm:$0xff]
          %v438 = vld [vmem:[%s420 + $0x20] sm:$0xff]
          %v439 = vld [vmem:[%s420 + $0x28] sm:$0xff]
          %v440 = vld [vmem:[%s420 + $0x30] sm:$0xff]
          %v441 = vld [vmem:[%s420 + $0x38] sm:$0xff]
          %v442 = vpack.c.bf16 %v435, %v434
          %v443 = vpack.c.bf16 %v437, %v436
          %v444 = vpack.c.bf16 %v439, %v438
          %v445 = vpack.c.bf16 %v441, %v440
          %v446 = vld [vmem:[%s5] sm:$0xff]
          %v447 = vld [vmem:[%s5 + $0x8] sm:$0xff]
          %v448 = vpack.c.bf16 %v447, %v446
          %v449 = vld [vmem:[%s6] sm:$0x1]
          %v451 = vlaneseq
          %v452 = vshrl.u32 %v451, 7
          %v453 = vsub.s32 0, %v452
          %v454 = vrot.slane %v449, %v453
          %vm456 = vcmask 130048
          %v458 = vsel %vm456, %v442, 0
          %v461 = vsel %vm456, %v443, 0
          %v464 = vsel %vm456, %v444, 0
          %v467 = vsel %vm456, %v445, 0
          %469 = vmatprep.subr.bf16.mxu0 0
          %470 = vmatpush1.bf16.msra.mxu0 %v448
          %471 = vmatprep.subr.bf16.mxu0 0
          %472 = vmatpush1.bf16.msra.mxu0 0
          %473 = vmatprep.subr.bf16.mxu0 0
          %474 = vmatpush1.bf16.msra.mxu0 0
          %475 = vmatprep.subr.bf16.mxu0 0
          %476 = vmatpush1.bf16.msra.mxu0 0
          %477 = vmatprep.subr.bf16.mxu0 0
          %478 = vmatpush1.bf16.msra.mxu0 0
          %479 = vmatprep.subr.bf16.mxu0 0
          %480 = vmatpush1.bf16.msra.mxu0 0
          %481 = vmatprep.subr.bf16.mxu0 0
          %482 = vmatpush1.bf16.msra.mxu0 0
          %483 = vmatprep.subr.bf16.mxu0 0
          %484 = vmatpush1.bf16.msra.mxu0 0
          %485 = vmatprep.subr.bf16.mxu0 0
          %486 = vmatpush1.bf16.msra.mxu0 0
          %487 = vmatprep.subr.bf16.mxu0 0
          %488 = vmatpush1.bf16.msra.mxu0 0
          %489 = vmatprep.subr.bf16.mxu0 0
          %490 = vmatpush1.bf16.msra.mxu0 0
          %491 = vmatprep.subr.bf16.mxu0 0
          %492 = vmatpush1.bf16.msra.mxu0 0
          %493 = vmatprep.subr.bf16.mxu0 0
          %494 = vmatpush1.bf16.msra.mxu0 0
          %495 = vmatprep.subr.bf16.mxu0 0
          %496 = vmatpush1.bf16.msra.mxu0 0
          %497 = vmatprep.subr.bf16.mxu0 0
          %498 = vmatpush1.bf16.msra.mxu0 0
          %499 = vmatprep.subr.bf16.mxu0 0
          %500 = vmatpush1.bf16.msra.mxu0 0
          %501 = vmatprep.mubr.bf16.mxu0 0
          %502 = vmatmul.mubr.bf16.gmra.mrb[0].mxu0 %v458
          %v503 = vpop.f32.mrb[0].mxu0
          %v504 = vadd.f32 %v454, %v503
          %v505 = vpop.f32.mrb[0].mxu0
          %v506 = vpop.f32.mrb[0].mxu0
          %v507 = vadd.f32 %v454, %v506
          %v508 = vpop.f32.mrb[0].mxu0
          %509 = vmatprep.mubr.bf16.mxu0 0
          %510 = vmatmul.mubr.bf16.gmra.mrb[0].mxu0 %v461
          %v511 = vpop.f32.mrb[0].mxu0
          %v512 = vadd.f32 %v454, %v511
          %v513 = vpop.f32.mrb[0].mxu0
          %v514 = vpop.f32.mrb[0].mxu0
          %v515 = vadd.f32 %v454, %v514
          %v516 = vpop.f32.mrb[0].mxu0
          %517 = vmatprep.mubr.bf16.mxu0 0
          %518 = vmatmul.mubr.bf16.gmra.mrb[0].mxu0 %v464
          %v519 = vpop.f32.mrb[0].mxu0
          %v520 = vadd.f32 %v454, %v519
          %v521 = vpop.f32.mrb[0].mxu0
          %v522 = vpop.f32.mrb[0].mxu0
          %v523 = vadd.f32 %v454, %v522
          %v524 = vpop.f32.mrb[0].mxu0
          %525 = vmatprep.mubr.bf16.mxu0 0
          %526 = vmatmul.mubr.bf16.gmra.mrb[0].mxu0 %v467
          %v527 = vpop.f32.mrb[0].mxu0
          %v528 = vadd.f32 %v454, %v527
          %v529 = vpop.f32.mrb[0].mxu0
          %v530 = vpop.f32.mrb[0].mxu0
          %v531 = vadd.f32 %v454, %v530
          %v532 = vpop.f32.mrb[0].mxu0
          %533 = vdwg.mxu0
          %vm534 = vcmask 261120
          %535 = vst.msk [vmem:[#allocation2] sm:$0xff] %vm534, %v504
          %536 = vst.msk [vmem:[#allocation2 + $0x8] sm:$0xff] %vm534, %v507
          %537 = vst.msk [vmem:[#allocation2 + $0x10] sm:$0xff] %vm534, %v512
          %538 = vst.msk [vmem:[#allocation2 + $0x18] sm:$0xff] %vm534, %v515
          %539 = vst.msk [vmem:[#allocation2 + $0x20] sm:$0xff] %vm534, %v520
          %540 = vst.msk [vmem:[#allocation2 + $0x28] sm:$0xff] %vm534, %v523
          %541 = vst.msk [vmem:[#allocation2 + $0x30] sm:$0xff] %vm534, %v528
          %542 = vst.msk [vmem:[#allocation2 + $0x38] sm:$0xff] %vm534, %v531
          %vm543 = vcmask 7168
          %544 = vst.msk [vmem:[#allocation3] sm:$0xff] %vm543, -1e+30
          %545 = vst.msk [vmem:[#allocation3 + $0x8] sm:$0xff] %vm543, -1e+30
          %546 = vst.msk [vmem:[#allocation3 + $0x10] sm:$0xff] %vm543, -1e+30
          %547 = vst.msk [vmem:[#allocation3 + $0x18] sm:$0xff] %vm543, -1e+30
          %548 = vst.msk [vmem:[#allocation3 + $0x20] sm:$0xff] %vm543, -1e+30
          %549 = vst.msk [vmem:[#allocation3 + $0x28] sm:$0xff] %vm543, -1e+30
          %550 = vst.msk [vmem:[#allocation3 + $0x30] sm:$0xff] %vm543, -1e+30
          %551 = vst.msk [vmem:[#allocation3 + $0x38] sm:$0xff] %vm543, -1e+30
          %552 = vst.msk [vmem:[#allocation4] sm:$0xff] %vm543, 0.0
          %553 = vst.msk [vmem:[#allocation4 + $0x8] sm:$0xff] %vm543, 0.0
          %554 = vst.msk [vmem:[#allocation4 + $0x10] sm:$0xff] %vm543, 0.0
          %555 = vst.msk [vmem:[#allocation4 + $0x18] sm:$0xff] %vm543, 0.0
          %556 = vst.msk [vmem:[#allocation4 + $0x20] sm:$0xff] %vm543, 0.0
          %557 = vst.msk [vmem:[#allocation4 + $0x28] sm:$0xff] %vm543, 0.0
          %558 = vst.msk [vmem:[#allocation4 + $0x30] sm:$0xff] %vm543, 0.0
          %559 = vst.msk [vmem:[#allocation4 + $0x38] sm:$0xff] %vm543, 0.0
          %560 = vst.msk [vmem:[#allocation5] sm:$0xff] %vm534, 0.0
          %561 = vst.msk [vmem:[#allocation5 + $0x8] sm:$0xff] %vm534, 0.0
          %562 = vst.msk [vmem:[#allocation5 + $0x10] sm:$0xff] %vm534, 0.0
          %563 = vst.msk [vmem:[#allocation5 + $0x18] sm:$0xff] %vm534, 0.0
          %564 = vst.msk [vmem:[#allocation5 + $0x20] sm:$0xff] %vm534, 0.0
          %565 = vst.msk [vmem:[#allocation5 + $0x28] sm:$0xff] %vm534, 0.0
          %566 = vst.msk [vmem:[#allocation5 + $0x30] sm:$0xff] %vm534, 0.0
          %567 = vst.msk [vmem:[#allocation5 + $0x38] sm:$0xff] %vm534, 0.0
        $region98: #{tpu_custom_call.1} parent=89 // pred_fallthru
          _
        %v568 = vld [vmem:[%s3] sm:$0xff]
        %v569 = vld [vmem:[%s3 + $0x8] sm:$0xff]
        %v570 = vld [vmem:[%s3 + $0x10] sm:$0xff]
        %v571 = vld [vmem:[%s3 + $0x18] sm:$0xff]
        %v572 = vpack.c.bf16 %v569, %v568
        %v573 = vpack.c.bf16 %v571, %v570
        %v574 = vld [vmem:[%s415] sm:$0xff]
        %v575 = vpack.c.bf16 %v574, %v574
        %v576 = vld [vmem:[%s4] sm:$0xff]
        %v577 = vld [vmem:[%s4 + $0x8] sm:$0xff]
        %v578 = vld [vmem:[%s4 + $0x10] sm:$0xff]
        %v579 = vld [vmem:[%s4 + $0x18] sm:$0xff]
        %581 = vset.pattern.permute.xlu0 0
        %582 = vperm.xlu0 %581, %v576
        %v583 = vpop.permute.xlu0 %582
        %586 = vset.pattern.permute.xlu0 0
        %587 = vperm.xlu0 %586, %v577
        %v588 = vpop.permute.xlu0 %587
        %591 = vset.pattern.permute.xlu0 0
        %592 = vperm.xlu0 %591, %v578
        %v593 = vpop.permute.xlu0 %592
        %596 = vset.pattern.permute.xlu0 0
        %597 = vperm.xlu0 %596, %v579
        %v598 = vpop.permute.xlu0 %597
        %vm600 = vcmask 64512
        %v602 = vsel %vm600, %v572, 0
        %v605 = vsel %vm600, %v573, 0
        %vm607 = vcmask 1043456
        %v609 = vsel %vm607, %v575, 0
        %611 = vmatprep.subr.bf16.mxu0 0
        %612 = vmatpush1.bf16.msra.mxu0 %v609
        %613 = vmatprep.subr.bf16.mxu0 0
        %614 = vmatpush1.bf16.msra.mxu0 0
        %615 = vmatprep.subr.bf16.mxu0 0
        %616 = vmatpush1.bf16.msra.mxu0 0
        %617 = vmatprep.subr.bf16.mxu0 0
        %618 = vmatpush1.bf16.msra.mxu0 0
        %619 = vmatprep.subr.bf16.mxu0 0
        %620 = vmatpush1.bf16.msra.mxu0 0
        %621 = vmatprep.subr.bf16.mxu0 0
        %622 = vmatpush1.bf16.msra.mxu0 0
        %623 = vmatprep.subr.bf16.mxu0 0
        %624 = vmatpush1.bf16.msra.mxu0 0
        %625 = vmatprep.subr.bf16.mxu0 0
        %626 = vmatpush1.bf16.msra.mxu0 0
        %627 = vmatprep.subr.bf16.mxu0 0
        %628 = vmatpush1.bf16.msra.mxu0 0
        %629 = vmatprep.subr.bf16.mxu0 0
        %630 = vmatpush1.bf16.msra.mxu0 0
        %631 = vmatprep.subr.bf16.mxu0 0
        %632 = vmatpush1.bf16.msra.mxu0 0
        %633 = vmatprep.subr.bf16.mxu0 0
        %634 = vmatpush1.bf16.msra.mxu0 0
        %635 = vmatprep.subr.bf16.mxu0 0
        %636 = vmatpush1.bf16.msra.mxu0 0
        %637 = vmatprep.subr.bf16.mxu0 0
        %638 = vmatpush1.bf16.msra.mxu0 0
        %639 = vmatprep.subr.bf16.mxu0 0
        %640 = vmatpush1.bf16.msra.mxu0 0
        %641 = vmatprep.subr.bf16.mxu0 0
        %642 = vmatpush1.bf16.msra.mxu0 0
        %643 = vmatprep.mubr.bf16.mxu0 0
        %644 = vmatmul.mubr.bf16.gmra.mrb[0].mxu0 %v602
        %v645 = vpop.f32.mrb[0].mxu0
        %v646 = vadd.f32 %v583, %v645
        %v647 = vpop.f32.mrb[0].mxu0
        %v648 = vpop.f32.mrb[0].mxu0
        %v649 = vadd.f32 %v588, %v648
        %v650 = vpop.f32.mrb[0].mxu0
        %651 = vmatprep.mubr.bf16.mxu0 0
        %652 = vmatmul.mubr.bf16.gmra.mrb[0].mxu0 %v605
        %v653 = vpop.f32.mrb[0].mxu0
        %v654 = vadd.f32 %v593, %v653
        %v655 = vpop.f32.mrb[0].mxu0
        %v656 = vpop.f32.mrb[0].mxu0
        %v657 = vadd.f32 %v598, %v656
        %v658 = vpop.f32.mrb[0].mxu0
        %659 = vdwg.mxu0
        %v660 = vld [vmem:[#allocation2] sm:$0xff]
        %v661 = vld [vmem:[#allocation2 + $0x8] sm:$0xff]
        %v662 = vld [vmem:[#allocation2 + $0x10] sm:$0xff]
        %v663 = vld [vmem:[#allocation2 + $0x18] sm:$0xff]
        %v664 = vld [vmem:[#allocation2 + $0x20] sm:$0xff]
        %v665 = vld [vmem:[#allocation2 + $0x28] sm:$0xff]
        %v666 = vld [vmem:[#allocation2 + $0x30] sm:$0xff]
        %v667 = vld [vmem:[#allocation2 + $0x38] sm:$0xff]
        %v668 = vld [vmem:[%s7] sm:$0x1]
        %670 = vset.pattern.permute.xlu0 0
        %671 = vperm.xlu0 %670, %v660
        %v672 = vpop.permute.xlu0 %671
        %675 = vset.pattern.permute.xlu0 0
        %676 = vperm.xlu0 %675, %v661
        %v677 = vpop.permute.xlu0 %676
        %680 = vset.pattern.permute.xlu0 0
        %681 = vperm.xlu0 %680, %v662
        %v682 = vpop.permute.xlu0 %681
        %685 = vset.pattern.permute.xlu0 0
        %686 = vperm.xlu0 %685, %v663
        %v687 = vpop.permute.xlu0 %686
        %690 = vset.pattern.permute.xlu0 0
        %691 = vperm.xlu0 %690, %v664
        %v692 = vpop.permute.xlu0 %691
        %695 = vset.pattern.permute.xlu0 0
        %696 = vperm.xlu0 %695, %v665
        %v697 = vpop.permute.xlu0 %696
        %700 = vset.pattern.permute.xlu0 0
        %701 = vperm.xlu0 %700, %v666
        %v702 = vpop.permute.xlu0 %701
        %705 = vset.pattern.permute.xlu0 0
        %706 = vperm.xlu0 %705, %v667
        %v707 = vpop.permute.xlu0 %706
        %v709 = vlaneseq
        %v710 = vshrl.u32 %v709, 7
        %v711 = vsub.s32 0, %v710
        %v712 = vrot.slane %v646, %v711
        %v713 = vadd.f32 %v672, %v712
        %v714 = vadd.f32 %v677, %v712
        %v715 = vadd.f32 %v682, %v712
        %v716 = vadd.f32 %v687, %v712
        %v717 = vadd.f32 %v692, %v712
        %v718 = vadd.f32 %v697, %v712
        %v719 = vadd.f32 %v702, %v712
        %v720 = vadd.f32 %v707, %v712
        %v721 = vmul.f32 %v713, 0.2
        %v722 = vmul.f32 %v714, 0.2
        %v723 = vmul.f32 %v715, 0.2
        %v724 = vmul.f32 %v716, 0.2
        %v725 = vmul.f32 %v717, 0.2
        %v726 = vmul.f32 %v718, 0.2
        %v727 = vmul.f32 %v719, 0.2
        %v728 = vmul.f32 %v720, 0.2
        %v729 = vmax.f32 %v713, %v721
        %v730 = vmax.f32 %v714, %v722
        %v731 = vmax.f32 %v715, %v723
        %v732 = vmax.f32 %v716, %v724
        %v733 = vmax.f32 %v717, %v725
        %v734 = vmax.f32 %v718, %v726
        %v735 = vmax.f32 %v719, %v727
        %v736 = vmax.f32 %v720, %v728
        %v738 = vlaneseq
        %v739 = vshrl.u32 %v738, 7
        %v740 = vsub.s32 0, %v739
        %v741 = vrot.slane %v668, %v740
        %742 = vset.pattern.permute.xlu0 0
        %743 = vperm.xlu0 %742, %v741
        %v744 = vpop.permute.xlu0 %743
        %v746 = vmul.f32 %v744, %v729
        %v747 = vmul.f32 %v744, %v730
        %v748 = vmul.f32 %v744, %v731
        %v749 = vmul.f32 %v744, %v732
        %v750 = vmul.f32 %v744, %v733
        %v751 = vmul.f32 %v744, %v734
        %v752 = vmul.f32 %v744, %v735
        %v753 = vmul.f32 %v744, %v736
        %v754 = vadd.f32 %v746, 0.0
        %v755 = vadd.f32 %v747, 0.0
        %v756 = vadd.f32 %v748, 0.0
        %v757 = vadd.f32 %v749, 0.0
        %v758 = vadd.f32 %v750, 0.0
        %v759 = vadd.f32 %v751, 0.0
        %v760 = vadd.f32 %v752, 0.0
        %v761 = vadd.f32 %v753, 0.0
        %762 = vset.pattern.permute.xlu0 1
        %763 = vperm.xlu0 %762, %v660
        %v764 = vpop.permute.xlu0 %763
        %766 = vset.pattern.permute.xlu0 1
        %767 = vperm.xlu0 %766, %v661
        %v768 = vpop.permute.xlu0 %767
        %770 = vset.pattern.permute.xlu0 1
        %771 = vperm.xlu0 %770, %v662
        %v772 = vpop.permute.xlu0 %771
        %774 = vset.pattern.permute.xlu0 1
        %775 = vperm.xlu0 %774, %v663
        %v776 = vpop.permute.xlu0 %775
        %778 = vset.pattern.permute.xlu0 1
        %779 = vperm.xlu0 %778, %v664
        %v780 = vpop.permute.xlu0 %779
        %782 = vset.pattern.permute.xlu0 1
        %783 = vperm.xlu0 %782, %v665
        %v784 = vpop.permute.xlu0 %783
        %786 = vset.pattern.permute.xlu0 1
        %787 = vperm.xlu0 %786, %v666
        %v788 = vpop.permute.xlu0 %787
        %790 = vset.pattern.permute.xlu0 1
        %791 = vperm.xlu0 %790, %v667
        %v792 = vpop.permute.xlu0 %791
        %v794 = vlaneseq
        %v795 = vshrl.u32 %v794, 7
        %v796 = vsub.s32 1, %v795
        %v797 = vrot.slane %v646, %v796
        %v798 = vadd.f32 %v764, %v797
        %v799 = vadd.f32 %v768, %v797
        %v800 = vadd.f32 %v772, %v797
        %v801 = vadd.f32 %v776, %v797
        %v802 = vadd.f32 %v780, %v797
        %v803 = vadd.f32 %v784, %v797
        %v804 = vadd.f32 %v788, %v797
        %v805 = vadd.f32 %v792, %v797
        %v806 = vmul.f32 %v798, 0.2
        %v807 = vmul.f32 %v799, 0.2
        %v808 = vmul.f32 %v800, 0.2
        %v809 = vmul.f32 %v801, 0.2
        %v810 = vmul.f32 %v802, 0.2
        %v811 = vmul.f32 %v803, 0.2
        %v812 = vmul.f32 %v804, 0.2
        %v813 = vmul.f32 %v805, 0.2
        %v814 = vmax.f32 %v798, %v806
        %v815 = vmax.f32 %v799, %v807
        %v816 = vmax.f32 %v800, %v808
        %v817 = vmax.f32 %v801, %v809
        %v818 = vmax.f32 %v802, %v810
        %v819 = vmax.f32 %v803, %v811
        %v820 = vmax.f32 %v804, %v812
        %v821 = vmax.f32 %v805, %v813
        %822 = vset.pattern.permute.xlu0 1
        %823 = vperm.xlu0 %822, %v741
        %v824 = vpop.permute.xlu0 %823
        %v826 = vmul.f32 %v824, %v814
        %v827 = vmul.f32 %v824, %v815
        %v828 = vmul.f32 %v824, %v816
        %v829 = vmul.f32 %v824, %v817
        %v830 = vmul.f32 %v824, %v818
        %v831 = vmul.f32 %v824, %v819
        %v832 = vmul.f32 %v824, %v820
        %v833 = vmul.f32 %v824, %v821
        %v834 = vadd.f32 %v754, %v826
        %v835 = vadd.f32 %v755, %v827
        %v836 = vadd.f32 %v756, %v828
        %v837 = vadd.f32 %v757, %v829
        %v838 = vadd.f32 %v758, %v830
        %v839 = vadd.f32 %v759, %v831
        %v840 = vadd.f32 %v760, %v832
        %v841 = vadd.f32 %v761, %v833
        %842 = vset.pattern.permute.xlu0 2
        %843 = vperm.xlu0 %842, %v660
        %v844 = vpop.permute.xlu0 %843
        %846 = vset.pattern.permute.xlu0 2
        %847 = vperm.xlu0 %846, %v661
        %v848 = vpop.permute.xlu0 %847
        %850 = vset.pattern.permute.xlu0 2
        %851 = vperm.xlu0 %850, %v662
        %v852 = vpop.permute.xlu0 %851
        %854 = vset.pattern.permute.xlu0 2
        %855 = vperm.xlu0 %854, %v663
        %v856 = vpop.permute.xlu0 %855
        %858 = vset.pattern.permute.xlu0 2
        %859 = vperm.xlu0 %858, %v664
        %v860 = vpop.permute.xlu0 %859
        %862 = vset.pattern.permute.xlu0 2
        %863 = vperm.xlu0 %862, %v665
        %v864 = vpop.permute.xlu0 %863
        %866 = vset.pattern.permute.xlu0 2
        %867 = vperm.xlu0 %866, %v666
        %v868 = vpop.permute.xlu0 %867
        %870 = vset.pattern.permute.xlu0 2
        %871 = vperm.xlu0 %870, %v667
        %v872 = vpop.permute.xlu0 %871
        %v874 = vlaneseq
        %v875 = vshrl.u32 %v874, 7
        %v876 = vsub.s32 2, %v875
        %v877 = vrot.slane %v646, %v876
        %v878 = vadd.f32 %v844, %v877
        %v879 = vadd.f32 %v848, %v877
        %v880 = vadd.f32 %v852, %v877
        %v881 = vadd.f32 %v856, %v877
        %v882 = vadd.f32 %v860, %v877
        %v883 = vadd.f32 %v864, %v877
        %v884 = vadd.f32 %v868, %v877
        %v885 = vadd.f32 %v872, %v877
        %v886 = vmul.f32 %v878, 0.2
        %v887 = vmul.f32 %v879, 0.2
        %v888 = vmul.f32 %v880, 0.2
        %v889 = vmul.f32 %v881, 0.2
        %v890 = vmul.f32 %v882, 0.2
        %v891 = vmul.f32 %v883, 0.2
        %v892 = vmul.f32 %v884, 0.2
        %v893 = vmul.f32 %v885, 0.2
        %v894 = vmax.f32 %v878, %v886
        %v895 = vmax.f32 %v879, %v887
        %v896 = vmax.f32 %v880, %v888
        %v897 = vmax.f32 %v881, %v889
        %v898 = vmax.f32 %v882, %v890
        %v899 = vmax.f32 %v883, %v891
        %v900 = vmax.f32 %v884, %v892
        %v901 = vmax.f32 %v885, %v893
        %902 = vset.pattern.permute.xlu0 2
        %903 = vperm.xlu0 %902, %v741
        %v904 = vpop.permute.xlu0 %903
        %v906 = vmul.f32 %v904, %v894
        %v907 = vmul.f32 %v904, %v895
        %v908 = vmul.f32 %v904, %v896
        %v909 = vmul.f32 %v904, %v897
        %v910 = vmul.f32 %v904, %v898
        %v911 = vmul.f32 %v904, %v899
        %v912 = vmul.f32 %v904, %v900
        %v913 = vmul.f32 %v904, %v901
        %v914 = vadd.f32 %v834, %v906
        %v915 = vadd.f32 %v835, %v907
        %v916 = vadd.f32 %v836, %v908
        %v917 = vadd.f32 %v837, %v909
        %v918 = vadd.f32 %v838, %v910
        %v919 = vadd.f32 %v839, %v911
        %v920 = vadd.f32 %v840, %v912
        %v921 = vadd.f32 %v841, %v913
        %922 = vset.pattern.permute.xlu0 3
        %923 = vperm.xlu0 %922, %v660
        %v924 = vpop.permute.xlu0 %923
        %926 = vset.pattern.permute.xlu0 3
        %927 = vperm.xlu0 %926, %v661
        %v928 = vpop.permute.xlu0 %927
        %930 = vset.pattern.permute.xlu0 3
        %931 = vperm.xlu0 %930, %v662
        %v932 = vpop.permute.xlu0 %931
        %934 = vset.pattern.permute.xlu0 3
        %935 = vperm.xlu0 %934, %v663
        %v936 = vpop.permute.xlu0 %935
        %938 = vset.pattern.permute.xlu0 3
        %939 = vperm.xlu0 %938, %v664
        %v940 = vpop.permute.xlu0 %939
        %942 = vset.pattern.permute.xlu0 3
        %943 = vperm.xlu0 %942, %v665
        %v944 = vpop.permute.xlu0 %943
        %946 = vset.pattern.permute.xlu0 3
        %947 = vperm.xlu0 %946, %v666
        %v948 = vpop.permute.xlu0 %947
        %950 = vset.pattern.permute.xlu0 3
        %951 = vperm.xlu0 %950, %v667
        %v952 = vpop.permute.xlu0 %951
        %v954 = vlaneseq
        %v955 = vshrl.u32 %v954, 7
        %v956 = vsub.s32 3, %v955
        %v957 = vrot.slane %v646, %v956
        %v958 = vadd.f32 %v924, %v957
        %v959 = vadd.f32 %v928, %v957
        %v960 = vadd.f32 %v932, %v957
        %v961 = vadd.f32 %v936, %v957
        %v962 = vadd.f32 %v940, %v957
        %v963 = vadd.f32 %v944, %v957
        %v964 = vadd.f32 %v948, %v957
        %v965 = vadd.f32 %v952, %v957
        %v966 = vmul.f32 %v958, 0.2
        %v967 = vmul.f32 %v959, 0.2
        %v968 = vmul.f32 %v960, 0.2
        %v969 = vmul.f32 %v961, 0.2
        %v970 = vmul.f32 %v962, 0.2
        %v971 = vmul.f32 %v963, 0.2
        %v972 = vmul.f32 %v964, 0.2
        %v973 = vmul.f32 %v965, 0.2
        %v974 = vmax.f32 %v958, %v966
        %v975 = vmax.f32 %v959, %v967
        %v976 = vmax.f32 %v960, %v968
        %v977 = vmax.f32 %v961, %v969
        %v978 = vmax.f32 %v962, %v970
        %v979 = vmax.f32 %v963, %v971
        %v980 = vmax.f32 %v964, %v972
        %v981 = vmax.f32 %v965, %v973
        %982 = vset.pattern.permute.xlu0 3
        %983 = vperm.xlu0 %982, %v741
        %v984 = vpop.permute.xlu0 %983
        %v986 = vmul.f32 %v984, %v974
        %v987 = vmul.f32 %v984, %v975
        %v988 = vmul.f32 %v984, %v976
        %v989 = vmul.f32 %v984, %v977
        %v990 = vmul.f32 %v984, %v978
        %v991 = vmul.f32 %v984, %v979
        %v992 = vmul.f32 %v984, %v980
        %v993 = vmul.f32 %v984, %v981
        %v994 = vadd.f32 %v914, %v986
        %v995 = vadd.f32 %v915, %v987
        %v996 = vadd.f32 %v916, %v988
        %v997 = vadd.f32 %v917, %v989
        %v998 = vadd.f32 %v918, %v990
        %v999 = vadd.f32 %v919, %v991
        %v1000 = vadd.f32 %v920, %v992
        %v1001 = vadd.f32 %v921, %v993
        %1002 = vset.pattern.permute.xlu0 4
        %1003 = vperm.xlu0 %1002, %v660
        %v1004 = vpop.permute.xlu0 %1003
        %1006 = vset.pattern.permute.xlu0 4
        %1007 = vperm.xlu0 %1006, %v661
        %v1008 = vpop.permute.xlu0 %1007
        %1010 = vset.pattern.permute.xlu0 4
        %1011 = vperm.xlu0 %1010, %v662
        %v1012 = vpop.permute.xlu0 %1011
        %1014 = vset.pattern.permute.xlu0 4
        %1015 = vperm.xlu0 %1014, %v663
        %v1016 = vpop.permute.xlu0 %1015
        %1018 = vset.pattern.permute.xlu0 4
        %1019 = vperm.xlu0 %1018, %v664
        %v1020 = vpop.permute.xlu0 %1019
        %1022 = vset.pattern.permute.xlu0 4
        %1023 = vperm.xlu0 %1022, %v665
        %v1024 = vpop.permute.xlu0 %1023
        %1026 = vset.pattern.permute.xlu0 4
        %1027 = vperm.xlu0 %1026, %v666
        %v1028 = vpop.permute.xlu0 %1027
        %1030 = vset.pattern.permute.xlu0 4
        %1031 = vperm.xlu0 %1030, %v667
        %v1032 = vpop.permute.xlu0 %1031
        %v1034 = vlaneseq
        %v1035 = vshrl.u32 %v1034, 7
        %v1036 = vsub.s32 4, %v1035
        %v1037 = vrot.slane %v646, %v1036
        %v1038 = vadd.f32 %v1004, %v1037
        %v1039 = vadd.f32 %v1008, %v1037
        %v1040 = vadd.f32 %v1012, %v1037
        %v1041 = vadd.f32 %v1016, %v1037
        %v1042 = vadd.f32 %v1020, %v1037
        %v1043 = vadd.f32 %v1024, %v1037
        %v1044 = vadd.f32 %v1028, %v1037
        %v1045 = vadd.f32 %v1032, %v1037
        %v1046 = vmul.f32 %v1038, 0.2
        %v1047 = vmul.f32 %v1039, 0.2
        %v1048 = vmul.f32 %v1040, 0.2
        %v1049 = vmul.f32 %v1041, 0.2
        %v1050 = vmul.f32 %v1042, 0.2
        %v1051 = vmul.f32 %v1043, 0.2
        %v1052 = vmul.f32 %v1044, 0.2
        %v1053 = vmul.f32 %v1045, 0.2
        %v1054 = vmax.f32 %v1038, %v1046
        %v1055 = vmax.f32 %v1039, %v1047
        %v1056 = vmax.f32 %v1040, %v1048
        %v1057 = vmax.f32 %v1041, %v1049
        %v1058 = vmax.f32 %v1042, %v1050
        %v1059 = vmax.f32 %v1043, %v1051
        %v1060 = vmax.f32 %v1044, %v1052
        %v1061 = vmax.f32 %v1045, %v1053
        %1062 = vset.pattern.permute.xlu0 4
        %1063 = vperm.xlu0 %1062, %v741
        %v1064 = vpop.permute.xlu0 %1063
        %v1066 = vmul.f32 %v1064, %v1054
        %v1067 = vmul.f32 %v1064, %v1055
        %v1068 = vmul.f32 %v1064, %v1056
        %v1069 = vmul.f32 %v1064, %v1057
        %v1070 = vmul.f32 %v1064, %v1058
        %v1071 = vmul.f32 %v1064, %v1059
        %v1072 = vmul.f32 %v1064, %v1060
        %v1073 = vmul.f32 %v1064, %v1061
        %v1074 = vadd.f32 %v994, %v1066
        %v1075 = vadd.f32 %v995, %v1067
        %v1076 = vadd.f32 %v996, %v1068
        %v1077 = vadd.f32 %v997, %v1069
        %v1078 = vadd.f32 %v998, %v1070
        %v1079 = vadd.f32 %v999, %v1071
        %v1080 = vadd.f32 %v1000, %v1072
        %v1081 = vadd.f32 %v1001, %v1073
        %1082 = vset.pattern.permute.xlu0 5
        %1083 = vperm.xlu0 %1082, %v660
        %v1084 = vpop.permute.xlu0 %1083
        %1086 = vset.pattern.permute.xlu0 5
        %1087 = vperm.xlu0 %1086, %v661
        %v1088 = vpop.permute.xlu0 %1087
        %1090 = vset.pattern.permute.xlu0 5
        %1091 = vperm.xlu0 %1090, %v662
        %v1092 = vpop.permute.xlu0 %1091
        %1094 = vset.pattern.permute.xlu0 5
        %1095 = vperm.xlu0 %1094, %v663
        %v1096 = vpop.permute.xlu0 %1095
        %1098 = vset.pattern.permute.xlu0 5
        %1099 = vperm.xlu0 %1098, %v664
        %v1100 = vpop.permute.xlu0 %1099
        %1102 = vset.pattern.permute.xlu0 5
        %1103 = vperm.xlu0 %1102, %v665
        %v1104 = vpop.permute.xlu0 %1103
        %1106 = vset.pattern.permute.xlu0 5
        %1107 = vperm.xlu0 %1106, %v666
        %v1108 = vpop.permute.xlu0 %1107
        %1110 = vset.pattern.permute.xlu0 5
        %1111 = vperm.xlu0 %1110, %v667
        %v1112 = vpop.permute.xlu0 %1111
        %v1114 = vlaneseq
        %v1115 = vshrl.u32 %v1114, 7
        %v1116 = vsub.s32 5, %v1115
        %v1117 = vrot.slane %v646, %v1116
        %v1118 = vadd.f32 %v1084, %v1117
        %v1119 = vadd.f32 %v1088, %v1117
        %v1120 = vadd.f32 %v1092, %v1117
        %v1121 = vadd.f32 %v1096, %v1117
        %v1122 = vadd.f32 %v1100, %v1117
        %v1123 = vadd.f32 %v1104, %v1117
        %v1124 = vadd.f32 %v1108, %v1117
        %v1125 = vadd.f32 %v1112, %v1117
        %v1126 = vmul.f32 %v1118, 0.2
        %v1127 = vmul.f32 %v1119, 0.2
        %v1128 = vmul.f32 %v1120, 0.2
        %v1129 = vmul.f32 %v1121, 0.2
        %v1130 = vmul.f32 %v1122, 0.2
        %v1131 = vmul.f32 %v1123, 0.2
        %v1132 = vmul.f32 %v1124, 0.2
        %v1133 = vmul.f32 %v1125, 0.2
        %v1134 = vmax.f32 %v1118, %v1126
        %v1135 = vmax.f32 %v1119, %v1127
        %v1136 = vmax.f32 %v1120, %v1128
        %v1137 = vmax.f32 %v1121, %v1129
        %v1138 = vmax.f32 %v1122, %v1130
        %v1139 = vmax.f32 %v1123, %v1131
        %v1140 = vmax.f32 %v1124, %v1132
        %v1141 = vmax.f32 %v1125, %v1133
        %1142 = vset.pattern.permute.xlu0 5
        %1143 = vperm.xlu0 %1142, %v741
        %v1144 = vpop.permute.xlu0 %1143
        %v1146 = vmul.f32 %v1144, %v1134
        %v1147 = vmul.f32 %v1144, %v1135
        %v1148 = vmul.f32 %v1144, %v1136
        %v1149 = vmul.f32 %v1144, %v1137
        %v1150 = vmul.f32 %v1144, %v1138
        %v1151 = vmul.f32 %v1144, %v1139
        %v1152 = vmul.f32 %v1144, %v1140
        %v1153 = vmul.f32 %v1144, %v1141
        %v1154 = vadd.f32 %v1074, %v1146
        %v1155 = vadd.f32 %v1075, %v1147
        %v1156 = vadd.f32 %v1076, %v1148
        %v1157 = vadd.f32 %v1077, %v1149
        %v1158 = vadd.f32 %v1078, %v1150
        %v1159 = vadd.f32 %v1079, %v1151
        %v1160 = vadd.f32 %v1080, %v1152
        %v1161 = vadd.f32 %v1081, %v1153
        %1162 = vset.pattern.permute.xlu0 6
        %1163 = vperm.xlu0 %1162, %v660
        %v1164 = vpop.permute.xlu0 %1163
        %1166 = vset.pattern.permute.xlu0 6
        %1167 = vperm.xlu0 %1166, %v661
        %v1168 = vpop.permute.xlu0 %1167
        %1170 = vset.pattern.permute.xlu0 6
        %1171 = vperm.xlu0 %1170, %v662
        %v1172 = vpop.permute.xlu0 %1171
        %1174 = vset.pattern.permute.xlu0 6
        %1175 = vperm.xlu0 %1174, %v663
        %v1176 = vpop.permute.xlu0 %1175
        %1178 = vset.pattern.permute.xlu0 6
        %1179 = vperm.xlu0 %1178, %v664
        %v1180 = vpop.permute.xlu0 %1179
        %1182 = vset.pattern.permute.xlu0 6
        %1183 = vperm.xlu0 %1182, %v665
        %v1184 = vpop.permute.xlu0 %1183
        %1186 = vset.pattern.permute.xlu0 6
        %1187 = vperm.xlu0 %1186, %v666
        %v1188 = vpop.permute.xlu0 %1187
        %1190 = vset.pattern.permute.xlu0 6
        %1191 = vperm.xlu0 %1190, %v667
        %v1192 = vpop.permute.xlu0 %1191
        %v1194 = vlaneseq
        %v1195 = vshrl.u32 %v1194, 7
        %v1196 = vsub.s32 6, %v1195
        %v1197 = vrot.slane %v646, %v1196
        %v1198 = vadd.f32 %v1164, %v1197
        %v1199 = vadd.f32 %v1168, %v1197
        %v1200 = vadd.f32 %v1172, %v1197
        %v1201 = vadd.f32 %v1176, %v1197
        %v1202 = vadd.f32 %v1180, %v1197
        %v1203 = vadd.f32 %v1184, %v1197
        %v1204 = vadd.f32 %v1188, %v1197
        %v1205 = vadd.f32 %v1192, %v1197
        %v1206 = vmul.f32 %v1198, 0.2
        %v1207 = vmul.f32 %v1199, 0.2
        %v1208 = vmul.f32 %v1200, 0.2
        %v1209 = vmul.f32 %v1201, 0.2
        %v1210 = vmul.f32 %v1202, 0.2
        %v1211 = vmul.f32 %v1203, 0.2
        %v1212 = vmul.f32 %v1204, 0.2
        %v1213 = vmul.f32 %v1205, 0.2
        %v1214 = vmax.f32 %v1198, %v1206
        %v1215 = vmax.f32 %v1199, %v1207
        %v1216 = vmax.f32 %v1200, %v1208
        %v1217 = vmax.f32 %v1201, %v1209
        %v1218 = vmax.f32 %v1202, %v1210
        %v1219 = vmax.f32 %v1203, %v1211
        %v1220 = vmax.f32 %v1204, %v1212
        %v1221 = vmax.f32 %v1205, %v1213
        %1222 = vset.pattern.permute.xlu0 6
        %1223 = vperm.xlu0 %1222, %v741
        %v1224 = vpop.permute.xlu0 %1223
        %v1226 = vmul.f32 %v1224, %v1214
        %v1227 = vmul.f32 %v1224, %v1215
        %v1228 = vmul.f32 %v1224, %v1216
        %v1229 = vmul.f32 %v1224, %v1217
        %v1230 = vmul.f32 %v1224, %v1218
        %v1231 = vmul.f32 %v1224, %v1219
        %v1232 = vmul.f32 %v1224, %v1220
        %v1233 = vmul.f32 %v1224, %v1221
        %v1234 = vadd.f32 %v1154, %v1226
        %v1235 = vadd.f32 %v1155, %v1227
        %v1236 = vadd.f32 %v1156, %v1228
        %v1237 = vadd.f32 %v1157, %v1229
        %v1238 = vadd.f32 %v1158, %v1230
        %v1239 = vadd.f32 %v1159, %v1231
        %v1240 = vadd.f32 %v1160, %v1232
        %v1241 = vadd.f32 %v1161, %v1233
        %1242 = vset.pattern.permute.xlu0 7
        %1243 = vperm.xlu0 %1242, %v660
        %v1244 = vpop.permute.xlu0 %1243
        %1246 = vset.pattern.permute.xlu0 7
        %1247 = vperm.xlu0 %1246, %v661
        %v1248 = vpop.permute.xlu0 %1247
        %1250 = vset.pattern.permute.xlu0 7
        %1251 = vperm.xlu0 %1250, %v662
        %v1252 = vpop.permute.xlu0 %1251
        %1254 = vset.pattern.permute.xlu0 7
        %1255 = vperm.xlu0 %1254, %v663
        %v1256 = vpop.permute.xlu0 %1255
        %1258 = vset.pattern.permute.xlu0 7
        %1259 = vperm.xlu0 %1258, %v664
        %v1260 = vpop.permute.xlu0 %1259
        %1262 = vset.pattern.permute.xlu0 7
        %1263 = vperm.xlu0 %1262, %v665
        %v1264 = vpop.permute.xlu0 %1263
        %1266 = vset.pattern.permute.xlu0 7
        %1267 = vperm.xlu0 %1266, %v666
        %v1268 = vpop.permute.xlu0 %1267
        %1270 = vset.pattern.permute.xlu0 7
        %1271 = vperm.xlu0 %1270, %v667
        %v1272 = vpop.permute.xlu0 %1271
        %v1274 = vlaneseq
        %v1275 = vshrl.u32 %v1274, 7
        %v1276 = vsub.s32 7, %v1275
        %v1277 = vrot.slane %v646, %v1276
        %v1278 = vadd.f32 %v1244, %v1277
        %v1279 = vadd.f32 %v1248, %v1277
        %v1280 = vadd.f32 %v1252, %v1277
        %v1281 = vadd.f32 %v1256, %v1277
        %v1282 = vadd.f32 %v1260, %v1277
        %v1283 = vadd.f32 %v1264, %v1277
        %v1284 = vadd.f32 %v1268, %v1277
        %v1285 = vadd.f32 %v1272, %v1277
        %v1286 = vmul.f32 %v1278, 0.2
        %v1287 = vmul.f32 %v1279, 0.2
        %v1288 = vmul.f32 %v1280, 0.2
        %v1289 = vmul.f32 %v1281, 0.2
        %v1290 = vmul.f32 %v1282, 0.2
        %v1291 = vmul.f32 %v1283, 0.2
        %v1292 = vmul.f32 %v1284, 0.2
        %v1293 = vmul.f32 %v1285, 0.2
        %v1294 = vmax.f32 %v1278, %v1286
        %v1295 = vmax.f32 %v1279, %v1287
        %v1296 = vmax.f32 %v1280, %v1288
        %v1297 = vmax.f32 %v1281, %v1289
        %v1298 = vmax.f32 %v1282, %v1290
        %v1299 = vmax.f32 %v1283, %v1291
        %v1300 = vmax.f32 %v1284, %v1292
        %v1301 = vmax.f32 %v1285, %v1293
        %1302 = vset.pattern.permute.xlu0 7
        %1303 = vperm.xlu0 %1302, %v741
        %v1304 = vpop.permute.xlu0 %1303
        %v1306 = vmul.f32 %v1304, %v1294
        %v1307 = vmul.f32 %v1304, %v1295
        %v1308 = vmul.f32 %v1304, %v1296
        %v1309 = vmul.f32 %v1304, %v1297
        %v1310 = vmul.f32 %v1304, %v1298
        %v1311 = vmul.f32 %v1304, %v1299
        %v1312 = vmul.f32 %v1304, %v1300
        %v1313 = vmul.f32 %v1304, %v1301
        %v1314 = vadd.f32 %v1234, %v1306
        %v1315 = vadd.f32 %v1235, %v1307
        %v1316 = vadd.f32 %v1236, %v1308
        %v1317 = vadd.f32 %v1237, %v1309
        %v1318 = vadd.f32 %v1238, %v1310
        %v1319 = vadd.f32 %v1239, %v1311
        %v1320 = vadd.f32 %v1240, %v1312
        %v1321 = vadd.f32 %v1241, %v1313
        %1322 = vset.pattern.permute.xlu0 8
        %1323 = vperm.xlu0 %1322, %v660
        %v1324 = vpop.permute.xlu0 %1323
        %1326 = vset.pattern.permute.xlu0 8
        %1327 = vperm.xlu0 %1326, %v661
        %v1328 = vpop.permute.xlu0 %1327
        %1330 = vset.pattern.permute.xlu0 8
        %1331 = vperm.xlu0 %1330, %v662
        %v1332 = vpop.permute.xlu0 %1331
        %1334 = vset.pattern.permute.xlu0 8
        %1335 = vperm.xlu0 %1334, %v663
        %v1336 = vpop.permute.xlu0 %1335
        %1338 = vset.pattern.permute.xlu0 8
        %1339 = vperm.xlu0 %1338, %v664
        %v1340 = vpop.permute.xlu0 %1339
        %1342 = vset.pattern.permute.xlu0 8
        %1343 = vperm.xlu0 %1342, %v665
        %v1344 = vpop.permute.xlu0 %1343
        %1346 = vset.pattern.permute.xlu0 8
        %1347 = vperm.xlu0 %1346, %v666
        %v1348 = vpop.permute.xlu0 %1347
        %1350 = vset.pattern.permute.xlu0 8
        %1351 = vperm.xlu0 %1350, %v667
        %v1352 = vpop.permute.xlu0 %1351
        %v1354 = vlaneseq
        %v1355 = vshrl.u32 %v1354, 7
        %v1356 = vsub.s32 0, %v1355
        %v1357 = vrot.slane %v649, %v1356
        %v1358 = vadd.f32 %v1324, %v1357
        %v1359 = vadd.f32 %v1328, %v1357
        %v1360 = vadd.f32 %v1332, %v1357
        %v1361 = vadd.f32 %v1336, %v1357
        %v1362 = vadd.f32 %v1340, %v1357
        %v1363 = vadd.f32 %v1344, %v1357
        %v1364 = vadd.f32 %v1348, %v1357
        %v1365 = vadd.f32 %v1352, %v1357
        %v1366 = vmul.f32 %v1358, 0.2
        %v1367 = vmul.f32 %v1359, 0.2
        %v1368 = vmul.f32 %v1360, 0.2
        %v1369 = vmul.f32 %v1361, 0.2
        %v1370 = vmul.f32 %v1362, 0.2
        %v1371 = vmul.f32 %v1363, 0.2
        %v1372 = vmul.f32 %v1364, 0.2
        %v1373 = vmul.f32 %v1365, 0.2
        %v1374 = vmax.f32 %v1358, %v1366
        %v1375 = vmax.f32 %v1359, %v1367
        %v1376 = vmax.f32 %v1360, %v1368
        %v1377 = vmax.f32 %v1361, %v1369
        %v1378 = vmax.f32 %v1362, %v1370
        %v1379 = vmax.f32 %v1363, %v1371
        %v1380 = vmax.f32 %v1364, %v1372
        %v1381 = vmax.f32 %v1365, %v1373
        %1382 = vset.pattern.permute.xlu0 8
        %1383 = vperm.xlu0 %1382, %v741
        %v1384 = vpop.permute.xlu0 %1383
        %v1386 = vmul.f32 %v1384, %v1374
        %v1387 = vmul.f32 %v1384, %v1375
        %v1388 = vmul.f32 %v1384, %v1376
        %v1389 = vmul.f32 %v1384, %v1377
        %v1390 = vmul.f32 %v1384, %v1378
        %v1391 = vmul.f32 %v1384, %v1379
        %v1392 = vmul.f32 %v1384, %v1380
        %v1393 = vmul.f32 %v1384, %v1381
        %v1394 = vadd.f32 %v1314, %v1386
        %v1395 = vadd.f32 %v1315, %v1387
        %v1396 = vadd.f32 %v1316, %v1388
        %v1397 = vadd.f32 %v1317, %v1389
        %v1398 = vadd.f32 %v1318, %v1390
        %v1399 = vadd.f32 %v1319, %v1391
        %v1400 = vadd.f32 %v1320, %v1392
        %v1401 = vadd.f32 %v1321, %v1393
        %1402 = vset.pattern.permute.xlu0 9
        %1403 = vperm.xlu0 %1402, %v660
        %v1404 = vpop.permute.xlu0 %1403
        %1406 = vset.pattern.permute.xlu0 9
        %1407 = vperm.xlu0 %1406, %v661
        %v1408 = vpop.permute.xlu0 %1407
        %1410 = vset.pattern.permute.xlu0 9
        %1411 = vperm.xlu0 %1410, %v662
        %v1412 = vpop.permute.xlu0 %1411
        %1414 = vset.pattern.permute.xlu0 9
        %1415 = vperm.xlu0 %1414, %v663
        %v1416 = vpop.permute.xlu0 %1415
        %1418 = vset.pattern.permute.xlu0 9
        %1419 = vperm.xlu0 %1418, %v664
        %v1420 = vpop.permute.xlu0 %1419
        %1422 = vset.pattern.permute.xlu0 9
        %1423 = vperm.xlu0 %1422, %v665
        %v1424 = vpop.permute.xlu0 %1423
        %1426 = vset.pattern.permute.xlu0 9
        %1427 = vperm.xlu0 %1426, %v666
        %v1428 = vpop.permute.xlu0 %1427
        %1430 = vset.pattern.permute.xlu0 9
        %1431 = vperm.xlu0 %1430, %v667
        %v1432 = vpop.permute.xlu0 %1431
        %v1434 = vlaneseq
        %v1435 = vshrl.u32 %v1434, 7
        %v1436 = vsub.s32 1, %v1435
        %v1437 = vrot.slane %v649, %v1436
        %v1438 = vadd.f32 %v1404, %v1437
        %v1439 = vadd.f32 %v1408, %v1437
        %v1440 = vadd.f32 %v1412, %v1437
        %v1441 = vadd.f32 %v1416, %v1437
        %v1442 = vadd.f32 %v1420, %v1437
        %v1443 = vadd.f32 %v1424, %v1437
        %v1444 = vadd.f32 %v1428, %v1437
        %v1445 = vadd.f32 %v1432, %v1437
        %v1446 = vmul.f32 %v1438, 0.2
        %v1447 = vmul.f32 %v1439, 0.2
        %v1448 = vmul.f32 %v1440, 0.2
        %v1449 = vmul.f32 %v1441, 0.2
        %v1450 = vmul.f32 %v1442, 0.2
        %v1451 = vmul.f32 %v1443, 0.2
        %v1452 = vmul.f32 %v1444, 0.2
        %v1453 = vmul.f32 %v1445, 0.2
        %v1454 = vmax.f32 %v1438, %v1446
        %v1455 = vmax.f32 %v1439, %v1447
        %v1456 = vmax.f32 %v1440, %v1448
        %v1457 = vmax.f32 %v1441, %v1449
        %v1458 = vmax.f32 %v1442, %v1450
        %v1459 = vmax.f32 %v1443, %v1451
        %v1460 = vmax.f32 %v1444, %v1452
        %v1461 = vmax.f32 %v1445, %v1453
        %1462 = vset.pattern.permute.xlu0 9
        %1463 = vperm.xlu0 %1462, %v741
        %v1464 = vpop.permute.xlu0 %1463
        %v1466 = vmul.f32 %v1464, %v1454
        %v1467 = vmul.f32 %v1464, %v1455
        %v1468 = vmul.f32 %v1464, %v1456
        %v1469 = vmul.f32 %v1464, %v1457
        %v1470 = vmul.f32 %v1464, %v1458
        %v1471 = vmul.f32 %v1464, %v1459
        %v1472 = vmul.f32 %v1464, %v1460
        %v1473 = vmul.f32 %v1464, %v1461
        %v1474 = vadd.f32 %v1394, %v1466
        %v1475 = vadd.f32 %v1395, %v1467
        %v1476 = vadd.f32 %v1396, %v1468
        %v1477 = vadd.f32 %v1397, %v1469
        %v1478 = vadd.f32 %v1398, %v1470
        %v1479 = vadd.f32 %v1399, %v1471
        %v1480 = vadd.f32 %v1400, %v1472
        %v1481 = vadd.f32 %v1401, %v1473
        %1482 = vset.pattern.permute.xlu0 10
        %1483 = vperm.xlu0 %1482, %v660
        %v1484 = vpop.permute.xlu0 %1483
        %1486 = vset.pattern.permute.xlu0 10
        %1487 = vperm.xlu0 %1486, %v661
        %v1488 = vpop.permute.xlu0 %1487
        %1490 = vset.pattern.permute.xlu0 10
        %1491 = vperm.xlu0 %1490, %v662
        %v1492 = vpop.permute.xlu0 %1491
        %1494 = vset.pattern.permute.xlu0 10
        %1495 = vperm.xlu0 %1494, %v663
        %v1496 = vpop.permute.xlu0 %1495
        %1498 = vset.pattern.permute.xlu0 10
        %1499 = vperm.xlu0 %1498, %v664
        %v1500 = vpop.permute.xlu0 %1499
        %1502 = vset.pattern.permute.xlu0 10
        %1503 = vperm.xlu0 %1502, %v665
        %v1504 = vpop.permute.xlu0 %1503
        %1506 = vset.pattern.permute.xlu0 10
        %1507 = vperm.xlu0 %1506, %v666
        %v1508 = vpop.permute.xlu0 %1507
        %1510 = vset.pattern.permute.xlu0 10
        %1511 = vperm.xlu0 %1510, %v667
        %v1512 = vpop.permute.xlu0 %1511
        %v1514 = vlaneseq
        %v1515 = vshrl.u32 %v1514, 7
        %v1516 = vsub.s32 2, %v1515
        %v1517 = vrot.slane %v649, %v1516
        %v1518 = vadd.f32 %v1484, %v1517
        %v1519 = vadd.f32 %v1488, %v1517
        %v1520 = vadd.f32 %v1492, %v1517
        %v1521 = vadd.f32 %v1496, %v1517
        %v1522 = vadd.f32 %v1500, %v1517
        %v1523 = vadd.f32 %v1504, %v1517
        %v1524 = vadd.f32 %v1508, %v1517
        %v1525 = vadd.f32 %v1512, %v1517
        %v1526 = vmul.f32 %v1518, 0.2
        %v1527 = vmul.f32 %v1519, 0.2
        %v1528 = vmul.f32 %v1520, 0.2
        %v1529 = vmul.f32 %v1521, 0.2
        %v1530 = vmul.f32 %v1522, 0.2
        %v1531 = vmul.f32 %v1523, 0.2
        %v1532 = vmul.f32 %v1524, 0.2
        %v1533 = vmul.f32 %v1525, 0.2
        %v1534 = vmax.f32 %v1518, %v1526
        %v1535 = vmax.f32 %v1519, %v1527
        %v1536 = vmax.f32 %v1520, %v1528
        %v1537 = vmax.f32 %v1521, %v1529
        %v1538 = vmax.f32 %v1522, %v1530
        %v1539 = vmax.f32 %v1523, %v1531
        %v1540 = vmax.f32 %v1524, %v1532
        %v1541 = vmax.f32 %v1525, %v1533
        %1542 = vset.pattern.permute.xlu0 10
        %1543 = vperm.xlu0 %1542, %v741
        %v1544 = vpop.permute.xlu0 %1543
        %v1546 = vmul.f32 %v1544, %v1534
        %v1547 = vmul.f32 %v1544, %v1535
        %v1548 = vmul.f32 %v1544, %v1536
        %v1549 = vmul.f32 %v1544, %v1537
        %v1550 = vmul.f32 %v1544, %v1538
        %v1551 = vmul.f32 %v1544, %v1539
        %v1552 = vmul.f32 %v1544, %v1540
        %v1553 = vmul.f32 %v1544, %v1541
        %v1554 = vadd.f32 %v1474, %v1546
        %v1555 = vadd.f32 %v1475, %v1547
        %v1556 = vadd.f32 %v1476, %v1548
        %v1557 = vadd.f32 %v1477, %v1549
        %v1558 = vadd.f32 %v1478, %v1550
        %v1559 = vadd.f32 %v1479, %v1551
        %v1560 = vadd.f32 %v1480, %v1552
        %v1561 = vadd.f32 %v1481, %v1553
        %1562 = vset.pattern.permute.xlu0 11
        %1563 = vperm.xlu0 %1562, %v660
        %v1564 = vpop.permute.xlu0 %1563
        %1566 = vset.pattern.permute.xlu0 11
        %1567 = vperm.xlu0 %1566, %v661
        %v1568 = vpop.permute.xlu0 %1567
        %1570 = vset.pattern.permute.xlu0 11
        %1571 = vperm.xlu0 %1570, %v662
        %v1572 = vpop.permute.xlu0 %1571
        %1574 = vset.pattern.permute.xlu0 11
        %1575 = vperm.xlu0 %1574, %v663
        %v1576 = vpop.permute.xlu0 %1575
        %1578 = vset.pattern.permute.xlu0 11
        %1579 = vperm.xlu0 %1578, %v664
        %v1580 = vpop.permute.xlu0 %1579
        %1582 = vset.pattern.permute.xlu0 11
        %1583 = vperm.xlu0 %1582, %v665
        %v1584 = vpop.permute.xlu0 %1583
        %1586 = vset.pattern.permute.xlu0 11
        %1587 = vperm.xlu0 %1586, %v666
        %v1588 = vpop.permute.xlu0 %1587
        %1590 = vset.pattern.permute.xlu0 11
        %1591 = vperm.xlu0 %1590, %v667
        %v1592 = vpop.permute.xlu0 %1591
        %v1594 = vlaneseq
        %v1595 = vshrl.u32 %v1594, 7
        %v1596 = vsub.s32 3, %v1595
        %v1597 = vrot.slane %v649, %v1596
        %v1598 = vadd.f32 %v1564, %v1597
        %v1599 = vadd.f32 %v1568, %v1597
        %v1600 = vadd.f32 %v1572, %v1597
        %v1601 = vadd.f32 %v1576, %v1597
        %v1602 = vadd.f32 %v1580, %v1597
        %v1603 = vadd.f32 %v1584, %v1597
        %v1604 = vadd.f32 %v1588, %v1597
        %v1605 = vadd.f32 %v1592, %v1597
        %v1606 = vmul.f32 %v1598, 0.2
        %v1607 = vmul.f32 %v1599, 0.2
        %v1608 = vmul.f32 %v1600, 0.2
        %v1609 = vmul.f32 %v1601, 0.2
        %v1610 = vmul.f32 %v1602, 0.2
        %v1611 = vmul.f32 %v1603, 0.2
        %v1612 = vmul.f32 %v1604, 0.2
        %v1613 = vmul.f32 %v1605, 0.2
        %v1614 = vmax.f32 %v1598, %v1606
        %v1615 = vmax.f32 %v1599, %v1607
        %v1616 = vmax.f32 %v1600, %v1608
        %v1617 = vmax.f32 %v1601, %v1609
        %v1618 = vmax.f32 %v1602, %v1610
        %v1619 = vmax.f32 %v1603, %v1611
        %v1620 = vmax.f32 %v1604, %v1612
        %v1621 = vmax.f32 %v1605, %v1613
        %1622 = vset.pattern.permute.xlu0 11
        %1623 = vperm.xlu0 %1622, %v741
        %v1624 = vpop.permute.xlu0 %1623
        %v1626 = vmul.f32 %v1624, %v1614
        %v1627 = vmul.f32 %v1624, %v1615
        %v1628 = vmul.f32 %v1624, %v1616
        %v1629 = vmul.f32 %v1624, %v1617
        %v1630 = vmul.f32 %v1624, %v1618
        %v1631 = vmul.f32 %v1624, %v1619
        %v1632 = vmul.f32 %v1624, %v1620
        %v1633 = vmul.f32 %v1624, %v1621
        %v1634 = vadd.f32 %v1554, %v1626
        %v1635 = vadd.f32 %v1555, %v1627
        %v1636 = vadd.f32 %v1556, %v1628
        %v1637 = vadd.f32 %v1557, %v1629
        %v1638 = vadd.f32 %v1558, %v1630
        %v1639 = vadd.f32 %v1559, %v1631
        %v1640 = vadd.f32 %v1560, %v1632
        %v1641 = vadd.f32 %v1561, %v1633
        %1642 = vset.pattern.permute.xlu0 12
        %1643 = vperm.xlu0 %1642, %v660
        %v1644 = vpop.permute.xlu0 %1643
        %1646 = vset.pattern.permute.xlu0 12
        %1647 = vperm.xlu0 %1646, %v661
        %v1648 = vpop.permute.xlu0 %1647
        %1650 = vset.pattern.permute.xlu0 12
        %1651 = vperm.xlu0 %1650, %v662
        %v1652 = vpop.permute.xlu0 %1651
        %1654 = vset.pattern.permute.xlu0 12
        %1655 = vperm.xlu0 %1654, %v663
        %v1656 = vpop.permute.xlu0 %1655
        %1658 = vset.pattern.permute.xlu0 12
        %1659 = vperm.xlu0 %1658, %v664
        %v1660 = vpop.permute.xlu0 %1659
        %1662 = vset.pattern.permute.xlu0 12
        %1663 = vperm.xlu0 %1662, %v665
        %v1664 = vpop.permute.xlu0 %1663
        %1666 = vset.pattern.permute.xlu0 12
        %1667 = vperm.xlu0 %1666, %v666
        %v1668 = vpop.permute.xlu0 %1667
        %1670 = vset.pattern.permute.xlu0 12
        %1671 = vperm.xlu0 %1670, %v667
        %v1672 = vpop.permute.xlu0 %1671
        %v1674 = vlaneseq
        %v1675 = vshrl.u32 %v1674, 7
        %v1676 = vsub.s32 4, %v1675
        %v1677 = vrot.slane %v649, %v1676
        %v1678 = vadd.f32 %v1644, %v1677
        %v1679 = vadd.f32 %v1648, %v1677
        %v1680 = vadd.f32 %v1652, %v1677
        %v1681 = vadd.f32 %v1656, %v1677
        %v1682 = vadd.f32 %v1660, %v1677
        %v1683 = vadd.f32 %v1664, %v1677
        %v1684 = vadd.f32 %v1668, %v1677
        %v1685 = vadd.f32 %v1672, %v1677
        %v1686 = vmul.f32 %v1678, 0.2
        %v1687 = vmul.f32 %v1679, 0.2
        %v1688 = vmul.f32 %v1680, 0.2
        %v1689 = vmul.f32 %v1681, 0.2
        %v1690 = vmul.f32 %v1682, 0.2
        %v1691 = vmul.f32 %v1683, 0.2
        %v1692 = vmul.f32 %v1684, 0.2
        %v1693 = vmul.f32 %v1685, 0.2
        %v1694 = vmax.f32 %v1678, %v1686
        %v1695 = vmax.f32 %v1679, %v1687
        %v1696 = vmax.f32 %v1680, %v1688
        %v1697 = vmax.f32 %v1681, %v1689
        %v1698 = vmax.f32 %v1682, %v1690
        %v1699 = vmax.f32 %v1683, %v1691
        %v1700 = vmax.f32 %v1684, %v1692
        %v1701 = vmax.f32 %v1685, %v1693
        %1702 = vset.pattern.permute.xlu0 12
        %1703 = vperm.xlu0 %1702, %v741
        %v1704 = vpop.permute.xlu0 %1703
        %v1706 = vmul.f32 %v1704, %v1694
        %v1707 = vmul.f32 %v1704, %v1695
        %v1708 = vmul.f32 %v1704, %v1696
        %v1709 = vmul.f32 %v1704, %v1697
        %v1710 = vmul.f32 %v1704, %v1698
        %v1711 = vmul.f32 %v1704, %v1699
        %v1712 = vmul.f32 %v1704, %v1700
        %v1713 = vmul.f32 %v1704, %v1701
        %v1714 = vadd.f32 %v1634, %v1706
        %v1715 = vadd.f32 %v1635, %v1707
        %v1716 = vadd.f32 %v1636, %v1708
        %v1717 = vadd.f32 %v1637, %v1709
        %v1718 = vadd.f32 %v1638, %v1710
        %v1719 = vadd.f32 %v1639, %v1711
        %v1720 = vadd.f32 %v1640, %v1712
        %v1721 = vadd.f32 %v1641, %v1713
        %1722 = vset.pattern.permute.xlu0 13
        %1723 = vperm.xlu0 %1722, %v660
        %v1724 = vpop.permute.xlu0 %1723
        %1726 = vset.pattern.permute.xlu0 13
        %1727 = vperm.xlu0 %1726, %v661
        %v1728 = vpop.permute.xlu0 %1727
        %1730 = vset.pattern.permute.xlu0 13
        %1731 = vperm.xlu0 %1730, %v662
        %v1732 = vpop.permute.xlu0 %1731
        %1734 = vset.pattern.permute.xlu0 13
        %1735 = vperm.xlu0 %1734, %v663
        %v1736 = vpop.permute.xlu0 %1735
        %1738 = vset.pattern.permute.xlu0 13
        %1739 = vperm.xlu0 %1738, %v664
        %v1740 = vpop.permute.xlu0 %1739
        %1742 = vset.pattern.permute.xlu0 13
        %1743 = vperm.xlu0 %1742, %v665
        %v1744 = vpop.permute.xlu0 %1743
        %1746 = vset.pattern.permute.xlu0 13
        %1747 = vperm.xlu0 %1746, %v666
        %v1748 = vpop.permute.xlu0 %1747
        %1750 = vset.pattern.permute.xlu0 13
        %1751 = vperm.xlu0 %1750, %v667
        %v1752 = vpop.permute.xlu0 %1751
        %v1754 = vlaneseq
        %v1755 = vshrl.u32 %v1754, 7
        %v1756 = vsub.s32 5, %v1755
        %v1757 = vrot.slane %v649, %v1756
        %v1758 = vadd.f32 %v1724, %v1757
        %v1759 = vadd.f32 %v1728, %v1757
        %v1760 = vadd.f32 %v1732, %v1757
        %v1761 = vadd.f32 %v1736, %v1757
        %v1762 = vadd.f32 %v1740, %v1757
        %v1763 = vadd.f32 %v1744, %v1757
        %v1764 = vadd.f32 %v1748, %v1757
        %v1765 = vadd.f32 %v1752, %v1757
        %v1766 = vmul.f32 %v1758, 0.2
        %v1767 = vmul.f32 %v1759, 0.2
        %v1768 = vmul.f32 %v1760, 0.2
        %v1769 = vmul.f32 %v1761, 0.2
        %v1770 = vmul.f32 %v1762, 0.2
        %v1771 = vmul.f32 %v1763, 0.2
        %v1772 = vmul.f32 %v1764, 0.2
        %v1773 = vmul.f32 %v1765, 0.2
        %v1774 = vmax.f32 %v1758, %v1766
        %v1775 = vmax.f32 %v1759, %v1767
        %v1776 = vmax.f32 %v1760, %v1768
        %v1777 = vmax.f32 %v1761, %v1769
        %v1778 = vmax.f32 %v1762, %v1770
        %v1779 = vmax.f32 %v1763, %v1771
        %v1780 = vmax.f32 %v1764, %v1772
        %v1781 = vmax.f32 %v1765, %v1773
        %1782 = vset.pattern.permute.xlu0 13
        %1783 = vperm.xlu0 %1782, %v741
        %v1784 = vpop.permute.xlu0 %1783
        %v1786 = vmul.f32 %v1784, %v1774
        %v1787 = vmul.f32 %v1784, %v1775
        %v1788 = vmul.f32 %v1784, %v1776
        %v1789 = vmul.f32 %v1784, %v1777
        %v1790 = vmul.f32 %v1784, %v1778
        %v1791 = vmul.f32 %v1784, %v1779
        %v1792 = vmul.f32 %v1784, %v1780
        %v1793 = vmul.f32 %v1784, %v1781
        %v1794 = vadd.f32 %v1714, %v1786
        %v1795 = vadd.f32 %v1715, %v1787
        %v1796 = vadd.f32 %v1716, %v1788
        %v1797 = vadd.f32 %v1717, %v1789
        %v1798 = vadd.f32 %v1718, %v1790
        %v1799 = vadd.f32 %v1719, %v1791
        %v1800 = vadd.f32 %v1720, %v1792
        %v1801 = vadd.f32 %v1721, %v1793
        %1802 = vset.pattern.permute.xlu0 14
        %1803 = vperm.xlu0 %1802, %v660
        %v1804 = vpop.permute.xlu0 %1803
        %1806 = vset.pattern.permute.xlu0 14
        %1807 = vperm.xlu0 %1806, %v661
        %v1808 = vpop.permute.xlu0 %1807
        %1810 = vset.pattern.permute.xlu0 14
        %1811 = vperm.xlu0 %1810, %v662
        %v1812 = vpop.permute.xlu0 %1811
        %1814 = vset.pattern.permute.xlu0 14
        %1815 = vperm.xlu0 %1814, %v663
        %v1816 = vpop.permute.xlu0 %1815
        %1818 = vset.pattern.permute.xlu0 14
        %1819 = vperm.xlu0 %1818, %v664
        %v1820 = vpop.permute.xlu0 %1819
        %1822 = vset.pattern.permute.xlu0 14
        %1823 = vperm.xlu0 %1822, %v665
        %v1824 = vpop.permute.xlu0 %1823
        %1826 = vset.pattern.permute.xlu0 14
        %1827 = vperm.xlu0 %1826, %v666
        %v1828 = vpop.permute.xlu0 %1827
        %1830 = vset.pattern.permute.xlu0 14
        %1831 = vperm.xlu0 %1830, %v667
        %v1832 = vpop.permute.xlu0 %1831
        %v1834 = vlaneseq
        %v1835 = vshrl.u32 %v1834, 7
        %v1836 = vsub.s32 6, %v1835
        %v1837 = vrot.slane %v649, %v1836
        %v1838 = vadd.f32 %v1804, %v1837
        %v1839 = vadd.f32 %v1808, %v1837
        %v1840 = vadd.f32 %v1812, %v1837
        %v1841 = vadd.f32 %v1816, %v1837
        %v1842 = vadd.f32 %v1820, %v1837
        %v1843 = vadd.f32 %v1824, %v1837
        %v1844 = vadd.f32 %v1828, %v1837
        %v1845 = vadd.f32 %v1832, %v1837
        %v1846 = vmul.f32 %v1838, 0.2
        %v1847 = vmul.f32 %v1839, 0.2
        %v1848 = vmul.f32 %v1840, 0.2
        %v1849 = vmul.f32 %v1841, 0.2
        %v1850 = vmul.f32 %v1842, 0.2
        %v1851 = vmul.f32 %v1843, 0.2
        %v1852 = vmul.f32 %v1844, 0.2
        %v1853 = vmul.f32 %v1845, 0.2
        %v1854 = vmax.f32 %v1838, %v1846
        %v1855 = vmax.f32 %v1839, %v1847
        %v1856 = vmax.f32 %v1840, %v1848
        %v1857 = vmax.f32 %v1841, %v1849
        %v1858 = vmax.f32 %v1842, %v1850
        %v1859 = vmax.f32 %v1843, %v1851
        %v1860 = vmax.f32 %v1844, %v1852
        %v1861 = vmax.f32 %v1845, %v1853
        %1862 = vset.pattern.permute.xlu0 14
        %1863 = vperm.xlu0 %1862, %v741
        %v1864 = vpop.permute.xlu0 %1863
        %v1866 = vmul.f32 %v1864, %v1854
        %v1867 = vmul.f32 %v1864, %v1855
        %v1868 = vmul.f32 %v1864, %v1856
        %v1869 = vmul.f32 %v1864, %v1857
        %v1870 = vmul.f32 %v1864, %v1858
        %v1871 = vmul.f32 %v1864, %v1859
        %v1872 = vmul.f32 %v1864, %v1860
        %v1873 = vmul.f32 %v1864, %v1861
        %v1874 = vadd.f32 %v1794, %v1866
        %v1875 = vadd.f32 %v1795, %v1867
        %v1876 = vadd.f32 %v1796, %v1868
        %v1877 = vadd.f32 %v1797, %v1869
        %v1878 = vadd.f32 %v1798, %v1870
        %v1879 = vadd.f32 %v1799, %v1871
        %v1880 = vadd.f32 %v1800, %v1872
        %v1881 = vadd.f32 %v1801, %v1873
        %1882 = vset.pattern.permute.xlu0 15
        %1883 = vperm.xlu0 %1882, %v660
        %v1884 = vpop.permute.xlu0 %1883
        %1886 = vset.pattern.permute.xlu0 15
        %1887 = vperm.xlu0 %1886, %v661
        %v1888 = vpop.permute.xlu0 %1887
        %1890 = vset.pattern.permute.xlu0 15
        %1891 = vperm.xlu0 %1890, %v662
        %v1892 = vpop.permute.xlu0 %1891
        %1894 = vset.pattern.permute.xlu0 15
        %1895 = vperm.xlu0 %1894, %v663
        %v1896 = vpop.permute.xlu0 %1895
        %1898 = vset.pattern.permute.xlu0 15
        %1899 = vperm.xlu0 %1898, %v664
        %v1900 = vpop.permute.xlu0 %1899
        %1902 = vset.pattern.permute.xlu0 15
        %1903 = vperm.xlu0 %1902, %v665
        %v1904 = vpop.permute.xlu0 %1903
        %1906 = vset.pattern.permute.xlu0 15
        %1907 = vperm.xlu0 %1906, %v666
        %v1908 = vpop.permute.xlu0 %1907
        %1910 = vset.pattern.permute.xlu0 15
        %1911 = vperm.xlu0 %1910, %v667
        %v1912 = vpop.permute.xlu0 %1911
        %v1914 = vlaneseq
        %v1915 = vshrl.u32 %v1914, 7
        %v1916 = vsub.s32 7, %v1915
        %v1917 = vrot.slane %v649, %v1916
        %v1918 = vadd.f32 %v1884, %v1917
        %v1919 = vadd.f32 %v1888, %v1917
        %v1920 = vadd.f32 %v1892, %v1917
        %v1921 = vadd.f32 %v1896, %v1917
        %v1922 = vadd.f32 %v1900, %v1917
        %v1923 = vadd.f32 %v1904, %v1917
        %v1924 = vadd.f32 %v1908, %v1917
        %v1925 = vadd.f32 %v1912, %v1917
        %v1926 = vmul.f32 %v1918, 0.2
        %v1927 = vmul.f32 %v1919, 0.2
        %v1928 = vmul.f32 %v1920, 0.2
        %v1929 = vmul.f32 %v1921, 0.2
        %v1930 = vmul.f32 %v1922, 0.2
        %v1931 = vmul.f32 %v1923, 0.2
        %v1932 = vmul.f32 %v1924, 0.2
        %v1933 = vmul.f32 %v1925, 0.2
        %v1934 = vmax.f32 %v1918, %v1926
        %v1935 = vmax.f32 %v1919, %v1927
        %v1936 = vmax.f32 %v1920, %v1928
        %v1937 = vmax.f32 %v1921, %v1929
        %v1938 = vmax.f32 %v1922, %v1930
        %v1939 = vmax.f32 %v1923, %v1931
        %v1940 = vmax.f32 %v1924, %v1932
        %v1941 = vmax.f32 %v1925, %v1933
        %1942 = vset.pattern.permute.xlu0 15
        %1943 = vperm.xlu0 %1942, %v741
        %v1944 = vpop.permute.xlu0 %1943
        %v1946 = vmul.f32 %v1944, %v1934
        %v1947 = vmul.f32 %v1944, %v1935
        %v1948 = vmul.f32 %v1944, %v1936
        %v1949 = vmul.f32 %v1944, %v1937
        %v1950 = vmul.f32 %v1944, %v1938
        %v1951 = vmul.f32 %v1944, %v1939
        %v1952 = vmul.f32 %v1944, %v1940
        %v1953 = vmul.f32 %v1944, %v1941
        %v1954 = vadd.f32 %v1874, %v1946
        %v1955 = vadd.f32 %v1875, %v1947
        %v1956 = vadd.f32 %v1876, %v1948
        %v1957 = vadd.f32 %v1877, %v1949
        %v1958 = vadd.f32 %v1878, %v1950
        %v1959 = vadd.f32 %v1879, %v1951
        %v1960 = vadd.f32 %v1880, %v1952
        %v1961 = vadd.f32 %v1881, %v1953
        %1962 = vset.pattern.permute.xlu0 16
        %1963 = vperm.xlu0 %1962, %v660
        %v1964 = vpop.permute.xlu0 %1963
        %1966 = vset.pattern.permute.xlu0 16
        %1967 = vperm.xlu0 %1966, %v661
        %v1968 = vpop.permute.xlu0 %1967
        %1970 = vset.pattern.permute.xlu0 16
        %1971 = vperm.xlu0 %1970, %v662
        %v1972 = vpop.permute.xlu0 %1971
        %1974 = vset.pattern.permute.xlu0 16
        %1975 = vperm.xlu0 %1974, %v663
        %v1976 = vpop.permute.xlu0 %1975
        %1978 = vset.pattern.permute.xlu0 16
        %1979 = vperm.xlu0 %1978, %v664
        %v1980 = vpop.permute.xlu0 %1979
        %1982 = vset.pattern.permute.xlu0 16
        %1983 = vperm.xlu0 %1982, %v665
        %v1984 = vpop.permute.xlu0 %1983
        %1986 = vset.pattern.permute.xlu0 16
        %1987 = vperm.xlu0 %1986, %v666
        %v1988 = vpop.permute.xlu0 %1987
        %1990 = vset.pattern.permute.xlu0 16
        %1991 = vperm.xlu0 %1990, %v667
        %v1992 = vpop.permute.xlu0 %1991
        %v1994 = vlaneseq
        %v1995 = vshrl.u32 %v1994, 7
        %v1996 = vsub.s32 0, %v1995
        %v1997 = vrot.slane %v654, %v1996
        %v1998 = vadd.f32 %v1964, %v1997
        %v1999 = vadd.f32 %v1968, %v1997
        %v2000 = vadd.f32 %v1972, %v1997
        %v2001 = vadd.f32 %v1976, %v1997
        %v2002 = vadd.f32 %v1980, %v1997
        %v2003 = vadd.f32 %v1984, %v1997
        %v2004 = vadd.f32 %v1988, %v1997
        %v2005 = vadd.f32 %v1992, %v1997
        %v2006 = vmul.f32 %v1998, 0.2
        %v2007 = vmul.f32 %v1999, 0.2
        %v2008 = vmul.f32 %v2000, 0.2
        %v2009 = vmul.f32 %v2001, 0.2
        %v2010 = vmul.f32 %v2002, 0.2
        %v2011 = vmul.f32 %v2003, 0.2
        %v2012 = vmul.f32 %v2004, 0.2
        %v2013 = vmul.f32 %v2005, 0.2
        %v2014 = vmax.f32 %v1998, %v2006
        %v2015 = vmax.f32 %v1999, %v2007
        %v2016 = vmax.f32 %v2000, %v2008
        %v2017 = vmax.f32 %v2001, %v2009
        %v2018 = vmax.f32 %v2002, %v2010
        %v2019 = vmax.f32 %v2003, %v2011
        %v2020 = vmax.f32 %v2004, %v2012
        %v2021 = vmax.f32 %v2005, %v2013
        %2022 = vset.pattern.permute.xlu0 16
        %2023 = vperm.xlu0 %2022, %v741
        %v2024 = vpop.permute.xlu0 %2023
        %v2026 = vmul.f32 %v2024, %v2014
        %v2027 = vmul.f32 %v2024, %v2015
        %v2028 = vmul.f32 %v2024, %v2016
        %v2029 = vmul.f32 %v2024, %v2017
        %v2030 = vmul.f32 %v2024, %v2018
        %v2031 = vmul.f32 %v2024, %v2019
        %v2032 = vmul.f32 %v2024, %v2020
        %v2033 = vmul.f32 %v2024, %v2021
        %v2034 = vadd.f32 %v1954, %v2026
        %v2035 = vadd.f32 %v1955, %v2027
        %v2036 = vadd.f32 %v1956, %v2028
        %v2037 = vadd.f32 %v1957, %v2029
        %v2038 = vadd.f32 %v1958, %v2030
        %v2039 = vadd.f32 %v1959, %v2031
        %v2040 = vadd.f32 %v1960, %v2032
        %v2041 = vadd.f32 %v1961, %v2033
        %2042 = vset.pattern.permute.xlu0 17
        %2043 = vperm.xlu0 %2042, %v660
        %v2044 = vpop.permute.xlu0 %2043
        %2046 = vset.pattern.permute.xlu0 17
        %2047 = vperm.xlu0 %2046, %v661
        %v2048 = vpop.permute.xlu0 %2047
        %2050 = vset.pattern.permute.xlu0 17
        %2051 = vperm.xlu0 %2050, %v662
        %v2052 = vpop.permute.xlu0 %2051
        %2054 = vset.pattern.permute.xlu0 17
        %2055 = vperm.xlu0 %2054, %v663
        %v2056 = vpop.permute.xlu0 %2055
        %2058 = vset.pattern.permute.xlu0 17
        %2059 = vperm.xlu0 %2058, %v664
        %v2060 = vpop.permute.xlu0 %2059
        %2062 = vset.pattern.permute.xlu0 17
        %2063 = vperm.xlu0 %2062, %v665
        %v2064 = vpop.permute.xlu0 %2063
        %2066 = vset.pattern.permute.xlu0 17
        %2067 = vperm.xlu0 %2066, %v666
        %v2068 = vpop.permute.xlu0 %2067
        %2070 = vset.pattern.permute.xlu0 17
        %2071 = vperm.xlu0 %2070, %v667
        %v2072 = vpop.permute.xlu0 %2071
        %v2074 = vlaneseq
        %v2075 = vshrl.u32 %v2074, 7
        %v2076 = vsub.s32 1, %v2075
        %v2077 = vrot.slane %v654, %v2076
        %v2078 = vadd.f32 %v2044, %v2077
        %v2079 = vadd.f32 %v2048, %v2077
        %v2080 = vadd.f32 %v2052, %v2077
        %v2081 = vadd.f32 %v2056, %v2077
        %v2082 = vadd.f32 %v2060, %v2077
        %v2083 = vadd.f32 %v2064, %v2077
        %v2084 = vadd.f32 %v2068, %v2077
        %v2085 = vadd.f32 %v2072, %v2077
        %v2086 = vmul.f32 %v2078, 0.2
        %v2087 = vmul.f32 %v2079, 0.2
        %v2088 = vmul.f32 %v2080, 0.2
        %v2089 = vmul.f32 %v2081, 0.2
        %v2090 = vmul.f32 %v2082, 0.2
        %v2091 = vmul.f32 %v2083, 0.2
        %v2092 = vmul.f32 %v2084, 0.2
        %v2093 = vmul.f32 %v2085, 0.2
        %v2094 = vmax.f32 %v2078, %v2086
        %v2095 = vmax.f32 %v2079, %v2087
        %v2096 = vmax.f32 %v2080, %v2088
        %v2097 = vmax.f32 %v2081, %v2089
        %v2098 = vmax.f32 %v2082, %v2090
        %v2099 = vmax.f32 %v2083, %v2091
        %v2100 = vmax.f32 %v2084, %v2092
        %v2101 = vmax.f32 %v2085, %v2093
        %2102 = vset.pattern.permute.xlu0 17
        %2103 = vperm.xlu0 %2102, %v741
        %v2104 = vpop.permute.xlu0 %2103
        %v2106 = vmul.f32 %v2104, %v2094
        %v2107 = vmul.f32 %v2104, %v2095
        %v2108 = vmul.f32 %v2104, %v2096
        %v2109 = vmul.f32 %v2104, %v2097
        %v2110 = vmul.f32 %v2104, %v2098
        %v2111 = vmul.f32 %v2104, %v2099
        %v2112 = vmul.f32 %v2104, %v2100
        %v2113 = vmul.f32 %v2104, %v2101
        %v2114 = vadd.f32 %v2034, %v2106
        %v2115 = vadd.f32 %v2035, %v2107
        %v2116 = vadd.f32 %v2036, %v2108
        %v2117 = vadd.f32 %v2037, %v2109
        %v2118 = vadd.f32 %v2038, %v2110
        %v2119 = vadd.f32 %v2039, %v2111
        %v2120 = vadd.f32 %v2040, %v2112
        %v2121 = vadd.f32 %v2041, %v2113
        %2122 = vset.pattern.permute.xlu0 18
        %2123 = vperm.xlu0 %2122, %v660
        %v2124 = vpop.permute.xlu0 %2123
        %2126 = vset.pattern.permute.xlu0 18
        %2127 = vperm.xlu0 %2126, %v661
        %v2128 = vpop.permute.xlu0 %2127
        %2130 = vset.pattern.permute.xlu0 18
        %2131 = vperm.xlu0 %2130, %v662
        %v2132 = vpop.permute.xlu0 %2131
        %2134 = vset.pattern.permute.xlu0 18
        %2135 = vperm.xlu0 %2134, %v663
        %v2136 = vpop.permute.xlu0 %2135
        %2138 = vset.pattern.permute.xlu0 18
        %2139 = vperm.xlu0 %2138, %v664
        %v2140 = vpop.permute.xlu0 %2139
        %2142 = vset.pattern.permute.xlu0 18
        %2143 = vperm.xlu0 %2142, %v665
        %v2144 = vpop.permute.xlu0 %2143
        %2146 = vset.pattern.permute.xlu0 18
        %2147 = vperm.xlu0 %2146, %v666
        %v2148 = vpop.permute.xlu0 %2147
        %2150 = vset.pattern.permute.xlu0 18
        %2151 = vperm.xlu0 %2150, %v667
        %v2152 = vpop.permute.xlu0 %2151
        %v2154 = vlaneseq
        %v2155 = vshrl.u32 %v2154, 7
        %v2156 = vsub.s32 2, %v2155
        %v2157 = vrot.slane %v654, %v2156
        %v2158 = vadd.f32 %v2124, %v2157
        %v2159 = vadd.f32 %v2128, %v2157
        %v2160 = vadd.f32 %v2132, %v2157
        %v2161 = vadd.f32 %v2136, %v2157
        %v2162 = vadd.f32 %v2140, %v2157
        %v2163 = vadd.f32 %v2144, %v2157
        %v2164 = vadd.f32 %v2148, %v2157
        %v2165 = vadd.f32 %v2152, %v2157
        %v2166 = vmul.f32 %v2158, 0.2
        %v2167 = vmul.f32 %v2159, 0.2
        %v2168 = vmul.f32 %v2160, 0.2
        %v2169 = vmul.f32 %v2161, 0.2
        %v2170 = vmul.f32 %v2162, 0.2
        %v2171 = vmul.f32 %v2163, 0.2
        %v2172 = vmul.f32 %v2164, 0.2
        %v2173 = vmul.f32 %v2165, 0.2
        %v2174 = vmax.f32 %v2158, %v2166
        %v2175 = vmax.f32 %v2159, %v2167
        %v2176 = vmax.f32 %v2160, %v2168
        %v2177 = vmax.f32 %v2161, %v2169
        %v2178 = vmax.f32 %v2162, %v2170
        %v2179 = vmax.f32 %v2163, %v2171
        %v2180 = vmax.f32 %v2164, %v2172
        %v2181 = vmax.f32 %v2165, %v2173
        %2182 = vset.pattern.permute.xlu0 18
        %2183 = vperm.xlu0 %2182, %v741
        %v2184 = vpop.permute.xlu0 %2183
        %v2186 = vmul.f32 %v2184, %v2174
        %v2187 = vmul.f32 %v2184, %v2175
        %v2188 = vmul.f32 %v2184, %v2176
        %v2189 = vmul.f32 %v2184, %v2177
        %v2190 = vmul.f32 %v2184, %v2178
        %v2191 = vmul.f32 %v2184, %v2179
        %v2192 = vmul.f32 %v2184, %v2180
        %v2193 = vmul.f32 %v2184, %v2181
        %v2194 = vadd.f32 %v2114, %v2186
        %v2195 = vadd.f32 %v2115, %v2187
        %v2196 = vadd.f32 %v2116, %v2188
        %v2197 = vadd.f32 %v2117, %v2189
        %v2198 = vadd.f32 %v2118, %v2190
        %v2199 = vadd.f32 %v2119, %v2191
        %v2200 = vadd.f32 %v2120, %v2192
        %v2201 = vadd.f32 %v2121, %v2193
        %2202 = vset.pattern.permute.xlu0 19
        %2203 = vperm.xlu0 %2202, %v660
        %v2204 = vpop.permute.xlu0 %2203
        %2206 = vset.pattern.permute.xlu0 19
        %2207 = vperm.xlu0 %2206, %v661
        %v2208 = vpop.permute.xlu0 %2207
        %2210 = vset.pattern.permute.xlu0 19
        %2211 = vperm.xlu0 %2210, %v662
        %v2212 = vpop.permute.xlu0 %2211
        %2214 = vset.pattern.permute.xlu0 19
        %2215 = vperm.xlu0 %2214, %v663
        %v2216 = vpop.permute.xlu0 %2215
        %2218 = vset.pattern.permute.xlu0 19
        %2219 = vperm.xlu0 %2218, %v664
        %v2220 = vpop.permute.xlu0 %2219
        %2222 = vset.pattern.permute.xlu0 19
        %2223 = vperm.xlu0 %2222, %v665
        %v2224 = vpop.permute.xlu0 %2223
        %2226 = vset.pattern.permute.xlu0 19
        %2227 = vperm.xlu0 %2226, %v666
        %v2228 = vpop.permute.xlu0 %2227
        %2230 = vset.pattern.permute.xlu0 19
        %2231 = vperm.xlu0 %2230, %v667
        %v2232 = vpop.permute.xlu0 %2231
        %v2234 = vlaneseq
        %v2235 = vshrl.u32 %v2234, 7
        %v2236 = vsub.s32 3, %v2235
        %v2237 = vrot.slane %v654, %v2236
        %v2238 = vadd.f32 %v2204, %v2237
        %v2239 = vadd.f32 %v2208, %v2237
        %v2240 = vadd.f32 %v2212, %v2237
        %v2241 = vadd.f32 %v2216, %v2237
        %v2242 = vadd.f32 %v2220, %v2237
        %v2243 = vadd.f32 %v2224, %v2237
        %v2244 = vadd.f32 %v2228, %v2237
        %v2245 = vadd.f32 %v2232, %v2237
        %v2246 = vmul.f32 %v2238, 0.2
        %v2247 = vmul.f32 %v2239, 0.2
        %v2248 = vmul.f32 %v2240, 0.2
        %v2249 = vmul.f32 %v2241, 0.2
        %v2250 = vmul.f32 %v2242, 0.2
        %v2251 = vmul.f32 %v2243, 0.2
        %v2252 = vmul.f32 %v2244, 0.2
        %v2253 = vmul.f32 %v2245, 0.2
        %v2254 = vmax.f32 %v2238, %v2246
        %v2255 = vmax.f32 %v2239, %v2247
        %v2256 = vmax.f32 %v2240, %v2248
        %v2257 = vmax.f32 %v2241, %v2249
        %v2258 = vmax.f32 %v2242, %v2250
        %v2259 = vmax.f32 %v2243, %v2251
        %v2260 = vmax.f32 %v2244, %v2252
        %v2261 = vmax.f32 %v2245, %v2253
        %2262 = vset.pattern.permute.xlu0 19
        %2263 = vperm.xlu0 %2262, %v741
        %v2264 = vpop.permute.xlu0 %2263
        %v2266 = vmul.f32 %v2264, %v2254
        %v2267 = vmul.f32 %v2264, %v2255
        %v2268 = vmul.f32 %v2264, %v2256
        %v2269 = vmul.f32 %v2264, %v2257
        %v2270 = vmul.f32 %v2264, %v2258
        %v2271 = vmul.f32 %v2264, %v2259
        %v2272 = vmul.f32 %v2264, %v2260
        %v2273 = vmul.f32 %v2264, %v2261
        %v2274 = vadd.f32 %v2194, %v2266
        %v2275 = vadd.f32 %v2195, %v2267
        %v2276 = vadd.f32 %v2196, %v2268
        %v2277 = vadd.f32 %v2197, %v2269
        %v2278 = vadd.f32 %v2198, %v2270
        %v2279 = vadd.f32 %v2199, %v2271
        %v2280 = vadd.f32 %v2200, %v2272
        %v2281 = vadd.f32 %v2201, %v2273
        %2282 = vset.pattern.permute.xlu0 20
        %2283 = vperm.xlu0 %2282, %v660
        %v2284 = vpop.permute.xlu0 %2283
        %2286 = vset.pattern.permute.xlu0 20
        %2287 = vperm.xlu0 %2286, %v661
        %v2288 = vpop.permute.xlu0 %2287
        %2290 = vset.pattern.permute.xlu0 20
        %2291 = vperm.xlu0 %2290, %v662
        %v2292 = vpop.permute.xlu0 %2291
        %2294 = vset.pattern.permute.xlu0 20
        %2295 = vperm.xlu0 %2294, %v663
        %v2296 = vpop.permute.xlu0 %2295
        %2298 = vset.pattern.permute.xlu0 20
        %2299 = vperm.xlu0 %2298, %v664
        %v2300 = vpop.permute.xlu0 %2299
        %2302 = vset.pattern.permute.xlu0 20
        %2303 = vperm.xlu0 %2302, %v665
        %v2304 = vpop.permute.xlu0 %2303
        %2306 = vset.pattern.permute.xlu0 20
        %2307 = vperm.xlu0 %2306, %v666
        %v2308 = vpop.permute.xlu0 %2307
        %2310 = vset.pattern.permute.xlu0 20
        %2311 = vperm.xlu0 %2310, %v667
        %v2312 = vpop.permute.xlu0 %2311
        %v2314 = vlaneseq
        %v2315 = vshrl.u32 %v2314, 7
        %v2316 = vsub.s32 4, %v2315
        %v2317 = vrot.slane %v654, %v2316
        %v2318 = vadd.f32 %v2284, %v2317
        %v2319 = vadd.f32 %v2288, %v2317
        %v2320 = vadd.f32 %v2292, %v2317
        %v2321 = vadd.f32 %v2296, %v2317
        %v2322 = vadd.f32 %v2300, %v2317
        %v2323 = vadd.f32 %v2304, %v2317
        %v2324 = vadd.f32 %v2308, %v2317
        %v2325 = vadd.f32 %v2312, %v2317
        %v2326 = vmul.f32 %v2318, 0.2
        %v2327 = vmul.f32 %v2319, 0.2
        %v2328 = vmul.f32 %v2320, 0.2
        %v2329 = vmul.f32 %v2321, 0.2
        %v2330 = vmul.f32 %v2322, 0.2
        %v2331 = vmul.f32 %v2323, 0.2
        %v2332 = vmul.f32 %v2324, 0.2
        %v2333 = vmul.f32 %v2325, 0.2
        %v2334 = vmax.f32 %v2318, %v2326
        %v2335 = vmax.f32 %v2319, %v2327
        %v2336 = vmax.f32 %v2320, %v2328
        %v2337 = vmax.f32 %v2321, %v2329
        %v2338 = vmax.f32 %v2322, %v2330
        %v2339 = vmax.f32 %v2323, %v2331
        %v2340 = vmax.f32 %v2324, %v2332
        %v2341 = vmax.f32 %v2325, %v2333
        %2342 = vset.pattern.permute.xlu0 20
        %2343 = vperm.xlu0 %2342, %v741
        %v2344 = vpop.permute.xlu0 %2343
        %v2346 = vmul.f32 %v2344, %v2334
        %v2347 = vmul.f32 %v2344, %v2335
        %v2348 = vmul.f32 %v2344, %v2336
        %v2349 = vmul.f32 %v2344, %v2337
        %v2350 = vmul.f32 %v2344, %v2338
        %v2351 = vmul.f32 %v2344, %v2339
        %v2352 = vmul.f32 %v2344, %v2340
        %v2353 = vmul.f32 %v2344, %v2341
        %v2354 = vadd.f32 %v2274, %v2346
        %v2355 = vadd.f32 %v2275, %v2347
        %v2356 = vadd.f32 %v2276, %v2348
        %v2357 = vadd.f32 %v2277, %v2349
        %v2358 = vadd.f32 %v2278, %v2350
        %v2359 = vadd.f32 %v2279, %v2351
        %v2360 = vadd.f32 %v2280, %v2352
        %v2361 = vadd.f32 %v2281, %v2353
        %2362 = vset.pattern.permute.xlu0 21
        %2363 = vperm.xlu0 %2362, %v660
        %v2364 = vpop.permute.xlu0 %2363
        %2366 = vset.pattern.permute.xlu0 21
        %2367 = vperm.xlu0 %2366, %v661
        %v2368 = vpop.permute.xlu0 %2367
        %2370 = vset.pattern.permute.xlu0 21
        %2371 = vperm.xlu0 %2370, %v662
        %v2372 = vpop.permute.xlu0 %2371
        %2374 = vset.pattern.permute.xlu0 21
        %2375 = vperm.xlu0 %2374, %v663
        %v2376 = vpop.permute.xlu0 %2375
        %2378 = vset.pattern.permute.xlu0 21
        %2379 = vperm.xlu0 %2378, %v664
        %v2380 = vpop.permute.xlu0 %2379
        %2382 = vset.pattern.permute.xlu0 21
        %2383 = vperm.xlu0 %2382, %v665
        %v2384 = vpop.permute.xlu0 %2383
        %2386 = vset.pattern.permute.xlu0 21
        %2387 = vperm.xlu0 %2386, %v666
        %v2388 = vpop.permute.xlu0 %2387
        %2390 = vset.pattern.permute.xlu0 21
        %2391 = vperm.xlu0 %2390, %v667
        %v2392 = vpop.permute.xlu0 %2391
        %v2394 = vlaneseq
        %v2395 = vshrl.u32 %v2394, 7
        %v2396 = vsub.s32 5, %v2395
        %v2397 = vrot.slane %v654, %v2396
        %v2398 = vadd.f32 %v2364, %v2397
        %v2399 = vadd.f32 %v2368, %v2397
        %v2400 = vadd.f32 %v2372, %v2397
        %v2401 = vadd.f32 %v2376, %v2397
        %v2402 = vadd.f32 %v2380, %v2397
        %v2403 = vadd.f32 %v2384, %v2397
        %v2404 = vadd.f32 %v2388, %v2397
        %v2405 = vadd.f32 %v2392, %v2397
        %v2406 = vmul.f32 %v2398, 0.2
        %v2407 = vmul.f32 %v2399, 0.2
        %v2408 = vmul.f32 %v2400, 0.2
        %v2409 = vmul.f32 %v2401, 0.2
        %v2410 = vmul.f32 %v2402, 0.2
        %v2411 = vmul.f32 %v2403, 0.2
        %v2412 = vmul.f32 %v2404, 0.2
        %v2413 = vmul.f32 %v2405, 0.2
        %v2414 = vmax.f32 %v2398, %v2406
        %v2415 = vmax.f32 %v2399, %v2407
        %v2416 = vmax.f32 %v2400, %v2408
        %v2417 = vmax.f32 %v2401, %v2409
        %v2418 = vmax.f32 %v2402, %v2410
        %v2419 = vmax.f32 %v2403, %v2411
        %v2420 = vmax.f32 %v2404, %v2412
        %v2421 = vmax.f32 %v2405, %v2413
        %2422 = vset.pattern.permute.xlu0 21
        %2423 = vperm.xlu0 %2422, %v741
        %v2424 = vpop.permute.xlu0 %2423
        %v2426 = vmul.f32 %v2424, %v2414
        %v2427 = vmul.f32 %v2424, %v2415
        %v2428 = vmul.f32 %v2424, %v2416
        %v2429 = vmul.f32 %v2424, %v2417
        %v2430 = vmul.f32 %v2424, %v2418
        %v2431 = vmul.f32 %v2424, %v2419
        %v2432 = vmul.f32 %v2424, %v2420
        %v2433 = vmul.f32 %v2424, %v2421
        %v2434 = vadd.f32 %v2354, %v2426
        %v2435 = vadd.f32 %v2355, %v2427
        %v2436 = vadd.f32 %v2356, %v2428
        %v2437 = vadd.f32 %v2357, %v2429
        %v2438 = vadd.f32 %v2358, %v2430
        %v2439 = vadd.f32 %v2359, %v2431
        %v2440 = vadd.f32 %v2360, %v2432
        %v2441 = vadd.f32 %v2361, %v2433
        %2442 = vset.pattern.permute.xlu0 22
        %2443 = vperm.xlu0 %2442, %v660
        %v2444 = vpop.permute.xlu0 %2443
        %2446 = vset.pattern.permute.xlu0 22
        %2447 = vperm.xlu0 %2446, %v661
        %v2448 = vpop.permute.xlu0 %2447
        %2450 = vset.pattern.permute.xlu0 22
        %2451 = vperm.xlu0 %2450, %v662
        %v2452 = vpop.permute.xlu0 %2451
        %2454 = vset.pattern.permute.xlu0 22
        %2455 = vperm.xlu0 %2454, %v663
        %v2456 = vpop.permute.xlu0 %2455
        %2458 = vset.pattern.permute.xlu0 22
        %2459 = vperm.xlu0 %2458, %v664
        %v2460 = vpop.permute.xlu0 %2459
        %2462 = vset.pattern.permute.xlu0 22
        %2463 = vperm.xlu0 %2462, %v665
        %v2464 = vpop.permute.xlu0 %2463
        %2466 = vset.pattern.permute.xlu0 22
        %2467 = vperm.xlu0 %2466, %v666
        %v2468 = vpop.permute.xlu0 %2467
        %2470 = vset.pattern.permute.xlu0 22
        %2471 = vperm.xlu0 %2470, %v667
        %v2472 = vpop.permute.xlu0 %2471
        %v2474 = vlaneseq
        %v2475 = vshrl.u32 %v2474, 7
        %v2476 = vsub.s32 6, %v2475
        %v2477 = vrot.slane %v654, %v2476
        %v2478 = vadd.f32 %v2444, %v2477
        %v2479 = vadd.f32 %v2448, %v2477
        %v2480 = vadd.f32 %v2452, %v2477
        %v2481 = vadd.f32 %v2456, %v2477
        %v2482 = vadd.f32 %v2460, %v2477
        %v2483 = vadd.f32 %v2464, %v2477
        %v2484 = vadd.f32 %v2468, %v2477
        %v2485 = vadd.f32 %v2472, %v2477
        %v2486 = vmul.f32 %v2478, 0.2
        %v2487 = vmul.f32 %v2479, 0.2
        %v2488 = vmul.f32 %v2480, 0.2
        %v2489 = vmul.f32 %v2481, 0.2
        %v2490 = vmul.f32 %v2482, 0.2
        %v2491 = vmul.f32 %v2483, 0.2
        %v2492 = vmul.f32 %v2484, 0.2
        %v2493 = vmul.f32 %v2485, 0.2
        %v2494 = vmax.f32 %v2478, %v2486
        %v2495 = vmax.f32 %v2479, %v2487
        %v2496 = vmax.f32 %v2480, %v2488
        %v2497 = vmax.f32 %v2481, %v2489
        %v2498 = vmax.f32 %v2482, %v2490
        %v2499 = vmax.f32 %v2483, %v2491
        %v2500 = vmax.f32 %v2484, %v2492
        %v2501 = vmax.f32 %v2485, %v2493
        %2502 = vset.pattern.permute.xlu0 22
        %2503 = vperm.xlu0 %2502, %v741
        %v2504 = vpop.permute.xlu0 %2503
        %v2506 = vmul.f32 %v2504, %v2494
        %v2507 = vmul.f32 %v2504, %v2495
        %v2508 = vmul.f32 %v2504, %v2496
        %v2509 = vmul.f32 %v2504, %v2497
        %v2510 = vmul.f32 %v2504, %v2498
        %v2511 = vmul.f32 %v2504, %v2499
        %v2512 = vmul.f32 %v2504, %v2500
        %v2513 = vmul.f32 %v2504, %v2501
        %v2514 = vadd.f32 %v2434, %v2506
        %v2515 = vadd.f32 %v2435, %v2507
        %v2516 = vadd.f32 %v2436, %v2508
        %v2517 = vadd.f32 %v2437, %v2509
        %v2518 = vadd.f32 %v2438, %v2510
        %v2519 = vadd.f32 %v2439, %v2511
        %v2520 = vadd.f32 %v2440, %v2512
        %v2521 = vadd.f32 %v2441, %v2513
        %2522 = vset.pattern.permute.xlu0 23
        %2523 = vperm.xlu0 %2522, %v660
        %v2524 = vpop.permute.xlu0 %2523
        %2526 = vset.pattern.permute.xlu0 23
        %2527 = vperm.xlu0 %2526, %v661
        %v2528 = vpop.permute.xlu0 %2527
        %2530 = vset.pattern.permute.xlu0 23
        %2531 = vperm.xlu0 %2530, %v662
        %v2532 = vpop.permute.xlu0 %2531
        %2534 = vset.pattern.permute.xlu0 23
        %2535 = vperm.xlu0 %2534, %v663
        %v2536 = vpop.permute.xlu0 %2535
        %2538 = vset.pattern.permute.xlu0 23
        %2539 = vperm.xlu0 %2538, %v664
        %v2540 = vpop.permute.xlu0 %2539
        %2542 = vset.pattern.permute.xlu0 23
        %2543 = vperm.xlu0 %2542, %v665
        %v2544 = vpop.permute.xlu0 %2543
        %2546 = vset.pattern.permute.xlu0 23
        %2547 = vperm.xlu0 %2546, %v666
        %v2548 = vpop.permute.xlu0 %2547
        %2550 = vset.pattern.permute.xlu0 23
        %2551 = vperm.xlu0 %2550, %v667
        %v2552 = vpop.permute.xlu0 %2551
        %v2554 = vlaneseq
        %v2555 = vshrl.u32 %v2554, 7
        %v2556 = vsub.s32 7, %v2555
        %v2557 = vrot.slane %v654, %v2556
        %v2558 = vadd.f32 %v2524, %v2557
        %v2559 = vadd.f32 %v2528, %v2557
        %v2560 = vadd.f32 %v2532, %v2557
        %v2561 = vadd.f32 %v2536, %v2557
        %v2562 = vadd.f32 %v2540, %v2557
        %v2563 = vadd.f32 %v2544, %v2557
        %v2564 = vadd.f32 %v2548, %v2557
        %v2565 = vadd.f32 %v2552, %v2557
        %v2566 = vmul.f32 %v2558, 0.2
        %v2567 = vmul.f32 %v2559, 0.2
        %v2568 = vmul.f32 %v2560, 0.2
        %v2569 = vmul.f32 %v2561, 0.2
        %v2570 = vmul.f32 %v2562, 0.2
        %v2571 = vmul.f32 %v2563, 0.2
        %v2572 = vmul.f32 %v2564, 0.2
        %v2573 = vmul.f32 %v2565, 0.2
        %v2574 = vmax.f32 %v2558, %v2566
        %v2575 = vmax.f32 %v2559, %v2567
        %v2576 = vmax.f32 %v2560, %v2568
        %v2577 = vmax.f32 %v2561, %v2569
        %v2578 = vmax.f32 %v2562, %v2570
        %v2579 = vmax.f32 %v2563, %v2571
        %v2580 = vmax.f32 %v2564, %v2572
        %v2581 = vmax.f32 %v2565, %v2573
        %2582 = vset.pattern.permute.xlu0 23
        %2583 = vperm.xlu0 %2582, %v741
        %v2584 = vpop.permute.xlu0 %2583
        %v2586 = vmul.f32 %v2584, %v2574
        %v2587 = vmul.f32 %v2584, %v2575
        %v2588 = vmul.f32 %v2584, %v2576
        %v2589 = vmul.f32 %v2584, %v2577
        %v2590 = vmul.f32 %v2584, %v2578
        %v2591 = vmul.f32 %v2584, %v2579
        %v2592 = vmul.f32 %v2584, %v2580
        %v2593 = vmul.f32 %v2584, %v2581
        %v2594 = vadd.f32 %v2514, %v2586
        %v2595 = vadd.f32 %v2515, %v2587
        %v2596 = vadd.f32 %v2516, %v2588
        %v2597 = vadd.f32 %v2517, %v2589
        %v2598 = vadd.f32 %v2518, %v2590
        %v2599 = vadd.f32 %v2519, %v2591
        %v2600 = vadd.f32 %v2520, %v2592
        %v2601 = vadd.f32 %v2521, %v2593
        %2602 = vset.pattern.permute.xlu0 24
        %2603 = vperm.xlu0 %2602, %v660
        %v2604 = vpop.permute.xlu0 %2603
        %2606 = vset.pattern.permute.xlu0 24
        %2607 = vperm.xlu0 %2606, %v661
        %v2608 = vpop.permute.xlu0 %2607
        %2610 = vset.pattern.permute.xlu0 24
        %2611 = vperm.xlu0 %2610, %v662
        %v2612 = vpop.permute.xlu0 %2611
        %2614 = vset.pattern.permute.xlu0 24
        %2615 = vperm.xlu0 %2614, %v663
        %v2616 = vpop.permute.xlu0 %2615
        %2618 = vset.pattern.permute.xlu0 24
        %2619 = vperm.xlu0 %2618, %v664
        %v2620 = vpop.permute.xlu0 %2619
        %2622 = vset.pattern.permute.xlu0 24
        %2623 = vperm.xlu0 %2622, %v665
        %v2624 = vpop.permute.xlu0 %2623
        %2626 = vset.pattern.permute.xlu0 24
        %2627 = vperm.xlu0 %2626, %v666
        %v2628 = vpop.permute.xlu0 %2627
        %2630 = vset.pattern.permute.xlu0 24
        %2631 = vperm.xlu0 %2630, %v667
        %v2632 = vpop.permute.xlu0 %2631
        %v2634 = vlaneseq
        %v2635 = vshrl.u32 %v2634, 7
        %v2636 = vsub.s32 0, %v2635
        %v2637 = vrot.slane %v657, %v2636
        %v2638 = vadd.f32 %v2604, %v2637
        %v2639 = vadd.f32 %v2608, %v2637
        %v2640 = vadd.f32 %v2612, %v2637
        %v2641 = vadd.f32 %v2616, %v2637
        %v2642 = vadd.f32 %v2620, %v2637
        %v2643 = vadd.f32 %v2624, %v2637
        %v2644 = vadd.f32 %v2628, %v2637
        %v2645 = vadd.f32 %v2632, %v2637
        %v2646 = vmul.f32 %v2638, 0.2
        %v2647 = vmul.f32 %v2639, 0.2
        %v2648 = vmul.f32 %v2640, 0.2
        %v2649 = vmul.f32 %v2641, 0.2
        %v2650 = vmul.f32 %v2642, 0.2
        %v2651 = vmul.f32 %v2643, 0.2
        %v2652 = vmul.f32 %v2644, 0.2
        %v2653 = vmul.f32 %v2645, 0.2
        %v2654 = vmax.f32 %v2638, %v2646
        %v2655 = vmax.f32 %v2639, %v2647
        %v2656 = vmax.f32 %v2640, %v2648
        %v2657 = vmax.f32 %v2641, %v2649
        %v2658 = vmax.f32 %v2642, %v2650
        %v2659 = vmax.f32 %v2643, %v2651
        %v2660 = vmax.f32 %v2644, %v2652
        %v2661 = vmax.f32 %v2645, %v2653
        %2662 = vset.pattern.permute.xlu0 24
        %2663 = vperm.xlu0 %2662, %v741
        %v2664 = vpop.permute.xlu0 %2663
        %v2666 = vmul.f32 %v2664, %v2654
        %v2667 = vmul.f32 %v2664, %v2655
        %v2668 = vmul.f32 %v2664, %v2656
        %v2669 = vmul.f32 %v2664, %v2657
        %v2670 = vmul.f32 %v2664, %v2658
        %v2671 = vmul.f32 %v2664, %v2659
        %v2672 = vmul.f32 %v2664, %v2660
        %v2673 = vmul.f32 %v2664, %v2661
        %v2674 = vadd.f32 %v2594, %v2666
        %v2675 = vadd.f32 %v2595, %v2667
        %v2676 = vadd.f32 %v2596, %v2668
        %v2677 = vadd.f32 %v2597, %v2669
        %v2678 = vadd.f32 %v2598, %v2670
        %v2679 = vadd.f32 %v2599, %v2671
        %v2680 = vadd.f32 %v2600, %v2672
        %v2681 = vadd.f32 %v2601, %v2673
        %2682 = vset.pattern.permute.xlu0 25
        %2683 = vperm.xlu0 %2682, %v660
        %v2684 = vpop.permute.xlu0 %2683
        %2686 = vset.pattern.permute.xlu0 25
        %2687 = vperm.xlu0 %2686, %v661
        %v2688 = vpop.permute.xlu0 %2687
        %2690 = vset.pattern.permute.xlu0 25
        %2691 = vperm.xlu0 %2690, %v662
        %v2692 = vpop.permute.xlu0 %2691
        %2694 = vset.pattern.permute.xlu0 25
        %2695 = vperm.xlu0 %2694, %v663
        %v2696 = vpop.permute.xlu0 %2695
        %2698 = vset.pattern.permute.xlu0 25
        %2699 = vperm.xlu0 %2698, %v664
        %v2700 = vpop.permute.xlu0 %2699
        %2702 = vset.pattern.permute.xlu0 25
        %2703 = vperm.xlu0 %2702, %v665
        %v2704 = vpop.permute.xlu0 %2703
        %2706 = vset.pattern.permute.xlu0 25
        %2707 = vperm.xlu0 %2706, %v666
        %v2708 = vpop.permute.xlu0 %2707
        %2710 = vset.pattern.permute.xlu0 25
        %2711 = vperm.xlu0 %2710, %v667
        %v2712 = vpop.permute.xlu0 %2711
        %v2714 = vlaneseq
        %v2715 = vshrl.u32 %v2714, 7
        %v2716 = vsub.s32 1, %v2715
        %v2717 = vrot.slane %v657, %v2716
        %v2718 = vadd.f32 %v2684, %v2717
        %v2719 = vadd.f32 %v2688, %v2717
        %v2720 = vadd.f32 %v2692, %v2717
        %v2721 = vadd.f32 %v2696, %v2717
        %v2722 = vadd.f32 %v2700, %v2717
        %v2723 = vadd.f32 %v2704, %v2717
        %v2724 = vadd.f32 %v2708, %v2717
        %v2725 = vadd.f32 %v2712, %v2717
        %v2726 = vmul.f32 %v2718, 0.2
        %v2727 = vmul.f32 %v2719, 0.2
        %v2728 = vmul.f32 %v2720, 0.2
        %v2729 = vmul.f32 %v2721, 0.2
        %v2730 = vmul.f32 %v2722, 0.2
        %v2731 = vmul.f32 %v2723, 0.2
        %v2732 = vmul.f32 %v2724, 0.2
        %v2733 = vmul.f32 %v2725, 0.2
        %v2734 = vmax.f32 %v2718, %v2726
        %v2735 = vmax.f32 %v2719, %v2727
        %v2736 = vmax.f32 %v2720, %v2728
        %v2737 = vmax.f32 %v2721, %v2729
        %v2738 = vmax.f32 %v2722, %v2730
        %v2739 = vmax.f32 %v2723, %v2731
        %v2740 = vmax.f32 %v2724, %v2732
        %v2741 = vmax.f32 %v2725, %v2733
        %2742 = vset.pattern.permute.xlu0 25
        %2743 = vperm.xlu0 %2742, %v741
        %v2744 = vpop.permute.xlu0 %2743
        %v2746 = vmul.f32 %v2744, %v2734
        %v2747 = vmul.f32 %v2744, %v2735
        %v2748 = vmul.f32 %v2744, %v2736
        %v2749 = vmul.f32 %v2744, %v2737
        %v2750 = vmul.f32 %v2744, %v2738
        %v2751 = vmul.f32 %v2744, %v2739
        %v2752 = vmul.f32 %v2744, %v2740
        %v2753 = vmul.f32 %v2744, %v2741
        %v2754 = vadd.f32 %v2674, %v2746
        %v2755 = vadd.f32 %v2675, %v2747
        %v2756 = vadd.f32 %v2676, %v2748
        %v2757 = vadd.f32 %v2677, %v2749
        %v2758 = vadd.f32 %v2678, %v2750
        %v2759 = vadd.f32 %v2679, %v2751
        %v2760 = vadd.f32 %v2680, %v2752
        %v2761 = vadd.f32 %v2681, %v2753
        %2762 = vset.pattern.permute.xlu0 26
        %2763 = vperm.xlu0 %2762, %v660
        %v2764 = vpop.permute.xlu0 %2763
        %2766 = vset.pattern.permute.xlu0 26
        %2767 = vperm.xlu0 %2766, %v661
        %v2768 = vpop.permute.xlu0 %2767
        %2770 = vset.pattern.permute.xlu0 26
        %2771 = vperm.xlu0 %2770, %v662
        %v2772 = vpop.permute.xlu0 %2771
        %2774 = vset.pattern.permute.xlu0 26
        %2775 = vperm.xlu0 %2774, %v663
        %v2776 = vpop.permute.xlu0 %2775
        %2778 = vset.pattern.permute.xlu0 26
        %2779 = vperm.xlu0 %2778, %v664
        %v2780 = vpop.permute.xlu0 %2779
        %2782 = vset.pattern.permute.xlu0 26
        %2783 = vperm.xlu0 %2782, %v665
        %v2784 = vpop.permute.xlu0 %2783
        %2786 = vset.pattern.permute.xlu0 26
        %2787 = vperm.xlu0 %2786, %v666
        %v2788 = vpop.permute.xlu0 %2787
        %2790 = vset.pattern.permute.xlu0 26
        %2791 = vperm.xlu0 %2790, %v667
        %v2792 = vpop.permute.xlu0 %2791
        %v2794 = vlaneseq
        %v2795 = vshrl.u32 %v2794, 7
        %v2796 = vsub.s32 2, %v2795
        %v2797 = vrot.slane %v657, %v2796
        %v2798 = vadd.f32 %v2764, %v2797
        %v2799 = vadd.f32 %v2768, %v2797
        %v2800 = vadd.f32 %v2772, %v2797
        %v2801 = vadd.f32 %v2776, %v2797
        %v2802 = vadd.f32 %v2780, %v2797
        %v2803 = vadd.f32 %v2784, %v2797
        %v2804 = vadd.f32 %v2788, %v2797
        %v2805 = vadd.f32 %v2792, %v2797
        %v2806 = vmul.f32 %v2798, 0.2
        %v2807 = vmul.f32 %v2799, 0.2
        %v2808 = vmul.f32 %v2800, 0.2
        %v2809 = vmul.f32 %v2801, 0.2
        %v2810 = vmul.f32 %v2802, 0.2
        %v2811 = vmul.f32 %v2803, 0.2
        %v2812 = vmul.f32 %v2804, 0.2
        %v2813 = vmul.f32 %v2805, 0.2
        %v2814 = vmax.f32 %v2798, %v2806
        %v2815 = vmax.f32 %v2799, %v2807
        %v2816 = vmax.f32 %v2800, %v2808
        %v2817 = vmax.f32 %v2801, %v2809
        %v2818 = vmax.f32 %v2802, %v2810
        %v2819 = vmax.f32 %v2803, %v2811
        %v2820 = vmax.f32 %v2804, %v2812
        %v2821 = vmax.f32 %v2805, %v2813
        %2822 = vset.pattern.permute.xlu0 26
        %2823 = vperm.xlu0 %2822, %v741
        %v2824 = vpop.permute.xlu0 %2823
        %v2826 = vmul.f32 %v2824, %v2814
        %v2827 = vmul.f32 %v2824, %v2815
        %v2828 = vmul.f32 %v2824, %v2816
        %v2829 = vmul.f32 %v2824, %v2817
        %v2830 = vmul.f32 %v2824, %v2818
        %v2831 = vmul.f32 %v2824, %v2819
        %v2832 = vmul.f32 %v2824, %v2820
        %v2833 = vmul.f32 %v2824, %v2821
        %v2834 = vadd.f32 %v2754, %v2826
        %v2835 = vadd.f32 %v2755, %v2827
        %v2836 = vadd.f32 %v2756, %v2828
        %v2837 = vadd.f32 %v2757, %v2829
        %v2838 = vadd.f32 %v2758, %v2830
        %v2839 = vadd.f32 %v2759, %v2831
        %v2840 = vadd.f32 %v2760, %v2832
        %v2841 = vadd.f32 %v2761, %v2833
        %2842 = vset.pattern.permute.xlu0 27
        %2843 = vperm.xlu0 %2842, %v660
        %v2844 = vpop.permute.xlu0 %2843
        %2846 = vset.pattern.permute.xlu0 27
        %2847 = vperm.xlu0 %2846, %v661
        %v2848 = vpop.permute.xlu0 %2847
        %2850 = vset.pattern.permute.xlu0 27
        %2851 = vperm.xlu0 %2850, %v662
        %v2852 = vpop.permute.xlu0 %2851
        %2854 = vset.pattern.permute.xlu0 27
        %2855 = vperm.xlu0 %2854, %v663
        %v2856 = vpop.permute.xlu0 %2855
        %2858 = vset.pattern.permute.xlu0 27
        %2859 = vperm.xlu0 %2858, %v664
        %v2860 = vpop.permute.xlu0 %2859
        %2862 = vset.pattern.permute.xlu0 27
        %2863 = vperm.xlu0 %2862, %v665
        %v2864 = vpop.permute.xlu0 %2863
        %2866 = vset.pattern.permute.xlu0 27
        %2867 = vperm.xlu0 %2866, %v666
        %v2868 = vpop.permute.xlu0 %2867
        %2870 = vset.pattern.permute.xlu0 27
        %2871 = vperm.xlu0 %2870, %v667
        %v2872 = vpop.permute.xlu0 %2871
        %v2874 = vlaneseq
        %v2875 = vshrl.u32 %v2874, 7
        %v2876 = vsub.s32 3, %v2875
        %v2877 = vrot.slane %v657, %v2876
        %v2878 = vadd.f32 %v2844, %v2877
        %v2879 = vadd.f32 %v2848, %v2877
        %v2880 = vadd.f32 %v2852, %v2877
        %v2881 = vadd.f32 %v2856, %v2877
        %v2882 = vadd.f32 %v2860, %v2877
        %v2883 = vadd.f32 %v2864, %v2877
        %v2884 = vadd.f32 %v2868, %v2877
        %v2885 = vadd.f32 %v2872, %v2877
        %v2886 = vmul.f32 %v2878, 0.2
        %v2887 = vmul.f32 %v2879, 0.2
        %v2888 = vmul.f32 %v2880, 0.2
        %v2889 = vmul.f32 %v2881, 0.2
        %v2890 = vmul.f32 %v2882, 0.2
        %v2891 = vmul.f32 %v2883, 0.2
        %v2892 = vmul.f32 %v2884, 0.2
        %v2893 = vmul.f32 %v2885, 0.2
        %v2894 = vmax.f32 %v2878, %v2886
        %v2895 = vmax.f32 %v2879, %v2887
        %v2896 = vmax.f32 %v2880, %v2888
        %v2897 = vmax.f32 %v2881, %v2889
        %v2898 = vmax.f32 %v2882, %v2890
        %v2899 = vmax.f32 %v2883, %v2891
        %v2900 = vmax.f32 %v2884, %v2892
        %v2901 = vmax.f32 %v2885, %v2893
        %2902 = vset.pattern.permute.xlu0 27
        %2903 = vperm.xlu0 %2902, %v741
        %v2904 = vpop.permute.xlu0 %2903
        %v2906 = vmul.f32 %v2904, %v2894
        %v2907 = vmul.f32 %v2904, %v2895
        %v2908 = vmul.f32 %v2904, %v2896
        %v2909 = vmul.f32 %v2904, %v2897
        %v2910 = vmul.f32 %v2904, %v2898
        %v2911 = vmul.f32 %v2904, %v2899
        %v2912 = vmul.f32 %v2904, %v2900
        %v2913 = vmul.f32 %v2904, %v2901
        %v2914 = vadd.f32 %v2834, %v2906
        %v2915 = vadd.f32 %v2835, %v2907
        %v2916 = vadd.f32 %v2836, %v2908
        %v2917 = vadd.f32 %v2837, %v2909
        %v2918 = vadd.f32 %v2838, %v2910
        %v2919 = vadd.f32 %v2839, %v2911
        %v2920 = vadd.f32 %v2840, %v2912
        %v2921 = vadd.f32 %v2841, %v2913
        %2922 = vset.pattern.permute.xlu0 28
        %2923 = vperm.xlu0 %2922, %v660
        %v2924 = vpop.permute.xlu0 %2923
        %2926 = vset.pattern.permute.xlu0 28
        %2927 = vperm.xlu0 %2926, %v661
        %v2928 = vpop.permute.xlu0 %2927
        %2930 = vset.pattern.permute.xlu0 28
        %2931 = vperm.xlu0 %2930, %v662
        %v2932 = vpop.permute.xlu0 %2931
        %2934 = vset.pattern.permute.xlu0 28
        %2935 = vperm.xlu0 %2934, %v663
        %v2936 = vpop.permute.xlu0 %2935
        %2938 = vset.pattern.permute.xlu0 28
        %2939 = vperm.xlu0 %2938, %v664
        %v2940 = vpop.permute.xlu0 %2939
        %2942 = vset.pattern.permute.xlu0 28
        %2943 = vperm.xlu0 %2942, %v665
        %v2944 = vpop.permute.xlu0 %2943
        %2946 = vset.pattern.permute.xlu0 28
        %2947 = vperm.xlu0 %2946, %v666
        %v2948 = vpop.permute.xlu0 %2947
        %2950 = vset.pattern.permute.xlu0 28
        %2951 = vperm.xlu0 %2950, %v667
        %v2952 = vpop.permute.xlu0 %2951
        %v2954 = vlaneseq
        %v2955 = vshrl.u32 %v2954, 7
        %v2956 = vsub.s32 4, %v2955
        %v2957 = vrot.slane %v657, %v2956
        %v2958 = vadd.f32 %v2924, %v2957
        %v2959 = vadd.f32 %v2928, %v2957
        %v2960 = vadd.f32 %v2932, %v2957
        %v2961 = vadd.f32 %v2936, %v2957
        %v2962 = vadd.f32 %v2940, %v2957
        %v2963 = vadd.f32 %v2944, %v2957
        %v2964 = vadd.f32 %v2948, %v2957
        %v2965 = vadd.f32 %v2952, %v2957
        %v2966 = vmul.f32 %v2958, 0.2
        %v2967 = vmul.f32 %v2959, 0.2
        %v2968 = vmul.f32 %v2960, 0.2
        %v2969 = vmul.f32 %v2961, 0.2
        %v2970 = vmul.f32 %v2962, 0.2
        %v2971 = vmul.f32 %v2963, 0.2
        %v2972 = vmul.f32 %v2964, 0.2
        %v2973 = vmul.f32 %v2965, 0.2
        %v2974 = vmax.f32 %v2958, %v2966
        %v2975 = vmax.f32 %v2959, %v2967
        %v2976 = vmax.f32 %v2960, %v2968
        %v2977 = vmax.f32 %v2961, %v2969
        %v2978 = vmax.f32 %v2962, %v2970
        %v2979 = vmax.f32 %v2963, %v2971
        %v2980 = vmax.f32 %v2964, %v2972
        %v2981 = vmax.f32 %v2965, %v2973
        %2982 = vset.pattern.permute.xlu0 28
        %2983 = vperm.xlu0 %2982, %v741
        %v2984 = vpop.permute.xlu0 %2983
        %v2986 = vmul.f32 %v2984, %v2974
        %v2987 = vmul.f32 %v2984, %v2975
        %v2988 = vmul.f32 %v2984, %v2976
        %v2989 = vmul.f32 %v2984, %v2977
        %v2990 = vmul.f32 %v2984, %v2978
        %v2991 = vmul.f32 %v2984, %v2979
        %v2992 = vmul.f32 %v2984, %v2980
        %v2993 = vmul.f32 %v2984, %v2981
        %v2994 = vadd.f32 %v2914, %v2986
        %v2995 = vadd.f32 %v2915, %v2987
        %v2996 = vadd.f32 %v2916, %v2988
        %v2997 = vadd.f32 %v2917, %v2989
        %v2998 = vadd.f32 %v2918, %v2990
        %v2999 = vadd.f32 %v2919, %v2991
        %v3000 = vadd.f32 %v2920, %v2992
        %v3001 = vadd.f32 %v2921, %v2993
        %3002 = vset.pattern.permute.xlu0 29
        %3003 = vperm.xlu0 %3002, %v660
        %v3004 = vpop.permute.xlu0 %3003
        %3006 = vset.pattern.permute.xlu0 29
        %3007 = vperm.xlu0 %3006, %v661
        %v3008 = vpop.permute.xlu0 %3007
        %3010 = vset.pattern.permute.xlu0 29
        %3011 = vperm.xlu0 %3010, %v662
        %v3012 = vpop.permute.xlu0 %3011
        %3014 = vset.pattern.permute.xlu0 29
        %3015 = vperm.xlu0 %3014, %v663
        %v3016 = vpop.permute.xlu0 %3015
        %3018 = vset.pattern.permute.xlu0 29
        %3019 = vperm.xlu0 %3018, %v664
        %v3020 = vpop.permute.xlu0 %3019
        %3022 = vset.pattern.permute.xlu0 29
        %3023 = vperm.xlu0 %3022, %v665
        %v3024 = vpop.permute.xlu0 %3023
        %3026 = vset.pattern.permute.xlu0 29
        %3027 = vperm.xlu0 %3026, %v666
        %v3028 = vpop.permute.xlu0 %3027
        %3030 = vset.pattern.permute.xlu0 29
        %3031 = vperm.xlu0 %3030, %v667
        %v3032 = vpop.permute.xlu0 %3031
        %v3034 = vlaneseq
        %v3035 = vshrl.u32 %v3034, 7
        %v3036 = vsub.s32 5, %v3035
        %v3037 = vrot.slane %v657, %v3036
        %v3038 = vadd.f32 %v3004, %v3037
        %v3039 = vadd.f32 %v3008, %v3037
        %v3040 = vadd.f32 %v3012, %v3037
        %v3041 = vadd.f32 %v3016, %v3037
        %v3042 = vadd.f32 %v3020, %v3037
        %v3043 = vadd.f32 %v3024, %v3037
        %v3044 = vadd.f32 %v3028, %v3037
        %v3045 = vadd.f32 %v3032, %v3037
        %v3046 = vmul.f32 %v3038, 0.2
        %v3047 = vmul.f32 %v3039, 0.2
        %v3048 = vmul.f32 %v3040, 0.2
        %v3049 = vmul.f32 %v3041, 0.2
        %v3050 = vmul.f32 %v3042, 0.2
        %v3051 = vmul.f32 %v3043, 0.2
        %v3052 = vmul.f32 %v3044, 0.2
        %v3053 = vmul.f32 %v3045, 0.2
        %v3054 = vmax.f32 %v3038, %v3046
        %v3055 = vmax.f32 %v3039, %v3047
        %v3056 = vmax.f32 %v3040, %v3048
        %v3057 = vmax.f32 %v3041, %v3049
        %v3058 = vmax.f32 %v3042, %v3050
        %v3059 = vmax.f32 %v3043, %v3051
        %v3060 = vmax.f32 %v3044, %v3052
        %v3061 = vmax.f32 %v3045, %v3053
        %3062 = vset.pattern.permute.xlu0 29
        %3063 = vperm.xlu0 %3062, %v741
        %v3064 = vpop.permute.xlu0 %3063
        %v3066 = vmul.f32 %v3064, %v3054
        %v3067 = vmul.f32 %v3064, %v3055
        %v3068 = vmul.f32 %v3064, %v3056
        %v3069 = vmul.f32 %v3064, %v3057
        %v3070 = vmul.f32 %v3064, %v3058
        %v3071 = vmul.f32 %v3064, %v3059
        %v3072 = vmul.f32 %v3064, %v3060
        %v3073 = vmul.f32 %v3064, %v3061
        %v3074 = vadd.f32 %v2994, %v3066
        %v3075 = vadd.f32 %v2995, %v3067
        %v3076 = vadd.f32 %v2996, %v3068
        %v3077 = vadd.f32 %v2997, %v3069
        %v3078 = vadd.f32 %v2998, %v3070
        %v3079 = vadd.f32 %v2999, %v3071
        %v3080 = vadd.f32 %v3000, %v3072
        %v3081 = vadd.f32 %v3001, %v3073
        %3082 = vset.pattern.permute.xlu0 30
        %3083 = vperm.xlu0 %3082, %v660
        %v3084 = vpop.permute.xlu0 %3083
        %3086 = vset.pattern.permute.xlu0 30
        %3087 = vperm.xlu0 %3086, %v661
        %v3088 = vpop.permute.xlu0 %3087
        %3090 = vset.pattern.permute.xlu0 30
        %3091 = vperm.xlu0 %3090, %v662
        %v3092 = vpop.permute.xlu0 %3091
        %3094 = vset.pattern.permute.xlu0 30
        %3095 = vperm.xlu0 %3094, %v663
        %v3096 = vpop.permute.xlu0 %3095
        %3098 = vset.pattern.permute.xlu0 30
        %3099 = vperm.xlu0 %3098, %v664
        %v3100 = vpop.permute.xlu0 %3099
        %3102 = vset.pattern.permute.xlu0 30
        %3103 = vperm.xlu0 %3102, %v665
        %v3104 = vpop.permute.xlu0 %3103
        %3106 = vset.pattern.permute.xlu0 30
        %3107 = vperm.xlu0 %3106, %v666
        %v3108 = vpop.permute.xlu0 %3107
        %3110 = vset.pattern.permute.xlu0 30
        %3111 = vperm.xlu0 %3110, %v667
        %v3112 = vpop.permute.xlu0 %3111
        %v3114 = vlaneseq
        %v3115 = vshrl.u32 %v3114, 7
        %v3116 = vsub.s32 6, %v3115
        %v3117 = vrot.slane %v657, %v3116
        %v3118 = vadd.f32 %v3084, %v3117
        %v3119 = vadd.f32 %v3088, %v3117
        %v3120 = vadd.f32 %v3092, %v3117
        %v3121 = vadd.f32 %v3096, %v3117
        %v3122 = vadd.f32 %v3100, %v3117
        %v3123 = vadd.f32 %v3104, %v3117
        %v3124 = vadd.f32 %v3108, %v3117
        %v3125 = vadd.f32 %v3112, %v3117
        %v3126 = vmul.f32 %v3118, 0.2
        %v3127 = vmul.f32 %v3119, 0.2
        %v3128 = vmul.f32 %v3120, 0.2
        %v3129 = vmul.f32 %v3121, 0.2
        %v3130 = vmul.f32 %v3122, 0.2
        %v3131 = vmul.f32 %v3123, 0.2
        %v3132 = vmul.f32 %v3124, 0.2
        %v3133 = vmul.f32 %v3125, 0.2
        %v3134 = vmax.f32 %v3118, %v3126
        %v3135 = vmax.f32 %v3119, %v3127
        %v3136 = vmax.f32 %v3120, %v3128
        %v3137 = vmax.f32 %v3121, %v3129
        %v3138 = vmax.f32 %v3122, %v3130
        %v3139 = vmax.f32 %v3123, %v3131
        %v3140 = vmax.f32 %v3124, %v3132
        %v3141 = vmax.f32 %v3125, %v3133
        %3142 = vset.pattern.permute.xlu0 30
        %3143 = vperm.xlu0 %3142, %v741
        %v3144 = vpop.permute.xlu0 %3143
        %v3146 = vmul.f32 %v3144, %v3134
        %v3147 = vmul.f32 %v3144, %v3135
        %v3148 = vmul.f32 %v3144, %v3136
        %v3149 = vmul.f32 %v3144, %v3137
        %v3150 = vmul.f32 %v3144, %v3138
        %v3151 = vmul.f32 %v3144, %v3139
        %v3152 = vmul.f32 %v3144, %v3140
        %v3153 = vmul.f32 %v3144, %v3141
        %v3154 = vadd.f32 %v3074, %v3146
        %v3155 = vadd.f32 %v3075, %v3147
        %v3156 = vadd.f32 %v3076, %v3148
        %v3157 = vadd.f32 %v3077, %v3149
        %v3158 = vadd.f32 %v3078, %v3150
        %v3159 = vadd.f32 %v3079, %v3151
        %v3160 = vadd.f32 %v3080, %v3152
        %v3161 = vadd.f32 %v3081, %v3153
        %3162 = vset.pattern.permute.xlu0 31
        %3163 = vperm.xlu0 %3162, %v660
        %v3164 = vpop.permute.xlu0 %3163
        %3166 = vset.pattern.permute.xlu0 31
        %3167 = vperm.xlu0 %3166, %v661
        %v3168 = vpop.permute.xlu0 %3167
        %3170 = vset.pattern.permute.xlu0 31
        %3171 = vperm.xlu0 %3170, %v662
        %v3172 = vpop.permute.xlu0 %3171
        %3174 = vset.pattern.permute.xlu0 31
        %3175 = vperm.xlu0 %3174, %v663
        %v3176 = vpop.permute.xlu0 %3175
        %3178 = vset.pattern.permute.xlu0 31
        %3179 = vperm.xlu0 %3178, %v664
        %v3180 = vpop.permute.xlu0 %3179
        %3182 = vset.pattern.permute.xlu0 31
        %3183 = vperm.xlu0 %3182, %v665
        %v3184 = vpop.permute.xlu0 %3183
        %3186 = vset.pattern.permute.xlu0 31
        %3187 = vperm.xlu0 %3186, %v666
        %v3188 = vpop.permute.xlu0 %3187
        %3190 = vset.pattern.permute.xlu0 31
        %3191 = vperm.xlu0 %3190, %v667
        %v3192 = vpop.permute.xlu0 %3191
        %v3194 = vlaneseq
        %v3195 = vshrl.u32 %v3194, 7
        %v3196 = vsub.s32 7, %v3195
        %v3197 = vrot.slane %v657, %v3196
        %v3198 = vadd.f32 %v3164, %v3197
        %v3199 = vadd.f32 %v3168, %v3197
        %v3200 = vadd.f32 %v3172, %v3197
        %v3201 = vadd.f32 %v3176, %v3197
        %v3202 = vadd.f32 %v3180, %v3197
        %v3203 = vadd.f32 %v3184, %v3197
        %v3204 = vadd.f32 %v3188, %v3197
        %v3205 = vadd.f32 %v3192, %v3197
        %v3206 = vmul.f32 %v3198, 0.2
        %v3207 = vmul.f32 %v3199, 0.2
        %v3208 = vmul.f32 %v3200, 0.2
        %v3209 = vmul.f32 %v3201, 0.2
        %v3210 = vmul.f32 %v3202, 0.2
        %v3211 = vmul.f32 %v3203, 0.2
        %v3212 = vmul.f32 %v3204, 0.2
        %v3213 = vmul.f32 %v3205, 0.2
        %v3214 = vmax.f32 %v3198, %v3206
        %v3215 = vmax.f32 %v3199, %v3207
        %v3216 = vmax.f32 %v3200, %v3208
        %v3217 = vmax.f32 %v3201, %v3209
        %v3218 = vmax.f32 %v3202, %v3210
        %v3219 = vmax.f32 %v3203, %v3211
        %v3220 = vmax.f32 %v3204, %v3212
        %v3221 = vmax.f32 %v3205, %v3213
        %3222 = vset.pattern.permute.xlu0 31
        %3223 = vperm.xlu0 %3222, %v741
        %v3224 = vpop.permute.xlu0 %3223
        %v3226 = vmul.f32 %v3224, %v3214
        %v3227 = vmul.f32 %v3224, %v3215
        %v3228 = vmul.f32 %v3224, %v3216
        %v3229 = vmul.f32 %v3224, %v3217
        %v3230 = vmul.f32 %v3224, %v3218
        %v3231 = vmul.f32 %v3224, %v3219
        %v3232 = vmul.f32 %v3224, %v3220
        %v3233 = vmul.f32 %v3224, %v3221
        %v3234 = vadd.f32 %v3154, %v3226
        %v3235 = vadd.f32 %v3155, %v3227
        %v3236 = vadd.f32 %v3156, %v3228
        %v3237 = vadd.f32 %v3157, %v3229
        %v3238 = vadd.f32 %v3158, %v3230
        %v3239 = vadd.f32 %v3159, %v3231
        %v3240 = vadd.f32 %v3160, %v3232
        %v3241 = vadd.f32 %v3161, %v3233
        %v3242 = vld [vmem:[%s370] sm:$0xff]
        %v3243 = vld [vmem:[%s370 + $0x8] sm:$0xff]
        %v3244 = vunpack.c.0.s8 %v3242
        %v3245 = vunpack.c.1.s8 %v3242
        %v3246 = vunpack.c.2.s8 %v3242
        %v3247 = vunpack.c.3.s8 %v3242
        %v3248 = vunpack.c.0.s8 %v3243
        %v3249 = vunpack.c.1.s8 %v3243
        %v3250 = vunpack.c.2.s8 %v3243
        %v3251 = vunpack.c.3.s8 %v3243
        %v3252 = vcvt.s32.f32 %v3244
        %v3253 = vcvt.s32.f32 %v3245
        %v3254 = vcvt.s32.f32 %v3246
        %v3255 = vcvt.s32.f32 %v3247
        %v3256 = vcvt.s32.f32 %v3248
        %v3257 = vcvt.s32.f32 %v3249
        %v3258 = vcvt.s32.f32 %v3250
        %v3259 = vcvt.s32.f32 %v3251
        %vm3260 = vcmp.gt.f32.partialorder %v3252, 0.0
        %vm3261 = vcmp.gt.f32.partialorder %v3253, 0.0
        %vm3262 = vcmp.gt.f32.partialorder %v3254, 0.0
        %vm3263 = vcmp.gt.f32.partialorder %v3255, 0.0
        %vm3264 = vcmp.gt.f32.partialorder %v3256, 0.0
        %vm3265 = vcmp.gt.f32.partialorder %v3257, 0.0
        %vm3266 = vcmp.gt.f32.partialorder %v3258, 0.0
        %vm3267 = vcmp.gt.f32.partialorder %v3259, 0.0
        %v3268 = vsel %vm3260, %v3234, -1e+30
        %v3269 = vsel %vm3261, %v3235, -1e+30
        %v3270 = vsel %vm3262, %v3236, -1e+30
        %v3271 = vsel %vm3263, %v3237, -1e+30
        %v3272 = vsel %vm3264, %v3238, -1e+30
        %v3273 = vsel %vm3265, %v3239, -1e+30
        %v3274 = vsel %vm3266, %v3240, -1e+30
        %v3275 = vsel %vm3267, %v3241, -1e+30
        %v3276 = vld [vmem:[#allocation3] sm:$0xff]
        %v3277 = vld [vmem:[#allocation3 + $0x8] sm:$0xff]
        %v3278 = vld [vmem:[#allocation3 + $0x10] sm:$0xff]
        %v3279 = vld [vmem:[#allocation3 + $0x18] sm:$0xff]
        %v3280 = vld [vmem:[#allocation3 + $0x20] sm:$0xff]
        %v3281 = vld [vmem:[#allocation3 + $0x28] sm:$0xff]
        %v3282 = vld [vmem:[#allocation3 + $0x30] sm:$0xff]
        %v3283 = vld [vmem:[#allocation3 + $0x38] sm:$0xff]
        %3284 = vmax.xlane.f32.xlu0 %v3268
        %v3285 = vpop.xlane.xlu0 %3284
        %3286 = vmax.xlane.f32.xlu0 %v3269
        %v3287 = vpop.xlane.xlu0 %3286
        %3288 = vmax.xlane.f32.xlu0 %v3270
        %v3289 = vpop.xlane.xlu0 %3288
        %3290 = vmax.xlane.f32.xlu0 %v3271
        %v3291 = vpop.xlane.xlu0 %3290
        %3292 = vmax.xlane.f32.xlu0 %v3272
        %v3293 = vpop.xlane.xlu0 %3292
        %3294 = vmax.xlane.f32.xlu0 %v3273
        %v3295 = vpop.xlane.xlu0 %3294
        %3296 = vmax.xlane.f32.xlu0 %v3274
        %v3297 = vpop.xlane.xlu0 %3296
        %3298 = vmax.xlane.f32.xlu0 %v3275
        %v3299 = vpop.xlane.xlu0 %3298
        %v3300 = vmax.f32 %v3276, %v3285
        %v3301 = vmax.f32 %v3277, %v3287
        %v3302 = vmax.f32 %v3278, %v3289
        %v3303 = vmax.f32 %v3279, %v3291
        %v3304 = vmax.f32 %v3280, %v3293
        %v3305 = vmax.f32 %v3281, %v3295
        %v3306 = vmax.f32 %v3282, %v3297
        %v3307 = vmax.f32 %v3283, %v3299
        %3309 = vset.pattern.permute.xlu0 0
        %3310 = vperm.xlu0 %3309, %v3300
        %v3311 = vpop.permute.xlu0 %3310
        %3314 = vset.pattern.permute.xlu0 0
        %3315 = vperm.xlu0 %3314, %v3301
        %v3316 = vpop.permute.xlu0 %3315
        %3319 = vset.pattern.permute.xlu0 0
        %3320 = vperm.xlu0 %3319, %v3302
        %v3321 = vpop.permute.xlu0 %3320
        %3324 = vset.pattern.permute.xlu0 0
        %3325 = vperm.xlu0 %3324, %v3303
        %v3326 = vpop.permute.xlu0 %3325
        %3329 = vset.pattern.permute.xlu0 0
        %3330 = vperm.xlu0 %3329, %v3304
        %v3331 = vpop.permute.xlu0 %3330
        %3334 = vset.pattern.permute.xlu0 0
        %3335 = vperm.xlu0 %3334, %v3305
        %v3336 = vpop.permute.xlu0 %3335
        %3339 = vset.pattern.permute.xlu0 0
        %3340 = vperm.xlu0 %3339, %v3306
        %v3341 = vpop.permute.xlu0 %3340
        %3344 = vset.pattern.permute.xlu0 0
        %3345 = vperm.xlu0 %3344, %v3307
        %v3346 = vpop.permute.xlu0 %3345
        %v3348 = vsub.f32 %v3268, %v3311
        %v3349 = vsub.f32 %v3269, %v3316
        %v3350 = vsub.f32 %v3270, %v3321
        %v3351 = vsub.f32 %v3271, %v3326
        %v3352 = vsub.f32 %v3272, %v3331
        %v3353 = vsub.f32 %v3273, %v3336
        %v3354 = vsub.f32 %v3274, %v3341
        %v3355 = vsub.f32 %v3275, %v3346
        %v3356 = vmul.f32 %v3348, 1.442695
        %v3357 = vpow.pop %v3356
        %v3358 = vmul.f32 %v3349, 1.442695
        %v3359 = vpow.pop %v3358
        %v3360 = vmul.f32 %v3350, 1.442695
        %v3361 = vpow.pop %v3360
        %v3362 = vmul.f32 %v3351, 1.442695
        %v3363 = vpow.pop %v3362
        %v3364 = vmul.f32 %v3352, 1.442695
        %v3365 = vpow.pop %v3364
        %v3366 = vmul.f32 %v3353, 1.442695
        %v3367 = vpow.pop %v3366
        %v3368 = vmul.f32 %v3354, 1.442695
        %v3369 = vpow.pop %v3368
        %v3370 = vmul.f32 %v3355, 1.442695
        %v3371 = vpow.pop %v3370
        %v3372 = vsel %vm3260, %v3357, 0.0
        %v3373 = vsel %vm3261, %v3359, 0.0
        %v3374 = vsel %vm3262, %v3361, 0.0
        %v3375 = vsel %vm3263, %v3363, 0.0
        %v3376 = vsel %vm3264, %v3365, 0.0
        %v3377 = vsel %vm3265, %v3367, 0.0
        %v3378 = vsel %vm3266, %v3369, 0.0
        %v3379 = vsel %vm3267, %v3371, 0.0
        %v3380 = vsub.f32 %v3276, %v3300
        %v3381 = vsub.f32 %v3277, %v3301
        %v3382 = vsub.f32 %v3278, %v3302
        %v3383 = vsub.f32 %v3279, %v3303
        %v3384 = vsub.f32 %v3280, %v3304
        %v3385 = vsub.f32 %v3281, %v3305
        %v3386 = vsub.f32 %v3282, %v3306
        %v3387 = vsub.f32 %v3283, %v3307
        %v3388 = vmul.f32 %v3380, 1.442695
        %v3389 = vpow.pop %v3388
        %v3390 = vmul.f32 %v3381, 1.442695
        %v3391 = vpow.pop %v3390
        %v3392 = vmul.f32 %v3382, 1.442695
        %v3393 = vpow.pop %v3392
        %v3394 = vmul.f32 %v3383, 1.442695
        %v3395 = vpow.pop %v3394
        %v3396 = vmul.f32 %v3384, 1.442695
        %v3397 = vpow.pop %v3396
        %v3398 = vmul.f32 %v3385, 1.442695
        %v3399 = vpow.pop %v3398
        %v3400 = vmul.f32 %v3386, 1.442695
        %v3401 = vpow.pop %v3400
        %v3402 = vmul.f32 %v3387, 1.442695
        %v3403 = vpow.pop %v3402
        %v3404 = vld [vmem:[#allocation4] sm:$0xff]
        %v3405 = vld [vmem:[#allocation4 + $0x8] sm:$0xff]
        %v3406 = vld [vmem:[#allocation4 + $0x10] sm:$0xff]
        %v3407 = vld [vmem:[#allocation4 + $0x18] sm:$0xff]
        %v3408 = vld [vmem:[#allocation4 + $0x20] sm:$0xff]
        %v3409 = vld [vmem:[#allocation4 + $0x28] sm:$0xff]
        %v3410 = vld [vmem:[#allocation4 + $0x30] sm:$0xff]
        %v3411 = vld [vmem:[#allocation4 + $0x38] sm:$0xff]
        %v3412 = vmul.f32 %v3389, %v3404
        %v3413 = vmul.f32 %v3391, %v3405
        %v3414 = vmul.f32 %v3393, %v3406
        %v3415 = vmul.f32 %v3395, %v3407
        %v3416 = vmul.f32 %v3397, %v3408
        %v3417 = vmul.f32 %v3399, %v3409
        %v3418 = vmul.f32 %v3401, %v3410
        %v3419 = vmul.f32 %v3403, %v3411
        %3420 = vadd.xlane.f32.xlu0 %v3372
        %v3421 = vpop.xlane.xlu0 %3420
        %3422 = vadd.xlane.f32.xlu0 %v3373
        %v3423 = vpop.xlane.xlu0 %3422
        %3424 = vadd.xlane.f32.xlu0 %v3374
        %v3425 = vpop.xlane.xlu0 %3424
        %3426 = vadd.xlane.f32.xlu0 %v3375
        %v3427 = vpop.xlane.xlu0 %3426
        %3428 = vadd.xlane.f32.xlu0 %v3376
        %v3429 = vpop.xlane.xlu0 %3428
        %3430 = vadd.xlane.f32.xlu0 %v3377
        %v3431 = vpop.xlane.xlu0 %3430
        %3432 = vadd.xlane.f32.xlu0 %v3378
        %v3433 = vpop.xlane.xlu0 %3432
        %3434 = vadd.xlane.f32.xlu0 %v3379
        %v3435 = vpop.xlane.xlu0 %3434
        %v3436 = vadd.f32 %v3412, %v3421
        %v3437 = vadd.f32 %v3413, %v3423
        %v3438 = vadd.f32 %v3414, %v3425
        %v3439 = vadd.f32 %v3415, %v3427
        %v3440 = vadd.f32 %v3416, %v3429
        %v3441 = vadd.f32 %v3417, %v3431
        %v3442 = vadd.f32 %v3418, %v3433
        %v3443 = vadd.f32 %v3419, %v3435
        %vm3444 = vcmask 7168
        %3445 = vst.msk [vmem:[#allocation4] sm:$0xff] %vm3444, %v3436
        %3446 = vst.msk [vmem:[#allocation4 + $0x8] sm:$0xff] %vm3444, %v3437
        %3447 = vst.msk [vmem:[#allocation4 + $0x10] sm:$0xff] %vm3444, %v3438
        %3448 = vst.msk [vmem:[#allocation4 + $0x18] sm:$0xff] %vm3444, %v3439
        %3449 = vst.msk [vmem:[#allocation4 + $0x20] sm:$0xff] %vm3444, %v3440
        %3450 = vst.msk [vmem:[#allocation4 + $0x28] sm:$0xff] %vm3444, %v3441
        %3451 = vst.msk [vmem:[#allocation4 + $0x30] sm:$0xff] %vm3444, %v3442
        %3452 = vst.msk [vmem:[#allocation4 + $0x38] sm:$0xff] %vm3444, %v3443
        %v3453 = vld [vmem:[#allocation5] sm:$0xff]
        %v3454 = vld [vmem:[#allocation5 + $0x8] sm:$0xff]
        %v3455 = vld [vmem:[#allocation5 + $0x10] sm:$0xff]
        %v3456 = vld [vmem:[#allocation5 + $0x18] sm:$0xff]
        %v3457 = vld [vmem:[#allocation5 + $0x20] sm:$0xff]
        %v3458 = vld [vmem:[#allocation5 + $0x28] sm:$0xff]
        %v3459 = vld [vmem:[#allocation5 + $0x30] sm:$0xff]
        %v3460 = vld [vmem:[#allocation5 + $0x38] sm:$0xff]
        %3462 = vset.pattern.permute.xlu0 0
        %3463 = vperm.xlu0 %3462, %v3389
        %v3464 = vpop.permute.xlu0 %3463
        %3467 = vset.pattern.permute.xlu0 0
        %3468 = vperm.xlu0 %3467, %v3391
        %v3469 = vpop.permute.xlu0 %3468
        %3472 = vset.pattern.permute.xlu0 0
        %3473 = vperm.xlu0 %3472, %v3393
        %v3474 = vpop.permute.xlu0 %3473
        %3477 = vset.pattern.permute.xlu0 0
        %3478 = vperm.xlu0 %3477, %v3395
        %v3479 = vpop.permute.xlu0 %3478
        %3482 = vset.pattern.permute.xlu0 0
        %3483 = vperm.xlu0 %3482, %v3397
        %v3484 = vpop.permute.xlu0 %3483
        %3487 = vset.pattern.permute.xlu0 0
        %3488 = vperm.xlu0 %3487, %v3399
        %v3489 = vpop.permute.xlu0 %3488
        %3492 = vset.pattern.permute.xlu0 0
        %3493 = vperm.xlu0 %3492, %v3401
        %v3494 = vpop.permute.xlu0 %3493
        %3497 = vset.pattern.permute.xlu0 0
        %3498 = vperm.xlu0 %3497, %v3403
        %v3499 = vpop.permute.xlu0 %3498
        %v3501 = vmul.f32 %v3464, %v3453
        %v3502 = vmul.f32 %v3469, %v3454
        %v3503 = vmul.f32 %v3474, %v3455
        %v3504 = vmul.f32 %v3479, %v3456
        %v3505 = vmul.f32 %v3484, %v3457
        %v3506 = vmul.f32 %v3489, %v3458
        %v3507 = vmul.f32 %v3494, %v3459
        %v3508 = vmul.f32 %v3499, %v3460
        %v3509 = vpack.c.bf16 %v3373, %v3372
        %v3510 = vpack.c.bf16 %v3375, %v3374
        %v3511 = vpack.c.bf16 %v3377, %v3376
        %v3512 = vpack.c.bf16 %v3379, %v3378
        %v3513 = vpack.c.bf16 %v649, %v646
        %v3514 = vpack.c.bf16 %v657, %v654
        %3515 = vmatprep.subr.bf16.mxu0 0
        %3516 = vmatpush1.bf16.xpose.msra.mxu0 %v3513
        %3517 = vmatprep.subr.bf16.mxu0 0
        %3518 = vmatpush1.bf16.xpose.msra.mxu0 %v3514
        %3519 = vmatprep.subr.bf16.mxu0 0
        %3520 = vmatpush1.bf16.xpose.msra.mxu0 0
        %3521 = vmatprep.subr.bf16.mxu0 0
        %3522 = vmatpush1.bf16.xpose.msra.mxu0 0
        %3523 = vmatprep.subr.bf16.mxu0 0
        %3524 = vmatpush1.bf16.xpose.msra.mxu0 0
        %3525 = vmatprep.subr.bf16.mxu0 0
        %3526 = vmatpush1.bf16.xpose.msra.mxu0 0
        %3527 = vmatprep.subr.bf16.mxu0 0
        %3528 = vmatpush1.bf16.xpose.msra.mxu0 0
        %3529 = vmatprep.subr.bf16.mxu0 0
        %3530 = vmatpush1.bf16.xpose.msra.mxu0 0
        %3531 = vmatprep.subr.bf16.mxu0 0
        %3532 = vmatpush1.bf16.xpose.msra.mxu0 0
        %3533 = vmatprep.subr.bf16.mxu0 0
        %3534 = vmatpush1.bf16.xpose.msra.mxu0 0
        %3535 = vmatprep.subr.bf16.mxu0 0
        %3536 = vmatpush1.bf16.xpose.msra.mxu0 0
        %3537 = vmatprep.subr.bf16.mxu0 0
        %3538 = vmatpush1.bf16.xpose.msra.mxu0 0
        %3539 = vmatprep.subr.bf16.mxu0 0
        %3540 = vmatpush1.bf16.xpose.msra.mxu0 0
        %3541 = vmatprep.subr.bf16.mxu0 0
        %3542 = vmatpush1.bf16.xpose.msra.mxu0 0
        %3543 = vmatprep.subr.bf16.mxu0 0
        %3544 = vmatpush1.bf16.xpose.msra.mxu0 0
        %3545 = vmatprep.subr.bf16.mxu0 0
        %3546 = vmatpush1.bf16.xpose.msra.mxu0 0
        %3547 = vmatprep.mubr.bf16.mxu0 0
        %3548 = vmatmul.mubr.bf16.gmra.mrb[0].mxu0 %v3509
        %v3549 = vpop.f32.mrb[0].mxu0
        %v3550 = vadd.f32 0.0, %v3549
        %v3551 = vpop.f32.mrb[0].mxu0
        %v3552 = vpop.f32.mrb[0].mxu0
        %v3553 = vadd.f32 0.0, %v3552
        %v3554 = vpop.f32.mrb[0].mxu0
        %3555 = vmatprep.mubr.bf16.mxu0 0
        %3556 = vmatmul.mubr.bf16.gmra.mrb[0].mxu0 %v3510
        %v3557 = vpop.f32.mrb[0].mxu0
        %v3558 = vadd.f32 0.0, %v3557
        %v3559 = vpop.f32.mrb[0].mxu0
        %v3560 = vpop.f32.mrb[0].mxu0
        %v3561 = vadd.f32 0.0, %v3560
        %v3562 = vpop.f32.mrb[0].mxu0
        %3563 = vmatprep.mubr.bf16.mxu0 0
        %3564 = vmatmul.mubr.bf16.gmra.mrb[0].mxu0 %v3511
        %v3565 = vpop.f32.mrb[0].mxu0
        %v3566 = vadd.f32 0.0, %v3565
        %v3567 = vpop.f32.mrb[0].mxu0
        %v3568 = vpop.f32.mrb[0].mxu0
        %v3569 = vadd.f32 0.0, %v3568
        %v3570 = vpop.f32.mrb[0].mxu0
        %3571 = vmatprep.mubr.bf16.mxu0 0
        %3572 = vmatmul.mubr.bf16.gmra.mrb[0].mxu0 %v3512
        %v3573 = vpop.f32.mrb[0].mxu0
        %v3574 = vadd.f32 0.0, %v3573
        %v3575 = vpop.f32.mrb[0].mxu0
        %v3576 = vpop.f32.mrb[0].mxu0
        %v3577 = vadd.f32 0.0, %v3576
        %v3578 = vpop.f32.mrb[0].mxu0
        %3579 = vdwg.mxu0
        %v3580 = vadd.f32 %v3501, %v3550
        %v3581 = vadd.f32 %v3502, %v3553
        %v3582 = vadd.f32 %v3503, %v3558
        %v3583 = vadd.f32 %v3504, %v3561
        %v3584 = vadd.f32 %v3505, %v3566
        %v3585 = vadd.f32 %v3506, %v3569
        %v3586 = vadd.f32 %v3507, %v3574
        %v3587 = vadd.f32 %v3508, %v3577
        %vm3588 = vcmask 261120
        %3589 = vst.msk [vmem:[#allocation5] sm:$0xff] %vm3588, %v3580
        %3590 = vst.msk [vmem:[#allocation5 + $0x8] sm:$0xff] %vm3588, %v3581
        %3591 = vst.msk [vmem:[#allocation5 + $0x10] sm:$0xff] %vm3588, %v3582
        %3592 = vst.msk [vmem:[#allocation5 + $0x18] sm:$0xff] %vm3588, %v3583
        %3593 = vst.msk [vmem:[#allocation5 + $0x20] sm:$0xff] %vm3588, %v3584
        %3594 = vst.msk [vmem:[#allocation5 + $0x28] sm:$0xff] %vm3588, %v3585
        %3595 = vst.msk [vmem:[#allocation5 + $0x30] sm:$0xff] %vm3588, %v3586
        %3596 = vst.msk [vmem:[#allocation5 + $0x38] sm:$0xff] %vm3588, %v3587
        %3597 = vst.msk [vmem:[#allocation3] sm:$0xff] %vm3444, %v3300
        %3598 = vst.msk [vmem:[#allocation3 + $0x8] sm:$0xff] %vm3444, %v3301
        %3599 = vst.msk [vmem:[#allocation3 + $0x10] sm:$0xff] %vm3444, %v3302
        %3600 = vst.msk [vmem:[#allocation3 + $0x18] sm:$0xff] %vm3444, %v3303
        %3601 = vst.msk [vmem:[#allocation3 + $0x20] sm:$0xff] %vm3444, %v3304
        %3602 = vst.msk [vmem:[#allocation3 + $0x28] sm:$0xff] %vm3444, %v3305
        %3603 = vst.msk [vmem:[#allocation3 + $0x30] sm:$0xff] %vm3444, %v3306
        %3604 = vst.msk [vmem:[#allocation3 + $0x38] sm:$0xff] %vm3444, %v3307
        %p3605 = scmp.eq.s32.totalorder %s25, 1
        // Predicated region
        $region99: #{tpu_custom_call.1} parent=89 // pred_check
          %p3606 = pneg %p3605
        $region100: #{tpu_custom_call.1} parent=89 // pred_check_branch
          %3608 = sbr.rel (%p3606) target = $region102
        $region101: #{tpu_custom_call.1} parent=89 // pred_region
          %v3609 = vld [vmem:[#allocation4] sm:$0xff]
          %v3610 = vld [vmem:[#allocation4 + $0x8] sm:$0xff]
          %v3611 = vld [vmem:[#allocation4 + $0x10] sm:$0xff]
          %v3612 = vld [vmem:[#allocation4 + $0x18] sm:$0xff]
          %v3613 = vld [vmem:[#allocation4 + $0x20] sm:$0xff]
          %v3614 = vld [vmem:[#allocation4 + $0x28] sm:$0xff]
          %v3615 = vld [vmem:[#allocation4 + $0x30] sm:$0xff]
          %v3616 = vld [vmem:[#allocation4 + $0x38] sm:$0xff]
          %vm3617 = vcmp.gt.f32.partialorder %v3609, 0.0
          %vm3618 = vcmp.gt.f32.partialorder %v3610, 0.0
          %vm3619 = vcmp.gt.f32.partialorder %v3611, 0.0
          %vm3620 = vcmp.gt.f32.partialorder %v3612, 0.0
          %vm3621 = vcmp.gt.f32.partialorder %v3613, 0.0
          %vm3622 = vcmp.gt.f32.partialorder %v3614, 0.0
          %vm3623 = vcmp.gt.f32.partialorder %v3615, 0.0
          %vm3624 = vcmp.gt.f32.partialorder %v3616, 0.0
          %v3625 = vsel %vm3617, %v3609, 1.0
          %v3626 = vsel %vm3618, %v3610, 1.0
          %v3627 = vsel %vm3619, %v3611, 1.0
          %v3628 = vsel %vm3620, %v3612, 1.0
          %v3629 = vsel %vm3621, %v3613, 1.0
          %v3630 = vsel %vm3622, %v3614, 1.0
          %v3631 = vsel %vm3623, %v3615, 1.0
          %v3632 = vsel %vm3624, %v3616, 1.0
          %v3633 = vld [vmem:[#allocation5] sm:$0xff]
          %v3634 = vld [vmem:[#allocation5 + $0x8] sm:$0xff]
          %v3635 = vld [vmem:[#allocation5 + $0x10] sm:$0xff]
          %v3636 = vld [vmem:[#allocation5 + $0x18] sm:$0xff]
          %v3637 = vld [vmem:[#allocation5 + $0x20] sm:$0xff]
          %v3638 = vld [vmem:[#allocation5 + $0x28] sm:$0xff]
          %v3639 = vld [vmem:[#allocation5 + $0x30] sm:$0xff]
          %v3640 = vld [vmem:[#allocation5 + $0x38] sm:$0xff]
          %3642 = vset.pattern.permute.xlu0 0
          %3643 = vperm.xlu0 %3642, %v3625
          %v3644 = vpop.permute.xlu0 %3643
          %3647 = vset.pattern.permute.xlu0 0
          %3648 = vperm.xlu0 %3647, %v3626
          %v3649 = vpop.permute.xlu0 %3648
          %3652 = vset.pattern.permute.xlu0 0
          %3653 = vperm.xlu0 %3652, %v3627
          %v3654 = vpop.permute.xlu0 %3653
          %3657 = vset.pattern.permute.xlu0 0
          %3658 = vperm.xlu0 %3657, %v3628
          %v3659 = vpop.permute.xlu0 %3658
          %3662 = vset.pattern.permute.xlu0 0
          %3663 = vperm.xlu0 %3662, %v3629
          %v3664 = vpop.permute.xlu0 %3663
          %3667 = vset.pattern.permute.xlu0 0
          %3668 = vperm.xlu0 %3667, %v3630
          %v3669 = vpop.permute.xlu0 %3668
          %3672 = vset.pattern.permute.xlu0 0
          %3673 = vperm.xlu0 %3672, %v3631
          %v3674 = vpop.permute.xlu0 %3673
          %3677 = vset.pattern.permute.xlu0 0
          %3678 = vperm.xlu0 %3677, %v3632
          %v3679 = vpop.permute.xlu0 %3678
          %v3681 = vrcp.pop %v3644
          %v3682 = vmul.f32 %v3633, %v3681
          %v3683 = vrcp.pop %v3649
          %v3684 = vmul.f32 %v3634, %v3683
          %v3685 = vrcp.pop %v3654
          %v3686 = vmul.f32 %v3635, %v3685
          %v3687 = vrcp.pop %v3659
          %v3688 = vmul.f32 %v3636, %v3687
          %v3689 = vrcp.pop %v3664
          %v3690 = vmul.f32 %v3637, %v3689
          %v3691 = vrcp.pop %v3669
          %v3692 = vmul.f32 %v3638, %v3691
          %v3693 = vrcp.pop %v3674
          %v3694 = vmul.f32 %v3639, %v3693
          %v3695 = vrcp.pop %v3679
          %v3696 = vmul.f32 %v3640, %v3695
          %v3697 = vld [vmem:[%s8] sm:$0x1]
          %v3699 = vlaneseq
          %v3700 = vshrl.u32 %v3699, 7
          %v3701 = vsub.s32 0, %v3700
          %v3702 = vrot.slane %v3697, %v3701
          %v3704 = vadd.f32 %v3682, %v3702
          %v3705 = vadd.f32 %v3684, %v3702
          %v3706 = vadd.f32 %v3686, %v3702
          %v3707 = vadd.f32 %v3688, %v3702
          %v3708 = vadd.f32 %v3690, %v3702
          %v3709 = vadd.f32 %v3692, %v3702
          %v3710 = vadd.f32 %v3694, %v3702
          %v3711 = vadd.f32 %v3696, %v3702
          %3712 = vst.msk [vmem:[%s427] sm:$0xff] %vm3588, %v3704
          %3713 = vst.msk [vmem:[%s427 + $0x8] sm:$0xff] %vm3588, %v3705
          %3714 = vst.msk [vmem:[%s427 + $0x10] sm:$0xff] %vm3588, %v3706
          %3715 = vst.msk [vmem:[%s427 + $0x18] sm:$0xff] %vm3588, %v3707
          %3716 = vst.msk [vmem:[%s427 + $0x20] sm:$0xff] %vm3588, %v3708
          %3717 = vst.msk [vmem:[%s427 + $0x28] sm:$0xff] %vm3588, %v3709
          %3718 = vst.msk [vmem:[%s427 + $0x30] sm:$0xff] %vm3588, %v3710
          %3719 = vst.msk [vmem:[%s427 + $0x38] sm:$0xff] %vm3588, %v3711
        $region102: #{tpu_custom_call.1} parent=89 // pred_fallthru
          _
        %s3720 = smul.u32 8, %s24
        %p3721 = scmp.lt.s32.totalorder %s3720, 31
        %s3722 = scalar_select %p3721, %s3720, 31
        %s3723 = smul.addr %s3722, 8
        %s3724 = scalar_lea.vmem %s9, %s3723
        // Predicated region
        $region103: #{tpu_custom_call.1} parent=89 // pred_check
          %p3725 = pneg %p256
        $region104: #{tpu_custom_call.1} parent=89 // pred_check_branch
          %3727 = sbr.rel (%p3725) target = $region106
        $region105: #{tpu_custom_call.1} parent=89 // pred_region
          %s3728 = smul.u32 8, %s24
        $region106: #{tpu_custom_call.1} parent=89 // pred_fallthru
          _
      $region90: #{tpu_custom_call.1} parent=5 // pred_fallthru
        _
      %p3729 = scmp.le.s32.totalorder 2, %s15
      // Predicated region
      $region107: #{tpu_custom_call.1} parent=5 // pred_check
        %p3730 = pneg %p3729
      $region108: #{tpu_custom_call.1} parent=5 // pred_check_branch
        %3732 = sbr.rel (%p3730) target = $region110
      $region109: #{tpu_custom_call.1} parent=5 // pred_region
        %s3733 = ssub.s32 %s15, 2
        // Predicated region
        $region111: #{tpu_custom_call.1} parent=109 // pred_check
          %p3734 = pneg %p262
        $region112: #{tpu_custom_call.1} parent=109 // pred_check_branch
          %3736 = sbr.rel (%p3734) target = $region114
        $region113: #{tpu_custom_call.1} parent=109 // pred_region
          %s3737 = smul.u32 8, %s26
          %p3738 = scmp.lt.s32.totalorder %s3737, 31
          %s3739 = scalar_select %p3738, %s3737, 31
          %s3740 = smul.addr %s3739, 8
          %s3741 = scalar_lea.vmem %s9, %s3740
        $region114: #{tpu_custom_call.1} parent=109 // pred_fallthru
          _
      $region110: #{tpu_custom_call.1} parent=5 // pred_fallthru
        _
    $region6: #{tpu_custom_call.1} parent=1 // loop_footer
      %s19 = sadd.s32 1, %s15
    $region7: #{tpu_custom_call.1} parent=1 // loop_footer_branch
      %14 = sbr.rel target = $region3
    $region8: #{tpu_custom_call.1} parent=1 // loop_exit
      _

</llo_original>
